<compile_context>
chip_gen: v7x
topology: tpu7x:2x2x1
jax: 0.10.0
libtpu: 0.0.40
codegen_flags: <defaults>
</compile_context>

<pallas_src>
import functools

import jax
import jax.numpy as jnp
from jax.experimental import pallas as pl
from jax.experimental.pallas import tpu as pltpu

H = 51          # true hidden size (nn.LSTMCell(…, 51))
HP = 64         # padded hidden size (lane friendly; padded units stay exactly 0)
BP = 8          # padded batch (sublane friendly)

# torch LSTMCell gate order is [i, f, g, o]; kernel uses [i, f, o, g] so the
# three sigmoid gates are contiguous (one wide EUP pass).
GATE_ORDER = (0, 1, 3, 2)


# -----------------------------------------------------------------------------
# Pallas kernel: full sequence unroll (T real steps + FUTURE autoregressive).
# -----------------------------------------------------------------------------
def seq_kernel(x_ref, wih1_ref, whh1_ref, b1_ref, w2_ref, b2_ref,
               w1f_ref, b1f_ref, wout_ref, bout_ref, out_ref):
    Bp, T = x_ref.shape
    TF = out_ref.shape[1]

    # Small operands: hoist (a handful of vregs).
    x = x_ref[...]            # (Bp, T)      f32
    wih1 = wih1_ref[...]      # (1, 4*HP)    f32
    b1 = b1_ref[...]          # (1, 4*HP)    f32
    b2 = b2_ref[...]          # (1, 4*HP)    f32
    b1f = b1f_ref[...]        # (1, 4*HP)    f32  (= b1 + b_out*wih1)
    wout_row = wout_ref[...]  # (1, HP)      f32
    bout = bout_ref[...]      # (1, 1)       f32

    def lstm_gates(g, c):
        # gate layout [i, f, o, g]: one wide tanh-based sigmoid, one tanh.
        # sigmoid(x) = 0.5*tanh(0.5*x) + 0.5  -> single EUP pass over 3*HP lanes.
        s = 0.5 * jnp.tanh(0.5 * g[:, :3 * HP]) + 0.5
        i = s[:, 0 * HP:1 * HP]
        f = s[:, 1 * HP:2 * HP]
        o = s[:, 2 * HP:3 * HP]
        gg = jnp.tanh(g[:, 3 * HP:4 * HP])
        # Padded lanes: weights/biases are zero there -> g=0 -> i=f=o=0.5,
        # gg=0 -> c stays exactly 0 and h stays exactly 0.  Do not relax the
        # zero padding of weight rows/lanes or this invariant breaks.
        c_new = f * c + i * gg
        h_new = o * jnp.tanh(c_new)
        return h_new, c_new

    h1 = jnp.zeros((Bp, HP), jnp.float32)
    c1 = jnp.zeros((Bp, HP), jnp.float32)
    h2 = jnp.zeros((Bp, HP), jnp.float32)
    c2 = jnp.zeros((Bp, HP), jnp.float32)

    outs = []
    # TF is a Python int at trace time -> fully unrolled static loop.
    for t in range(TF):
        if t < T:
            # Real-input step: dense (8,64)@(64,256) recurrent matmul, the
            # scalar input enters via a VPU broadcast multiply.
            g1 = (jnp.dot(h1.astype(jnp.bfloat16), whh1_ref[...],
                          preferred_element_type=jnp.float32)
                  + x[:, t:t + 1] * wih1 + b1)
        else:
            # Autoregressive step: Linear(51,1) feedback folded into the
            # matmul via the rank-1 block W_fb = w_out^T @ wih1, so the
            # recurrence never waits on a cross-lane reduce.
            hcat = jnp.concatenate([h1, h2], axis=1).astype(jnp.bfloat16)
            g1 = jnp.dot(hcat, w1f_ref[...],
                         preferred_element_type=jnp.float32) + b1f
        h1, c1 = lstm_gates(g1, c1)

        # LSTM cell 2: [h1_new | h2_prev](8,128) @ [wih2 ; whh2](128,256).
        hcat2 = jnp.concatenate([h1, h2], axis=1).astype(jnp.bfloat16)
        g2 = jnp.dot(hcat2, w2_ref[...],
                     preferred_element_type=jnp.float32) + b2
        h2, c2 = lstm_gates(g2, c2)

        # Linear(51, 1) output column: off the recurrence critical path for
        # future steps (next state is driven through W_fb, not this value).
        outs.append(jnp.sum(h2 * wout_row, axis=1, keepdims=True) + bout)

    # Single store of all output columns instead of TF 1-lane masked stores.
    out_ref[...] = jnp.concatenate(outs, axis=1)


# -----------------------------------------------------------------------------
# Parameter construction (deterministic, torch-style uniform init) + padding.
# -----------------------------------------------------------------------------
def init_params(key):
    bound = 1.0 / jnp.sqrt(jnp.float32(H))
    ks = jax.random.split(key, 10)
    u = lambda k, shape: jax.random.uniform(k, shape, jnp.float32, -bound, bound)
    return dict(
        w_ih1=u(ks[0], (4 * H, 1)),  w_hh1=u(ks[1], (4 * H, H)),
        b_ih1=u(ks[2], (4 * H,)),    b_hh1=u(ks[3], (4 * H,)),
        w_ih2=u(ks[4], (4 * H, H)),  w_hh2=u(ks[5], (4 * H, H)),
        b_ih2=u(ks[6], (4 * H,)),    b_hh2=u(ks[7], (4 * H,)),
        w_out=u(ks[8], (1, H)),      b_out=u(ks[9], (1,)),
    )


def _pad_gate_matrix(w_t, dtype):
    """torch layout (4H, In) -> transposed, gate-reordered, padded (In_p, 4*HP)."""
    in_dim = w_t.shape[1]
    in_p = 1 if in_dim == 1 else HP
    out = jnp.zeros((in_p, 4 * HP), dtype)
    for new_g, tg in enumerate(GATE_ORDER):
        out = out.at[:in_dim, new_g * HP:new_g * HP + H].set(
            w_t[tg * H:(tg + 1) * H, :].T.astype(dtype))
    return out


def _pad_gate_bias(b):
    out = jnp.zeros((1, 4 * HP), jnp.float32)
    for new_g, tg in enumerate(GATE_ORDER):
        out = out.at[0, new_g * HP:new_g * HP + H].set(
            b[tg * H:(tg + 1) * H].astype(jnp.float32))
    return out


def pad_params(p):
    # Cell-1 recurrent weight (dense, no zero block): (HP, 4*HP) bf16.
    whh1 = _pad_gate_matrix(p["w_hh1"], jnp.bfloat16)
    # Cell-2 fused weight: [h1 | h2](128) -> gates2 (256): (2*HP, 4*HP) bf16.
    wih2 = _pad_gate_matrix(p["w_ih2"], jnp.bfloat16)
    whh2 = _pad_gate_matrix(p["w_hh2"], jnp.bfloat16)
    w2 = jnp.concatenate([wih2, whh2], axis=0)

    wih1_row = _pad_gate_matrix(p["w_ih1"], jnp.float32)       # (1, 4*HP)  f32
    b1 = _pad_gate_bias(p["b_ih1"] + p["b_hh1"])
    b2 = _pad_gate_bias(p["b_ih2"] + p["b_hh2"])
    wout_row = jnp.zeros((1, HP), jnp.float32).at[0, :H].set(p["w_out"][0])
    bout = p["b_out"].reshape(1, 1).astype(jnp.float32)

    # Future-step fused weight: [h1 | h2](128) -> gates1 (256), where the h2
    # block is the rank-1 feedback W_fb = w_out^T @ wih1 (folds Linear(51,1)
    # output -> next input into the MXU matmul).
    w_fb = (wout_row.T @ wih1_row)                              # (HP, 4*HP) f32
    w1f = jnp.concatenate([whh1, w_fb.astype(jnp.bfloat16)], axis=0)
    b1f = b1 + bout * wih1_row                                  # (1, 4*HP)  f32

    return (wih1_row, whh1, b1, w2, b2, w1f, b1f, wout_row, bout)


# -----------------------------------------------------------------------------
# Wrapper.
# -----------------------------------------------------------------------------
@functools.partial(jax.jit, static_argnames=("future",))
def sequence_forward(x, params, future=0):
    B, T = x.shape
    x_p = jnp.zeros((BP, T), jnp.float32).at[:B, :].set(x.astype(jnp.float32))
    padded = pad_params(params)
    vmem_spec = pl.BlockSpec(memory_space=pltpu.MemorySpace.VMEM)
    out = pl.pallas_call(
        seq_kernel,
        out_shape=jax.ShapeDtypeStruct((BP, T + future), jnp.float32),
        in_specs=[vmem_spec] * (1 + len(padded)),
        out_specs=vmem_spec,
        # No grid: whole problem (< 1 MiB) is VMEM-resident on one TensorCore.
    )(x_p, *padded)
    return out[:B, :]


# -----------------------------------------------------------------------------
# Pure-JAX reference (unpadded, f32, torch gate order), mirrors torch forward.
# -----------------------------------------------------------------------------
def reference_forward(x, p, future=0):
    B, T = x.shape
    x = x.astype(jnp.float32)
    h1 = c1 = h2 = c2 = jnp.zeros((B, H), jnp.float32)

    def cell(xt, h, c, w_ih, w_hh, b_ih, b_hh):
        g = xt @ w_ih.T + b_ih + h @ w_hh.T + b_hh
        i, f, gg, o = (jax.nn.sigmoid(g[:, 0:H]), jax.nn.sigmoid(g[:, H:2 * H]),
                       jnp.tanh(g[:, 2 * H:3 * H]), jax.nn.sigmoid(g[:, 3 * H:4 * H]))
        c_n = f * c + i * gg
        return o * jnp.tanh(c_n), c_n

    outs = []
    out = jnp.zeros((B, 1), jnp.float32)
    for t in range(T + future):
        xt = x[:, t:t + 1] if t < T else out
        h1, c1 = cell(xt, h1, c1, p["w_ih1"], p["w_hh1"], p["b_ih1"], p["b_hh1"])
        h2, c2 = cell(h1, h2, c2, p["w_ih2"], p["w_hh2"], p["b_ih2"], p["b_hh2"])
        out = h2 @ p["w_out"].T + p["b_out"]
        outs.append(out)
    return jnp.concatenate(outs, axis=1)


if __name__ == "__main__":
    key = jax.random.PRNGKey(0)
    kp, kx = jax.random.split(key)
    params = init_params(kp)

    B, T, FUTURE = 2, 8, 4
    x = jax.random.normal(kx, (B, T), jnp.float32)

    out = sequence_forward(x, params, future=FUTURE)
    out = jax.block_until_ready(out)

    ref = reference_forward(x, params, future=FUTURE)
    assert out.shape == (B, T + FUTURE), out.shape
    # bf16 MXU operands over 12 recurrent steps -> relaxed tolerance vs f32 ref.
    assert jnp.allclose(out, ref, rtol=2e-2, atol=2e-2), (
        f"max err {jnp.max(jnp.abs(out - ref))}")
    print("KERNEL_OK")
</pallas_src>

<mosaic_0001>
module attributes {stable_mosaic.version = 11 : i64} {
  func.func @seq_kernel(%arg0: memref<8x8xf32, #tpu.memory_space<vmem>>, %arg1: memref<1x256xf32, #tpu.memory_space<vmem>>, %arg2: memref<64x256xbf16, #tpu.memory_space<vmem>>, %arg3: memref<1x256xf32, #tpu.memory_space<vmem>>, %arg4: memref<128x256xbf16, #tpu.memory_space<vmem>>, %arg5: memref<1x256xf32, #tpu.memory_space<vmem>>, %arg6: memref<128x256xbf16, #tpu.memory_space<vmem>>, %arg7: memref<1x256xf32, #tpu.memory_space<vmem>>, %arg8: memref<1x64xf32, #tpu.memory_space<vmem>>, %arg9: memref<1x1xf32, #tpu.memory_space<vmem>>, %arg10: memref<8x12xf32, #tpu.memory_space<vmem>>) attributes {dimension_semantics = [], scalar_prefetch = 0 : i64, scratch_operands = 0 : i64, tpu.core_type = #tpu.core_type<tc>} {
    %c0 = arith.constant 0 : index
    %c0_0 = arith.constant 0 : index
    %0 = vector.load %arg0[%c0, %c0_0] : memref<8x8xf32, #tpu.memory_space<vmem>>, vector<8x8xf32>
    %c0_1 = arith.constant 0 : index
    %c0_2 = arith.constant 0 : index
    %1 = vector.load %arg1[%c0_1, %c0_2] : memref<1x256xf32, #tpu.memory_space<vmem>>, vector<1x256xf32>
    %c0_3 = arith.constant 0 : index
    %c0_4 = arith.constant 0 : index
    %2 = vector.load %arg3[%c0_3, %c0_4] : memref<1x256xf32, #tpu.memory_space<vmem>>, vector<1x256xf32>
    %c0_5 = arith.constant 0 : index
    %c0_6 = arith.constant 0 : index
    %3 = vector.load %arg5[%c0_5, %c0_6] : memref<1x256xf32, #tpu.memory_space<vmem>>, vector<1x256xf32>
    %c0_7 = arith.constant 0 : index
    %c0_8 = arith.constant 0 : index
    %4 = vector.load %arg7[%c0_7, %c0_8] : memref<1x256xf32, #tpu.memory_space<vmem>>, vector<1x256xf32>
    %c0_9 = arith.constant 0 : index
    %c0_10 = arith.constant 0 : index
    %5 = vector.load %arg8[%c0_9, %c0_10] : memref<1x64xf32, #tpu.memory_space<vmem>>, vector<1x64xf32>
    %c0_11 = arith.constant 0 : index
    %c0_12 = arith.constant 0 : index
    %6 = vector.load %arg9[%c0_11, %c0_12] : memref<1x1xf32, #tpu.memory_space<vmem>>, vector<1x1xf32>
    %cst = arith.constant 0.000000e+00 : f32
    %7 = vector.broadcast %cst : f32 to vector<8x64xf32>
    %cst_13 = arith.constant 0.000000e+00 : f32
    %8 = vector.broadcast %cst_13 : f32 to vector<8x64xf32>
    %cst_14 = arith.constant 0.000000e+00 : f32
    %9 = vector.broadcast %cst_14 : f32 to vector<8x64xf32>
    %cst_15 = arith.constant 0.000000e+00 : f32
    %10 = vector.broadcast %cst_15 : f32 to vector<8x64xf32>
    %11 = arith.truncf %7 : vector<8x64xf32> to vector<8x64xbf16>
    %c0_16 = arith.constant 0 : index
    %c0_17 = arith.constant 0 : index
    %12 = vector.load %arg2[%c0_16, %c0_17] : memref<64x256xbf16, #tpu.memory_space<vmem>>, vector<64x256xbf16>
    %cst_18 = arith.constant dense<0.000000e+00> : vector<8x256xf32>
    %13 = tpu.matmul %11, %12, %cst_18 {dimension_numbers = #tpu.dot_dimension_numbers<[1], [0], [0], [1], [0, 0, 1, 1], [], []>} : vector<8x64xbf16>, vector<64x256xbf16>, vector<8x256xf32> -> vector<8x256xf32>
    %14 = vector.extract_strided_slice %0 {offsets = [0, 0], sizes = [8, 1], strides = [1, 1]} : vector<8x8xf32> to vector<8x1xf32>
    %15 = vector.broadcast %14 : vector<8x1xf32> to vector<8x256xf32>
    %16 = vector.broadcast %1 : vector<1x256xf32> to vector<8x256xf32>
    %17 = arith.mulf %15, %16 : vector<8x256xf32>
    %18 = arith.addf %13, %17 : vector<8x256xf32>
    %19 = vector.broadcast %2 : vector<1x256xf32> to vector<8x256xf32>
    %20 = arith.addf %18, %19 : vector<8x256xf32>
    %21 = vector.extract_strided_slice %20 {offsets = [0, 0], sizes = [8, 192], strides = [1, 1]} : vector<8x256xf32> to vector<8x192xf32>
    %cst_19 = arith.constant 5.000000e-01 : f32
    %22 = vector.broadcast %cst_19 : f32 to vector<8x192xf32>
    %23 = arith.mulf %22, %21 : vector<8x192xf32>
    %24 = math.tanh %23 : vector<8x192xf32>
    %cst_20 = arith.constant 5.000000e-01 : f32
    %25 = vector.broadcast %cst_20 : f32 to vector<8x192xf32>
    %26 = arith.mulf %25, %24 : vector<8x192xf32>
    %cst_21 = arith.constant 5.000000e-01 : f32
    %27 = vector.broadcast %cst_21 : f32 to vector<8x192xf32>
    %28 = arith.addf %26, %27 : vector<8x192xf32>
    %29 = vector.extract_strided_slice %28 {offsets = [0, 0], sizes = [8, 64], strides = [1, 1]} : vector<8x192xf32> to vector<8x64xf32>
    %30 = vector.extract_strided_slice %28 {offsets = [0, 64], sizes = [8, 64], strides = [1, 1]} : vector<8x192xf32> to vector<8x64xf32>
    %31 = vector.extract_strided_slice %28 {offsets = [0, 128], sizes = [8, 64], strides = [1, 1]} : vector<8x192xf32> to vector<8x64xf32>
    %32 = vector.extract_strided_slice %20 {offsets = [0, 192], sizes = [8, 64], strides = [1, 1]} : vector<8x256xf32> to vector<8x64xf32>
    %33 = math.tanh %32 : vector<8x64xf32>
    %34 = arith.mulf %30, %8 : vector<8x64xf32>
    %35 = arith.mulf %29, %33 : vector<8x64xf32>
    %36 = arith.addf %34, %35 : vector<8x64xf32>
    %37 = math.tanh %36 : vector<8x64xf32>
    %38 = arith.mulf %31, %37 : vector<8x64xf32>
    %39 = tpu.concatenate %38, %9 in 1 : vector<8x64xf32>, vector<8x64xf32> -> vector<8x128xf32>
    %40 = arith.truncf %39 : vector<8x128xf32> to vector<8x128xbf16>
    %c0_22 = arith.constant 0 : index
    %c0_23 = arith.constant 0 : index
    %41 = vector.load %arg4[%c0_22, %c0_23] : memref<128x256xbf16, #tpu.memory_space<vmem>>, vector<128x256xbf16>
    %cst_24 = arith.constant dense<0.000000e+00> : vector<8x256xf32>
    %42 = tpu.matmul %40, %41, %cst_24 {dimension_numbers = #tpu.dot_dimension_numbers<[1], [0], [0], [1], [0, 0, 1, 1], [], []>} : vector<8x128xbf16>, vector<128x256xbf16>, vector<8x256xf32> -> vector<8x256xf32>
    %43 = vector.broadcast %3 : vector<1x256xf32> to vector<8x256xf32>
    %44 = arith.addf %42, %43 : vector<8x256xf32>
    %45 = vector.extract_strided_slice %44 {offsets = [0, 0], sizes = [8, 192], strides = [1, 1]} : vector<8x256xf32> to vector<8x192xf32>
    %cst_25 = arith.constant 5.000000e-01 : f32
    %46 = vector.broadcast %cst_25 : f32 to vector<8x192xf32>
    %47 = arith.mulf %46, %45 : vector<8x192xf32>
    %48 = math.tanh %47 : vector<8x192xf32>
    %cst_26 = arith.constant 5.000000e-01 : f32
    %49 = vector.broadcast %cst_26 : f32 to vector<8x192xf32>
    %50 = arith.mulf %49, %48 : vector<8x192xf32>
    %cst_27 = arith.constant 5.000000e-01 : f32
    %51 = vector.broadcast %cst_27 : f32 to vector<8x192xf32>
    %52 = arith.addf %50, %51 : vector<8x192xf32>
    %53 = vector.extract_strided_slice %52 {offsets = [0, 0], sizes = [8, 64], strides = [1, 1]} : vector<8x192xf32> to vector<8x64xf32>
    %54 = vector.extract_strided_slice %52 {offsets = [0, 64], sizes = [8, 64], strides = [1, 1]} : vector<8x192xf32> to vector<8x64xf32>
    %55 = vector.extract_strided_slice %52 {offsets = [0, 128], sizes = [8, 64], strides = [1, 1]} : vector<8x192xf32> to vector<8x64xf32>
    %56 = vector.extract_strided_slice %44 {offsets = [0, 192], sizes = [8, 64], strides = [1, 1]} : vector<8x256xf32> to vector<8x64xf32>
    %57 = math.tanh %56 : vector<8x64xf32>
    %58 = arith.mulf %54, %10 : vector<8x64xf32>
    %59 = arith.mulf %53, %57 : vector<8x64xf32>
    %60 = arith.addf %58, %59 : vector<8x64xf32>
    %61 = math.tanh %60 : vector<8x64xf32>
    %62 = arith.mulf %55, %61 : vector<8x64xf32>
    %63 = vector.broadcast %5 : vector<1x64xf32> to vector<8x64xf32>
    %64 = arith.mulf %62, %63 : vector<8x64xf32>
    %cst_28 = arith.constant dense<0.000000e+00> : vector<8xf32>
    %65 = vector.multi_reduction <add>, %64, %cst_28 [1] : vector<8x64xf32> to vector<8xf32>
    %66 = vector.shape_cast %65 : vector<8xf32> to vector<8x1xf32>
    %67 = vector.broadcast %6 : vector<1x1xf32> to vector<8x1xf32>
    %68 = arith.addf %66, %67 : vector<8x1xf32>
    %69 = arith.truncf %38 : vector<8x64xf32> to vector<8x64xbf16>
    %c0_29 = arith.constant 0 : index
    %c0_30 = arith.constant 0 : index
    %70 = vector.load %arg2[%c0_29, %c0_30] : memref<64x256xbf16, #tpu.memory_space<vmem>>, vector<64x256xbf16>
    %cst_31 = arith.constant dense<0.000000e+00> : vector<8x256xf32>
    %71 = tpu.matmul %69, %70, %cst_31 {dimension_numbers = #tpu.dot_dimension_numbers<[1], [0], [0], [1], [0, 0, 1, 1], [], []>} : vector<8x64xbf16>, vector<64x256xbf16>, vector<8x256xf32> -> vector<8x256xf32>
    %72 = vector.extract_strided_slice %0 {offsets = [0, 1], sizes = [8, 1], strides = [1, 1]} : vector<8x8xf32> to vector<8x1xf32>
    %73 = vector.broadcast %72 : vector<8x1xf32> to vector<8x256xf32>
    %74 = vector.broadcast %1 : vector<1x256xf32> to vector<8x256xf32>
    %75 = arith.mulf %73, %74 : vector<8x256xf32>
    %76 = arith.addf %71, %75 : vector<8x256xf32>
    %77 = vector.broadcast %2 : vector<1x256xf32> to vector<8x256xf32>
    %78 = arith.addf %76, %77 : vector<8x256xf32>
    %79 = vector.extract_strided_slice %78 {offsets = [0, 0], sizes = [8, 192], strides = [1, 1]} : vector<8x256xf32> to vector<8x192xf32>
    %cst_32 = arith.constant 5.000000e-01 : f32
    %80 = vector.broadcast %cst_32 : f32 to vector<8x192xf32>
    %81 = arith.mulf %80, %79 : vector<8x192xf32>
    %82 = math.tanh %81 : vector<8x192xf32>
    %cst_33 = arith.constant 5.000000e-01 : f32
    %83 = vector.broadcast %cst_33 : f32 to vector<8x192xf32>
    %84 = arith.mulf %83, %82 : vector<8x192xf32>
    %cst_34 = arith.constant 5.000000e-01 : f32
    %85 = vector.broadcast %cst_34 : f32 to vector<8x192xf32>
    %86 = arith.addf %84, %85 : vector<8x192xf32>
    %87 = vector.extract_strided_slice %86 {offsets = [0, 0], sizes = [8, 64], strides = [1, 1]} : vector<8x192xf32> to vector<8x64xf32>
    %88 = vector.extract_strided_slice %86 {offsets = [0, 64], sizes = [8, 64], strides = [1, 1]} : vector<8x192xf32> to vector<8x64xf32>
    %89 = vector.extract_strided_slice %86 {offsets = [0, 128], sizes = [8, 64], strides = [1, 1]} : vector<8x192xf32> to vector<8x64xf32>
    %90 = vector.extract_strided_slice %78 {offsets = [0, 192], sizes = [8, 64], strides = [1, 1]} : vector<8x256xf32> to vector<8x64xf32>
    %91 = math.tanh %90 : vector<8x64xf32>
    %92 = arith.mulf %88, %36 : vector<8x64xf32>
    %93 = arith.mulf %87, %91 : vector<8x64xf32>
    %94 = arith.addf %92, %93 : vector<8x64xf32>
    %95 = math.tanh %94 : vector<8x64xf32>
    %96 = arith.mulf %89, %95 : vector<8x64xf32>
    %97 = tpu.concatenate %96, %62 in 1 : vector<8x64xf32>, vector<8x64xf32> -> vector<8x128xf32>
    %98 = arith.truncf %97 : vector<8x128xf32> to vector<8x128xbf16>
    %c0_35 = arith.constant 0 : index
    %c0_36 = arith.constant 0 : index
    %99 = vector.load %arg4[%c0_35, %c0_36] : memref<128x256xbf16, #tpu.memory_space<vmem>>, vector<128x256xbf16>
    %cst_37 = arith.constant dense<0.000000e+00> : vector<8x256xf32>
    %100 = tpu.matmul %98, %99, %cst_37 {dimension_numbers = #tpu.dot_dimension_numbers<[1], [0], [0], [1], [0, 0, 1, 1], [], []>} : vector<8x128xbf16>, vector<128x256xbf16>, vector<8x256xf32> -> vector<8x256xf32>
    %101 = vector.broadcast %3 : vector<1x256xf32> to vector<8x256xf32>
    %102 = arith.addf %100, %101 : vector<8x256xf32>
    %103 = vector.extract_strided_slice %102 {offsets = [0, 0], sizes = [8, 192], strides = [1, 1]} : vector<8x256xf32> to vector<8x192xf32>
    %cst_38 = arith.constant 5.000000e-01 : f32
    %104 = vector.broadcast %cst_38 : f32 to vector<8x192xf32>
    %105 = arith.mulf %104, %103 : vector<8x192xf32>
    %106 = math.tanh %105 : vector<8x192xf32>
    %cst_39 = arith.constant 5.000000e-01 : f32
    %107 = vector.broadcast %cst_39 : f32 to vector<8x192xf32>
    %108 = arith.mulf %107, %106 : vector<8x192xf32>
    %cst_40 = arith.constant 5.000000e-01 : f32
    %109 = vector.broadcast %cst_40 : f32 to vector<8x192xf32>
    %110 = arith.addf %108, %109 : vector<8x192xf32>
    %111 = vector.extract_strided_slice %110 {offsets = [0, 0], sizes = [8, 64], strides = [1, 1]} : vector<8x192xf32> to vector<8x64xf32>
    %112 = vector.extract_strided_slice %110 {offsets = [0, 64], sizes = [8, 64], strides = [1, 1]} : vector<8x192xf32> to vector<8x64xf32>
    %113 = vector.extract_strided_slice %110 {offsets = [0, 128], sizes = [8, 64], strides = [1, 1]} : vector<8x192xf32> to vector<8x64xf32>
    %114 = vector.extract_strided_slice %102 {offsets = [0, 192], sizes = [8, 64], strides = [1, 1]} : vector<8x256xf32> to vector<8x64xf32>
    %115 = math.tanh %114 : vector<8x64xf32>
    %116 = arith.mulf %112, %60 : vector<8x64xf32>
    %117 = arith.mulf %111, %115 : vector<8x64xf32>
    %118 = arith.addf %116, %117 : vector<8x64xf32>
    %119 = math.tanh %118 : vector<8x64xf32>
    %120 = arith.mulf %113, %119 : vector<8x64xf32>
    %121 = vector.broadcast %5 : vector<1x64xf32> to vector<8x64xf32>
    %122 = arith.mulf %120, %121 : vector<8x64xf32>
    %cst_41 = arith.constant dense<0.000000e+00> : vector<8xf32>
    %123 = vector.multi_reduction <add>, %122, %cst_41 [1] : vector<8x64xf32> to vector<8xf32>
    %124 = vector.shape_cast %123 : vector<8xf32> to vector<8x1xf32>
    %125 = vector.broadcast %6 : vector<1x1xf32> to vector<8x1xf32>
    %126 = arith.addf %124, %125 : vector<8x1xf32>
    %127 = arith.truncf %96 : vector<8x64xf32> to vector<8x64xbf16>
    %c0_42 = arith.constant 0 : index
    %c0_43 = arith.constant 0 : index
    %128 = vector.load %arg2[%c0_42, %c0_43] : memref<64x256xbf16, #tpu.memory_space<vmem>>, vector<64x256xbf16>
    %cst_44 = arith.constant dense<0.000000e+00> : vector<8x256xf32>
    %129 = tpu.matmul %127, %128, %cst_44 {dimension_numbers = #tpu.dot_dimension_numbers<[1], [0], [0], [1], [0, 0, 1, 1], [], []>} : vector<8x64xbf16>, vector<64x256xbf16>, vector<8x256xf32> -> vector<8x256xf32>
    %130 = vector.extract_strided_slice %0 {offsets = [0, 2], sizes = [8, 1], strides = [1, 1]} : vector<8x8xf32> to vector<8x1xf32>
    %131 = vector.broadcast %130 : vector<8x1xf32> to vector<8x256xf32>
    %132 = vector.broadcast %1 : vector<1x256xf32> to vector<8x256xf32>
    %133 = arith.mulf %131, %132 : vector<8x256xf32>
    %134 = arith.addf %129, %133 : vector<8x256xf32>
    %135 = vector.broadcast %2 : vector<1x256xf32> to vector<8x256xf32>
    %136 = arith.addf %134, %135 : vector<8x256xf32>
    %137 = vector.extract_strided_slice %136 {offsets = [0, 0], sizes = [8, 192], strides = [1, 1]} : vector<8x256xf32> to vector<8x192xf32>
    %cst_45 = arith.constant 5.000000e-01 : f32
    %138 = vector.broadcast %cst_45 : f32 to vector<8x192xf32>
    %139 = arith.mulf %138, %137 : vector<8x192xf32>
    %140 = math.tanh %139 : vector<8x192xf32>
    %cst_46 = arith.constant 5.000000e-01 : f32
    %141 = vector.broadcast %cst_46 : f32 to vector<8x192xf32>
    %142 = arith.mulf %141, %140 : vector<8x192xf32>
    %cst_47 = arith.constant 5.000000e-01 : f32
    %143 = vector.broadcast %cst_47 : f32 to vector<8x192xf32>
    %144 = arith.addf %142, %143 : vector<8x192xf32>
    %145 = vector.extract_strided_slice %144 {offsets = [0, 0], sizes = [8, 64], strides = [1, 1]} : vector<8x192xf32> to vector<8x64xf32>
    %146 = vector.extract_strided_slice %144 {offsets = [0, 64], sizes = [8, 64], strides = [1, 1]} : vector<8x192xf32> to vector<8x64xf32>
    %147 = vector.extract_strided_slice %144 {offsets = [0, 128], sizes = [8, 64], strides = [1, 1]} : vector<8x192xf32> to vector<8x64xf32>
    %148 = vector.extract_strided_slice %136 {offsets = [0, 192], sizes = [8, 64], strides = [1, 1]} : vector<8x256xf32> to vector<8x64xf32>
    %149 = math.tanh %148 : vector<8x64xf32>
    %150 = arith.mulf %146, %94 : vector<8x64xf32>
    %151 = arith.mulf %145, %149 : vector<8x64xf32>
    %152 = arith.addf %150, %151 : vector<8x64xf32>
    %153 = math.tanh %152 : vector<8x64xf32>
    %154 = arith.mulf %147, %153 : vector<8x64xf32>
    %155 = tpu.concatenate %154, %120 in 1 : vector<8x64xf32>, vector<8x64xf32> -> vector<8x128xf32>
    %156 = arith.truncf %155 : vector<8x128xf32> to vector<8x128xbf16>
    %c0_48 = arith.constant 0 : index
    %c0_49 = arith.constant 0 : index
    %157 = vector.load %arg4[%c0_48, %c0_49] : memref<128x256xbf16, #tpu.memory_space<vmem>>, vector<128x256xbf16>
    %cst_50 = arith.constant dense<0.000000e+00> : vector<8x256xf32>
    %158 = tpu.matmul %156, %157, %cst_50 {dimension_numbers = #tpu.dot_dimension_numbers<[1], [0], [0], [1], [0, 0, 1, 1], [], []>} : vector<8x128xbf16>, vector<128x256xbf16>, vector<8x256xf32> -> vector<8x256xf32>
    %159 = vector.broadcast %3 : vector<1x256xf32> to vector<8x256xf32>
    %160 = arith.addf %158, %159 : vector<8x256xf32>
    %161 = vector.extract_strided_slice %160 {offsets = [0, 0], sizes = [8, 192], strides = [1, 1]} : vector<8x256xf32> to vector<8x192xf32>
    %cst_51 = arith.constant 5.000000e-01 : f32
    %162 = vector.broadcast %cst_51 : f32 to vector<8x192xf32>
    %163 = arith.mulf %162, %161 : vector<8x192xf32>
    %164 = math.tanh %163 : vector<8x192xf32>
    %cst_52 = arith.constant 5.000000e-01 : f32
    %165 = vector.broadcast %cst_52 : f32 to vector<8x192xf32>
    %166 = arith.mulf %165, %164 : vector<8x192xf32>
    %cst_53 = arith.constant 5.000000e-01 : f32
    %167 = vector.broadcast %cst_53 : f32 to vector<8x192xf32>
    %168 = arith.addf %166, %167 : vector<8x192xf32>
    %169 = vector.extract_strided_slice %168 {offsets = [0, 0], sizes = [8, 64], strides = [1, 1]} : vector<8x192xf32> to vector<8x64xf32>
    %170 = vector.extract_strided_slice %168 {offsets = [0, 64], sizes = [8, 64], strides = [1, 1]} : vector<8x192xf32> to vector<8x64xf32>
    %171 = vector.extract_strided_slice %168 {offsets = [0, 128], sizes = [8, 64], strides = [1, 1]} : vector<8x192xf32> to vector<8x64xf32>
    %172 = vector.extract_strided_slice %160 {offsets = [0, 192], sizes = [8, 64], strides = [1, 1]} : vector<8x256xf32> to vector<8x64xf32>
    %173 = math.tanh %172 : vector<8x64xf32>
    %174 = arith.mulf %170, %118 : vector<8x64xf32>
    %175 = arith.mulf %169, %173 : vector<8x64xf32>
    %176 = arith.addf %174, %175 : vector<8x64xf32>
    %177 = math.tanh %176 : vector<8x64xf32>
    %178 = arith.mulf %171, %177 : vector<8x64xf32>
    %179 = vector.broadcast %5 : vector<1x64xf32> to vector<8x64xf32>
    %180 = arith.mulf %178, %179 : vector<8x64xf32>
    %cst_54 = arith.constant dense<0.000000e+00> : vector<8xf32>
    %181 = vector.multi_reduction <add>, %180, %cst_54 [1] : vector<8x64xf32> to vector<8xf32>
    %182 = vector.shape_cast %181 : vector<8xf32> to vector<8x1xf32>
    %183 = vector.broadcast %6 : vector<1x1xf32> to vector<8x1xf32>
    %184 = arith.addf %182, %183 : vector<8x1xf32>
    %185 = arith.truncf %154 : vector<8x64xf32> to vector<8x64xbf16>
    %c0_55 = arith.constant 0 : index
    %c0_56 = arith.constant 0 : index
    %186 = vector.load %arg2[%c0_55, %c0_56] : memref<64x256xbf16, #tpu.memory_space<vmem>>, vector<64x256xbf16>
    %cst_57 = arith.constant dense<0.000000e+00> : vector<8x256xf32>
    %187 = tpu.matmul %185, %186, %cst_57 {dimension_numbers = #tpu.dot_dimension_numbers<[1], [0], [0], [1], [0, 0, 1, 1], [], []>} : vector<8x64xbf16>, vector<64x256xbf16>, vector<8x256xf32> -> vector<8x256xf32>
    %188 = vector.extract_strided_slice %0 {offsets = [0, 3], sizes = [8, 1], strides = [1, 1]} : vector<8x8xf32> to vector<8x1xf32>
    %189 = vector.broadcast %188 : vector<8x1xf32> to vector<8x256xf32>
    %190 = vector.broadcast %1 : vector<1x256xf32> to vector<8x256xf32>
    %191 = arith.mulf %189, %190 : vector<8x256xf32>
    %192 = arith.addf %187, %191 : vector<8x256xf32>
    %193 = vector.broadcast %2 : vector<1x256xf32> to vector<8x256xf32>
    %194 = arith.addf %192, %193 : vector<8x256xf32>
    %195 = vector.extract_strided_slice %194 {offsets = [0, 0], sizes = [8, 192], strides = [1, 1]} : vector<8x256xf32> to vector<8x192xf32>
    %cst_58 = arith.constant 5.000000e-01 : f32
    %196 = vector.broadcast %cst_58 : f32 to vector<8x192xf32>
    %197 = arith.mulf %196, %195 : vector<8x192xf32>
    %198 = math.tanh %197 : vector<8x192xf32>
    %cst_59 = arith.constant 5.000000e-01 : f32
    %199 = vector.broadcast %cst_59 : f32 to vector<8x192xf32>
    %200 = arith.mulf %199, %198 : vector<8x192xf32>
    %cst_60 = arith.constant 5.000000e-01 : f32
    %201 = vector.broadcast %cst_60 : f32 to vector<8x192xf32>
    %202 = arith.addf %200, %201 : vector<8x192xf32>
    %203 = vector.extract_strided_slice %202 {offsets = [0, 0], sizes = [8, 64], strides = [1, 1]} : vector<8x192xf32> to vector<8x64xf32>
    %204 = vector.extract_strided_slice %202 {offsets = [0, 64], sizes = [8, 64], strides = [1, 1]} : vector<8x192xf32> to vector<8x64xf32>
    %205 = vector.extract_strided_slice %202 {offsets = [0, 128], sizes = [8, 64], strides = [1, 1]} : vector<8x192xf32> to vector<8x64xf32>
    %206 = vector.extract_strided_slice %194 {offsets = [0, 192], sizes = [8, 64], strides = [1, 1]} : vector<8x256xf32> to vector<8x64xf32>
    %207 = math.tanh %206 : vector<8x64xf32>
    %208 = arith.mulf %204, %152 : vector<8x64xf32>
    %209 = arith.mulf %203, %207 : vector<8x64xf32>
    %210 = arith.addf %208, %209 : vector<8x64xf32>
    %211 = math.tanh %210 : vector<8x64xf32>
    %212 = arith.mulf %205, %211 : vector<8x64xf32>
    %213 = tpu.concatenate %212, %178 in 1 : vector<8x64xf32>, vector<8x64xf32> -> vector<8x128xf32>
    %214 = arith.truncf %213 : vector<8x128xf32> to vector<8x128xbf16>
    %c0_61 = arith.constant 0 : index
    %c0_62 = arith.constant 0 : index
    %215 = vector.load %arg4[%c0_61, %c0_62] : memref<128x256xbf16, #tpu.memory_space<vmem>>, vector<128x256xbf16>
    %cst_63 = arith.constant dense<0.000000e+00> : vector<8x256xf32>
    %216 = tpu.matmul %214, %215, %cst_63 {dimension_numbers = #tpu.dot_dimension_numbers<[1], [0], [0], [1], [0, 0, 1, 1], [], []>} : vector<8x128xbf16>, vector<128x256xbf16>, vector<8x256xf32> -> vector<8x256xf32>
    %217 = vector.broadcast %3 : vector<1x256xf32> to vector<8x256xf32>
    %218 = arith.addf %216, %217 : vector<8x256xf32>
    %219 = vector.extract_strided_slice %218 {offsets = [0, 0], sizes = [8, 192], strides = [1, 1]} : vector<8x256xf32> to vector<8x192xf32>
    %cst_64 = arith.constant 5.000000e-01 : f32
    %220 = vector.broadcast %cst_64 : f32 to vector<8x192xf32>
    %221 = arith.mulf %220, %219 : vector<8x192xf32>
    %222 = math.tanh %221 : vector<8x192xf32>
    %cst_65 = arith.constant 5.000000e-01 : f32
    %223 = vector.broadcast %cst_65 : f32 to vector<8x192xf32>
    %224 = arith.mulf %223, %222 : vector<8x192xf32>
    %cst_66 = arith.constant 5.000000e-01 : f32
    %225 = vector.broadcast %cst_66 : f32 to vector<8x192xf32>
    %226 = arith.addf %224, %225 : vector<8x192xf32>
    %227 = vector.extract_strided_slice %226 {offsets = [0, 0], sizes = [8, 64], strides = [1, 1]} : vector<8x192xf32> to vector<8x64xf32>
    %228 = vector.extract_strided_slice %226 {offsets = [0, 64], sizes = [8, 64], strides = [1, 1]} : vector<8x192xf32> to vector<8x64xf32>
    %229 = vector.extract_strided_slice %226 {offsets = [0, 128], sizes = [8, 64], strides = [1, 1]} : vector<8x192xf32> to vector<8x64xf32>
    %230 = vector.extract_strided_slice %218 {offsets = [0, 192], sizes = [8, 64], strides = [1, 1]} : vector<8x256xf32> to vector<8x64xf32>
    %231 = math.tanh %230 : vector<8x64xf32>
    %232 = arith.mulf %228, %176 : vector<8x64xf32>
    %233 = arith.mulf %227, %231 : vector<8x64xf32>
    %234 = arith.addf %232, %233 : vector<8x64xf32>
    %235 = math.tanh %234 : vector<8x64xf32>
    %236 = arith.mulf %229, %235 : vector<8x64xf32>
    %237 = vector.broadcast %5 : vector<1x64xf32> to vector<8x64xf32>
    %238 = arith.mulf %236, %237 : vector<8x64xf32>
    %cst_67 = arith.constant dense<0.000000e+00> : vector<8xf32>
    %239 = vector.multi_reduction <add>, %238, %cst_67 [1] : vector<8x64xf32> to vector<8xf32>
    %240 = vector.shape_cast %239 : vector<8xf32> to vector<8x1xf32>
    %241 = vector.broadcast %6 : vector<1x1xf32> to vector<8x1xf32>
    %242 = arith.addf %240, %241 : vector<8x1xf32>
    %243 = arith.truncf %212 : vector<8x64xf32> to vector<8x64xbf16>
    %c0_68 = arith.constant 0 : index
    %c0_69 = arith.constant 0 : index
    %244 = vector.load %arg2[%c0_68, %c0_69] : memref<64x256xbf16, #tpu.memory_space<vmem>>, vector<64x256xbf16>
    %cst_70 = arith.constant dense<0.000000e+00> : vector<8x256xf32>
    %245 = tpu.matmul %243, %244, %cst_70 {dimension_numbers = #tpu.dot_dimension_numbers<[1], [0], [0], [1], [0, 0, 1, 1], [], []>} : vector<8x64xbf16>, vector<64x256xbf16>, vector<8x256xf32> -> vector<8x256xf32>
    %246 = vector.extract_strided_slice %0 {offsets = [0, 4], sizes = [8, 1], strides = [1, 1]} : vector<8x8xf32> to vector<8x1xf32>
    %247 = vector.broadcast %246 : vector<8x1xf32> to vector<8x256xf32>
    %248 = vector.broadcast %1 : vector<1x256xf32> to vector<8x256xf32>
    %249 = arith.mulf %247, %248 : vector<8x256xf32>
    %250 = arith.addf %245, %249 : vector<8x256xf32>
    %251 = vector.broadcast %2 : vector<1x256xf32> to vector<8x256xf32>
    %252 = arith.addf %250, %251 : vector<8x256xf32>
    %253 = vector.extract_strided_slice %252 {offsets = [0, 0], sizes = [8, 192], strides = [1, 1]} : vector<8x256xf32> to vector<8x192xf32>
    %cst_71 = arith.constant 5.000000e-01 : f32
    %254 = vector.broadcast %cst_71 : f32 to vector<8x192xf32>
    %255 = arith.mulf %254, %253 : vector<8x192xf32>
    %256 = math.tanh %255 : vector<8x192xf32>
    %cst_72 = arith.constant 5.000000e-01 : f32
    %257 = vector.broadcast %cst_72 : f32 to vector<8x192xf32>
    %258 = arith.mulf %257, %256 : vector<8x192xf32>
    %cst_73 = arith.constant 5.000000e-01 : f32
    %259 = vector.broadcast %cst_73 : f32 to vector<8x192xf32>
    %260 = arith.addf %258, %259 : vector<8x192xf32>
    %261 = vector.extract_strided_slice %260 {offsets = [0, 0], sizes = [8, 64], strides = [1, 1]} : vector<8x192xf32> to vector<8x64xf32>
    %262 = vector.extract_strided_slice %260 {offsets = [0, 64], sizes = [8, 64], strides = [1, 1]} : vector<8x192xf32> to vector<8x64xf32>
    %263 = vector.extract_strided_slice %260 {offsets = [0, 128], sizes = [8, 64], strides = [1, 1]} : vector<8x192xf32> to vector<8x64xf32>
    %264 = vector.extract_strided_slice %252 {offsets = [0, 192], sizes = [8, 64], strides = [1, 1]} : vector<8x256xf32> to vector<8x64xf32>
    %265 = math.tanh %264 : vector<8x64xf32>
    %266 = arith.mulf %262, %210 : vector<8x64xf32>
    %267 = arith.mulf %261, %265 : vector<8x64xf32>
    %268 = arith.addf %266, %267 : vector<8x64xf32>
    %269 = math.tanh %268 : vector<8x64xf32>
    %270 = arith.mulf %263, %269 : vector<8x64xf32>
    %271 = tpu.concatenate %270, %236 in 1 : vector<8x64xf32>, vector<8x64xf32> -> vector<8x128xf32>
    %272 = arith.truncf %271 : vector<8x128xf32> to vector<8x128xbf16>
    %c0_74 = arith.constant 0 : index
    %c0_75 = arith.constant 0 : index
    %273 = vector.load %arg4[%c0_74, %c0_75] : memref<128x256xbf16, #tpu.memory_space<vmem>>, vector<128x256xbf16>
    %cst_76 = arith.constant dense<0.000000e+00> : vector<8x256xf32>
    %274 = tpu.matmul %272, %273, %cst_76 {dimension_numbers = #tpu.dot_dimension_numbers<[1], [0], [0], [1], [0, 0, 1, 1], [], []>} : vector<8x128xbf16>, vector<128x256xbf16>, vector<8x256xf32> -> vector<8x256xf32>
    %275 = vector.broadcast %3 : vector<1x256xf32> to vector<8x256xf32>
    %276 = arith.addf %274, %275 : vector<8x256xf32>
    %277 = vector.extract_strided_slice %276 {offsets = [0, 0], sizes = [8, 192], strides = [1, 1]} : vector<8x256xf32> to vector<8x192xf32>
    %cst_77 = arith.constant 5.000000e-01 : f32
    %278 = vector.broadcast %cst_77 : f32 to vector<8x192xf32>
    %279 = arith.mulf %278, %277 : vector<8x192xf32>
    %280 = math.tanh %279 : vector<8x192xf32>
    %cst_78 = arith.constant 5.000000e-01 : f32
    %281 = vector.broadcast %cst_78 : f32 to vector<8x192xf32>
    %282 = arith.mulf %281, %280 : vector<8x192xf32>
    %cst_79 = arith.constant 5.000000e-01 : f32
    %283 = vector.broadcast %cst_79 : f32 to vector<8x192xf32>
    %284 = arith.addf %282, %283 : vector<8x192xf32>
    %285 = vector.extract_strided_slice %284 {offsets = [0, 0], sizes = [8, 64], strides = [1, 1]} : vector<8x192xf32> to vector<8x64xf32>
    %286 = vector.extract_strided_slice %284 {offsets = [0, 64], sizes = [8, 64], strides = [1, 1]} : vector<8x192xf32> to vector<8x64xf32>
    %287 = vector.extract_strided_slice %284 {offsets = [0, 128], sizes = [8, 64], strides = [1, 1]} : vector<8x192xf32> to vector<8x64xf32>
    %288 = vector.extract_strided_slice %276 {offsets = [0, 192], sizes = [8, 64], strides = [1, 1]} : vector<8x256xf32> to vector<8x64xf32>
    %289 = math.tanh %288 : vector<8x64xf32>
    %290 = arith.mulf %286, %234 : vector<8x64xf32>
    %291 = arith.mulf %285, %289 : vector<8x64xf32>
    %292 = arith.addf %290, %291 : vector<8x64xf32>
    %293 = math.tanh %292 : vector<8x64xf32>
    %294 = arith.mulf %287, %293 : vector<8x64xf32>
    %295 = vector.broadcast %5 : vector<1x64xf32> to vector<8x64xf32>
    %296 = arith.mulf %294, %295 : vector<8x64xf32>
    %cst_80 = arith.constant dense<0.000000e+00> : vector<8xf32>
    %297 = vector.multi_reduction <add>, %296, %cst_80 [1] : vector<8x64xf32> to vector<8xf32>
    %298 = vector.shape_cast %297 : vector<8xf32> to vector<8x1xf32>
    %299 = vector.broadcast %6 : vector<1x1xf32> to vector<8x1xf32>
    %300 = arith.addf %298, %299 : vector<8x1xf32>
    %301 = arith.truncf %270 : vector<8x64xf32> to vector<8x64xbf16>
    %c0_81 = arith.constant 0 : index
    %c0_82 = arith.constant 0 : index
    %302 = vector.load %arg2[%c0_81, %c0_82] : memref<64x256xbf16, #tpu.memory_space<vmem>>, vector<64x256xbf16>
    %cst_83 = arith.constant dense<0.000000e+00> : vector<8x256xf32>
    %303 = tpu.matmul %301, %302, %cst_83 {dimension_numbers = #tpu.dot_dimension_numbers<[1], [0], [0], [1], [0, 0, 1, 1], [], []>} : vector<8x64xbf16>, vector<64x256xbf16>, vector<8x256xf32> -> vector<8x256xf32>
    %304 = vector.extract_strided_slice %0 {offsets = [0, 5], sizes = [8, 1], strides = [1, 1]} : vector<8x8xf32> to vector<8x1xf32>
    %305 = vector.broadcast %304 : vector<8x1xf32> to vector<8x256xf32>
    %306 = vector.broadcast %1 : vector<1x256xf32> to vector<8x256xf32>
    %307 = arith.mulf %305, %306 : vector<8x256xf32>
    %308 = arith.addf %303, %307 : vector<8x256xf32>
    %309 = vector.broadcast %2 : vector<1x256xf32> to vector<8x256xf32>
    %310 = arith.addf %308, %309 : vector<8x256xf32>
    %311 = vector.extract_strided_slice %310 {offsets = [0, 0], sizes = [8, 192], strides = [1, 1]} : vector<8x256xf32> to vector<8x192xf32>
    %cst_84 = arith.constant 5.000000e-01 : f32
    %312 = vector.broadcast %cst_84 : f32 to vector<8x192xf32>
    %313 = arith.mulf %312, %311 : vector<8x192xf32>
    %314 = math.tanh %313 : vector<8x192xf32>
    %cst_85 = arith.constant 5.000000e-01 : f32
    %315 = vector.broadcast %cst_85 : f32 to vector<8x192xf32>
    %316 = arith.mulf %315, %314 : vector<8x192xf32>
    %cst_86 = arith.constant 5.000000e-01 : f32
    %317 = vector.broadcast %cst_86 : f32 to vector<8x192xf32>
    %318 = arith.addf %316, %317 : vector<8x192xf32>
    %319 = vector.extract_strided_slice %318 {offsets = [0, 0], sizes = [8, 64], strides = [1, 1]} : vector<8x192xf32> to vector<8x64xf32>
    %320 = vector.extract_strided_slice %318 {offsets = [0, 64], sizes = [8, 64], strides = [1, 1]} : vector<8x192xf32> to vector<8x64xf32>
    %321 = vector.extract_strided_slice %318 {offsets = [0, 128], sizes = [8, 64], strides = [1, 1]} : vector<8x192xf32> to vector<8x64xf32>
    %322 = vector.extract_strided_slice %310 {offsets = [0, 192], sizes = [8, 64], strides = [1, 1]} : vector<8x256xf32> to vector<8x64xf32>
    %323 = math.tanh %322 : vector<8x64xf32>
    %324 = arith.mulf %320, %268 : vector<8x64xf32>
    %325 = arith.mulf %319, %323 : vector<8x64xf32>
    %326 = arith.addf %324, %325 : vector<8x64xf32>
    %327 = math.tanh %326 : vector<8x64xf32>
    %328 = arith.mulf %321, %327 : vector<8x64xf32>
    %329 = tpu.concatenate %328, %294 in 1 : vector<8x64xf32>, vector<8x64xf32> -> vector<8x128xf32>
    %330 = arith.truncf %329 : vector<8x128xf32> to vector<8x128xbf16>
    %c0_87 = arith.constant 0 : index
    %c0_88 = arith.constant 0 : index
    %331 = vector.load %arg4[%c0_87, %c0_88] : memref<128x256xbf16, #tpu.memory_space<vmem>>, vector<128x256xbf16>
    %cst_89 = arith.constant dense<0.000000e+00> : vector<8x256xf32>
    %332 = tpu.matmul %330, %331, %cst_89 {dimension_numbers = #tpu.dot_dimension_numbers<[1], [0], [0], [1], [0, 0, 1, 1], [], []>} : vector<8x128xbf16>, vector<128x256xbf16>, vector<8x256xf32> -> vector<8x256xf32>
    %333 = vector.broadcast %3 : vector<1x256xf32> to vector<8x256xf32>
    %334 = arith.addf %332, %333 : vector<8x256xf32>
    %335 = vector.extract_strided_slice %334 {offsets = [0, 0], sizes = [8, 192], strides = [1, 1]} : vector<8x256xf32> to vector<8x192xf32>
    %cst_90 = arith.constant 5.000000e-01 : f32
    %336 = vector.broadcast %cst_90 : f32 to vector<8x192xf32>
    %337 = arith.mulf %336, %335 : vector<8x192xf32>
    %338 = math.tanh %337 : vector<8x192xf32>
    %cst_91 = arith.constant 5.000000e-01 : f32
    %339 = vector.broadcast %cst_91 : f32 to vector<8x192xf32>
    %340 = arith.mulf %339, %338 : vector<8x192xf32>
    %cst_92 = arith.constant 5.000000e-01 : f32
    %341 = vector.broadcast %cst_92 : f32 to vector<8x192xf32>
    %342 = arith.addf %340, %341 : vector<8x192xf32>
    %343 = vector.extract_strided_slice %342 {offsets = [0, 0], sizes = [8, 64], strides = [1, 1]} : vector<8x192xf32> to vector<8x64xf32>
    %344 = vector.extract_strided_slice %342 {offsets = [0, 64], sizes = [8, 64], strides = [1, 1]} : vector<8x192xf32> to vector<8x64xf32>
    %345 = vector.extract_strided_slice %342 {offsets = [0, 128], sizes = [8, 64], strides = [1, 1]} : vector<8x192xf32> to vector<8x64xf32>
    %346 = vector.extract_strided_slice %334 {offsets = [0, 192], sizes = [8, 64], strides = [1, 1]} : vector<8x256xf32> to vector<8x64xf32>
    %347 = math.tanh %346 : vector<8x64xf32>
    %348 = arith.mulf %344, %292 : vector<8x64xf32>
    %349 = arith.mulf %343, %347 : vector<8x64xf32>
    %350 = arith.addf %348, %349 : vector<8x64xf32>
    %351 = math.tanh %350 : vector<8x64xf32>
    %352 = arith.mulf %345, %351 : vector<8x64xf32>
    %353 = vector.broadcast %5 : vector<1x64xf32> to vector<8x64xf32>
    %354 = arith.mulf %352, %353 : vector<8x64xf32>
    %cst_93 = arith.constant dense<0.000000e+00> : vector<8xf32>
    %355 = vector.multi_reduction <add>, %354, %cst_93 [1] : vector<8x64xf32> to vector<8xf32>
    %356 = vector.shape_cast %355 : vector<8xf32> to vector<8x1xf32>
    %357 = vector.broadcast %6 : vector<1x1xf32> to vector<8x1xf32>
    %358 = arith.addf %356, %357 : vector<8x1xf32>
    %359 = arith.truncf %328 : vector<8x64xf32> to vector<8x64xbf16>
    %c0_94 = arith.constant 0 : index
    %c0_95 = arith.constant 0 : index
    %360 = vector.load %arg2[%c0_94, %c0_95] : memref<64x256xbf16, #tpu.memory_space<vmem>>, vector<64x256xbf16>
    %cst_96 = arith.constant dense<0.000000e+00> : vector<8x256xf32>
    %361 = tpu.matmul %359, %360, %cst_96 {dimension_numbers = #tpu.dot_dimension_numbers<[1], [0], [0], [1], [0, 0, 1, 1], [], []>} : vector<8x64xbf16>, vector<64x256xbf16>, vector<8x256xf32> -> vector<8x256xf32>
    %362 = vector.extract_strided_slice %0 {offsets = [0, 6], sizes = [8, 1], strides = [1, 1]} : vector<8x8xf32> to vector<8x1xf32>
    %363 = vector.broadcast %362 : vector<8x1xf32> to vector<8x256xf32>
    %364 = vector.broadcast %1 : vector<1x256xf32> to vector<8x256xf32>
    %365 = arith.mulf %363, %364 : vector<8x256xf32>
    %366 = arith.addf %361, %365 : vector<8x256xf32>
    %367 = vector.broadcast %2 : vector<1x256xf32> to vector<8x256xf32>
    %368 = arith.addf %366, %367 : vector<8x256xf32>
    %369 = vector.extract_strided_slice %368 {offsets = [0, 0], sizes = [8, 192], strides = [1, 1]} : vector<8x256xf32> to vector<8x192xf32>
    %cst_97 = arith.constant 5.000000e-01 : f32
    %370 = vector.broadcast %cst_97 : f32 to vector<8x192xf32>
    %371 = arith.mulf %370, %369 : vector<8x192xf32>
    %372 = math.tanh %371 : vector<8x192xf32>
    %cst_98 = arith.constant 5.000000e-01 : f32
    %373 = vector.broadcast %cst_98 : f32 to vector<8x192xf32>
    %374 = arith.mulf %373, %372 : vector<8x192xf32>
    %cst_99 = arith.constant 5.000000e-01 : f32
    %375 = vector.broadcast %cst_99 : f32 to vector<8x192xf32>
    %376 = arith.addf %374, %375 : vector<8x192xf32>
    %377 = vector.extract_strided_slice %376 {offsets = [0, 0], sizes = [8, 64], strides = [1, 1]} : vector<8x192xf32> to vector<8x64xf32>
    %378 = vector.extract_strided_slice %376 {offsets = [0, 64], sizes = [8, 64], strides = [1, 1]} : vector<8x192xf32> to vector<8x64xf32>
    %379 = vector.extract_strided_slice %376 {offsets = [0, 128], sizes = [8, 64], strides = [1, 1]} : vector<8x192xf32> to vector<8x64xf32>
    %380 = vector.extract_strided_slice %368 {offsets = [0, 192], sizes = [8, 64], strides = [1, 1]} : vector<8x256xf32> to vector<8x64xf32>
    %381 = math.tanh %380 : vector<8x64xf32>
    %382 = arith.mulf %378, %326 : vector<8x64xf32>
    %383 = arith.mulf %377, %381 : vector<8x64xf32>
    %384 = arith.addf %382, %383 : vector<8x64xf32>
    %385 = math.tanh %384 : vector<8x64xf32>
    %386 = arith.mulf %379, %385 : vector<8x64xf32>
    %387 = tpu.concatenate %386, %352 in 1 : vector<8x64xf32>, vector<8x64xf32> -> vector<8x128xf32>
    %388 = arith.truncf %387 : vector<8x128xf32> to vector<8x128xbf16>
    %c0_100 = arith.constant 0 : index
    %c0_101 = arith.constant 0 : index
    %389 = vector.load %arg4[%c0_100, %c0_101] : memref<128x256xbf16, #tpu.memory_space<vmem>>, vector<128x256xbf16>
    %cst_102 = arith.constant dense<0.000000e+00> : vector<8x256xf32>
    %390 = tpu.matmul %388, %389, %cst_102 {dimension_numbers = #tpu.dot_dimension_numbers<[1], [0], [0], [1], [0, 0, 1, 1], [], []>} : vector<8x128xbf16>, vector<128x256xbf16>, vector<8x256xf32> -> vector<8x256xf32>
    %391 = vector.broadcast %3 : vector<1x256xf32> to vector<8x256xf32>
    %392 = arith.addf %390, %391 : vector<8x256xf32>
    %393 = vector.extract_strided_slice %392 {offsets = [0, 0], sizes = [8, 192], strides = [1, 1]} : vector<8x256xf32> to vector<8x192xf32>
    %cst_103 = arith.constant 5.000000e-01 : f32
    %394 = vector.broadcast %cst_103 : f32 to vector<8x192xf32>
    %395 = arith.mulf %394, %393 : vector<8x192xf32>
    %396 = math.tanh %395 : vector<8x192xf32>
    %cst_104 = arith.constant 5.000000e-01 : f32
    %397 = vector.broadcast %cst_104 : f32 to vector<8x192xf32>
    %398 = arith.mulf %397, %396 : vector<8x192xf32>
    %cst_105 = arith.constant 5.000000e-01 : f32
    %399 = vector.broadcast %cst_105 : f32 to vector<8x192xf32>
    %400 = arith.addf %398, %399 : vector<8x192xf32>
    %401 = vector.extract_strided_slice %400 {offsets = [0, 0], sizes = [8, 64], strides = [1, 1]} : vector<8x192xf32> to vector<8x64xf32>
    %402 = vector.extract_strided_slice %400 {offsets = [0, 64], sizes = [8, 64], strides = [1, 1]} : vector<8x192xf32> to vector<8x64xf32>
    %403 = vector.extract_strided_slice %400 {offsets = [0, 128], sizes = [8, 64], strides = [1, 1]} : vector<8x192xf32> to vector<8x64xf32>
    %404 = vector.extract_strided_slice %392 {offsets = [0, 192], sizes = [8, 64], strides = [1, 1]} : vector<8x256xf32> to vector<8x64xf32>
    %405 = math.tanh %404 : vector<8x64xf32>
    %406 = arith.mulf %402, %350 : vector<8x64xf32>
    %407 = arith.mulf %401, %405 : vector<8x64xf32>
    %408 = arith.addf %406, %407 : vector<8x64xf32>
    %409 = math.tanh %408 : vector<8x64xf32>
    %410 = arith.mulf %403, %409 : vector<8x64xf32>
    %411 = vector.broadcast %5 : vector<1x64xf32> to vector<8x64xf32>
    %412 = arith.mulf %410, %411 : vector<8x64xf32>
    %cst_106 = arith.constant dense<0.000000e+00> : vector<8xf32>
    %413 = vector.multi_reduction <add>, %412, %cst_106 [1] : vector<8x64xf32> to vector<8xf32>
    %414 = vector.shape_cast %413 : vector<8xf32> to vector<8x1xf32>
    %415 = vector.broadcast %6 : vector<1x1xf32> to vector<8x1xf32>
    %416 = arith.addf %414, %415 : vector<8x1xf32>
    %417 = arith.truncf %386 : vector<8x64xf32> to vector<8x64xbf16>
    %c0_107 = arith.constant 0 : index
    %c0_108 = arith.constant 0 : index
    %418 = vector.load %arg2[%c0_107, %c0_108] : memref<64x256xbf16, #tpu.memory_space<vmem>>, vector<64x256xbf16>
    %cst_109 = arith.constant dense<0.000000e+00> : vector<8x256xf32>
    %419 = tpu.matmul %417, %418, %cst_109 {dimension_numbers = #tpu.dot_dimension_numbers<[1], [0], [0], [1], [0, 0, 1, 1], [], []>} : vector<8x64xbf16>, vector<64x256xbf16>, vector<8x256xf32> -> vector<8x256xf32>
    %420 = vector.extract_strided_slice %0 {offsets = [0, 7], sizes = [8, 1], strides = [1, 1]} : vector<8x8xf32> to vector<8x1xf32>
    %421 = vector.broadcast %420 : vector<8x1xf32> to vector<8x256xf32>
    %422 = vector.broadcast %1 : vector<1x256xf32> to vector<8x256xf32>
    %423 = arith.mulf %421, %422 : vector<8x256xf32>
    %424 = arith.addf %419, %423 : vector<8x256xf32>
    %425 = vector.broadcast %2 : vector<1x256xf32> to vector<8x256xf32>
    %426 = arith.addf %424, %425 : vector<8x256xf32>
    %427 = vector.extract_strided_slice %426 {offsets = [0, 0], sizes = [8, 192], strides = [1, 1]} : vector<8x256xf32> to vector<8x192xf32>
    %cst_110 = arith.constant 5.000000e-01 : f32
    %428 = vector.broadcast %cst_110 : f32 to vector<8x192xf32>
    %429 = arith.mulf %428, %427 : vector<8x192xf32>
    %430 = math.tanh %429 : vector<8x192xf32>
    %cst_111 = arith.constant 5.000000e-01 : f32
    %431 = vector.broadcast %cst_111 : f32 to vector<8x192xf32>
    %432 = arith.mulf %431, %430 : vector<8x192xf32>
    %cst_112 = arith.constant 5.000000e-01 : f32
    %433 = vector.broadcast %cst_112 : f32 to vector<8x192xf32>
    %434 = arith.addf %432, %433 : vector<8x192xf32>
    %435 = vector.extract_strided_slice %434 {offsets = [0, 0], sizes = [8, 64], strides = [1, 1]} : vector<8x192xf32> to vector<8x64xf32>
    %436 = vector.extract_strided_slice %434 {offsets = [0, 64], sizes = [8, 64], strides = [1, 1]} : vector<8x192xf32> to vector<8x64xf32>
    %437 = vector.extract_strided_slice %434 {offsets = [0, 128], sizes = [8, 64], strides = [1, 1]} : vector<8x192xf32> to vector<8x64xf32>
    %438 = vector.extract_strided_slice %426 {offsets = [0, 192], sizes = [8, 64], strides = [1, 1]} : vector<8x256xf32> to vector<8x64xf32>
    %439 = math.tanh %438 : vector<8x64xf32>
    %440 = arith.mulf %436, %384 : vector<8x64xf32>
    %441 = arith.mulf %435, %439 : vector<8x64xf32>
    %442 = arith.addf %440, %441 : vector<8x64xf32>
    %443 = math.tanh %442 : vector<8x64xf32>
    %444 = arith.mulf %437, %443 : vector<8x64xf32>
    %445 = tpu.concatenate %444, %410 in 1 : vector<8x64xf32>, vector<8x64xf32> -> vector<8x128xf32>
    %446 = arith.truncf %445 : vector<8x128xf32> to vector<8x128xbf16>
    %c0_113 = arith.constant 0 : index
    %c0_114 = arith.constant 0 : index
    %447 = vector.load %arg4[%c0_113, %c0_114] : memref<128x256xbf16, #tpu.memory_space<vmem>>, vector<128x256xbf16>
    %cst_115 = arith.constant dense<0.000000e+00> : vector<8x256xf32>
    %448 = tpu.matmul %446, %447, %cst_115 {dimension_numbers = #tpu.dot_dimension_numbers<[1], [0], [0], [1], [0, 0, 1, 1], [], []>} : vector<8x128xbf16>, vector<128x256xbf16>, vector<8x256xf32> -> vector<8x256xf32>
    %449 = vector.broadcast %3 : vector<1x256xf32> to vector<8x256xf32>
    %450 = arith.addf %448, %449 : vector<8x256xf32>
    %451 = vector.extract_strided_slice %450 {offsets = [0, 0], sizes = [8, 192], strides = [1, 1]} : vector<8x256xf32> to vector<8x192xf32>
    %cst_116 = arith.constant 5.000000e-01 : f32
    %452 = vector.broadcast %cst_116 : f32 to vector<8x192xf32>
    %453 = arith.mulf %452, %451 : vector<8x192xf32>
    %454 = math.tanh %453 : vector<8x192xf32>
    %cst_117 = arith.constant 5.000000e-01 : f32
    %455 = vector.broadcast %cst_117 : f32 to vector<8x192xf32>
    %456 = arith.mulf %455, %454 : vector<8x192xf32>
    %cst_118 = arith.constant 5.000000e-01 : f32
    %457 = vector.broadcast %cst_118 : f32 to vector<8x192xf32>
    %458 = arith.addf %456, %457 : vector<8x192xf32>
    %459 = vector.extract_strided_slice %458 {offsets = [0, 0], sizes = [8, 64], strides = [1, 1]} : vector<8x192xf32> to vector<8x64xf32>
    %460 = vector.extract_strided_slice %458 {offsets = [0, 64], sizes = [8, 64], strides = [1, 1]} : vector<8x192xf32> to vector<8x64xf32>
    %461 = vector.extract_strided_slice %458 {offsets = [0, 128], sizes = [8, 64], strides = [1, 1]} : vector<8x192xf32> to vector<8x64xf32>
    %462 = vector.extract_strided_slice %450 {offsets = [0, 192], sizes = [8, 64], strides = [1, 1]} : vector<8x256xf32> to vector<8x64xf32>
    %463 = math.tanh %462 : vector<8x64xf32>
    %464 = arith.mulf %460, %408 : vector<8x64xf32>
    %465 = arith.mulf %459, %463 : vector<8x64xf32>
    %466 = arith.addf %464, %465 : vector<8x64xf32>
    %467 = math.tanh %466 : vector<8x64xf32>
    %468 = arith.mulf %461, %467 : vector<8x64xf32>
    %469 = vector.broadcast %5 : vector<1x64xf32> to vector<8x64xf32>
    %470 = arith.mulf %468, %469 : vector<8x64xf32>
    %cst_119 = arith.constant dense<0.000000e+00> : vector<8xf32>
    %471 = vector.multi_reduction <add>, %470, %cst_119 [1] : vector<8x64xf32> to vector<8xf32>
    %472 = vector.shape_cast %471 : vector<8xf32> to vector<8x1xf32>
    %473 = vector.broadcast %6 : vector<1x1xf32> to vector<8x1xf32>
    %474 = arith.addf %472, %473 : vector<8x1xf32>
    %475 = tpu.concatenate %444, %468 in 1 : vector<8x64xf32>, vector<8x64xf32> -> vector<8x128xf32>
    %476 = arith.truncf %475 : vector<8x128xf32> to vector<8x128xbf16>
    %c0_120 = arith.constant 0 : index
    %c0_121 = arith.constant 0 : index
    %477 = vector.load %arg6[%c0_120, %c0_121] : memref<128x256xbf16, #tpu.memory_space<vmem>>, vector<128x256xbf16>
    %cst_122 = arith.constant dense<0.000000e+00> : vector<8x256xf32>
    %478 = tpu.matmul %476, %477, %cst_122 {dimension_numbers = #tpu.dot_dimension_numbers<[1], [0], [0], [1], [0, 0, 1, 1], [], []>} : vector<8x128xbf16>, vector<128x256xbf16>, vector<8x256xf32> -> vector<8x256xf32>
    %479 = vector.broadcast %4 : vector<1x256xf32> to vector<8x256xf32>
    %480 = arith.addf %478, %479 : vector<8x256xf32>
    %481 = vector.extract_strided_slice %480 {offsets = [0, 0], sizes = [8, 192], strides = [1, 1]} : vector<8x256xf32> to vector<8x192xf32>
    %cst_123 = arith.constant 5.000000e-01 : f32
    %482 = vector.broadcast %cst_123 : f32 to vector<8x192xf32>
    %483 = arith.mulf %482, %481 : vector<8x192xf32>
    %484 = math.tanh %483 : vector<8x192xf32>
    %cst_124 = arith.constant 5.000000e-01 : f32
    %485 = vector.broadcast %cst_124 : f32 to vector<8x192xf32>
    %486 = arith.mulf %485, %484 : vector<8x192xf32>
    %cst_125 = arith.constant 5.000000e-01 : f32
    %487 = vector.broadcast %cst_125 : f32 to vector<8x192xf32>
    %488 = arith.addf %486, %487 : vector<8x192xf32>
    %489 = vector.extract_strided_slice %488 {offsets = [0, 0], sizes = [8, 64], strides = [1, 1]} : vector<8x192xf32> to vector<8x64xf32>
    %490 = vector.extract_strided_slice %488 {offsets = [0, 64], sizes = [8, 64], strides = [1, 1]} : vector<8x192xf32> to vector<8x64xf32>
    %491 = vector.extract_strided_slice %488 {offsets = [0, 128], sizes = [8, 64], strides = [1, 1]} : vector<8x192xf32> to vector<8x64xf32>
    %492 = vector.extract_strided_slice %480 {offsets = [0, 192], sizes = [8, 64], strides = [1, 1]} : vector<8x256xf32> to vector<8x64xf32>
    %493 = math.tanh %492 : vector<8x64xf32>
    %494 = arith.mulf %490, %442 : vector<8x64xf32>
    %495 = arith.mulf %489, %493 : vector<8x64xf32>
    %496 = arith.addf %494, %495 : vector<8x64xf32>
    %497 = math.tanh %496 : vector<8x64xf32>
    %498 = arith.mulf %491, %497 : vector<8x64xf32>
    %499 = tpu.concatenate %498, %468 in 1 : vector<8x64xf32>, vector<8x64xf32> -> vector<8x128xf32>
    %500 = arith.truncf %499 : vector<8x128xf32> to vector<8x128xbf16>
    %c0_126 = arith.constant 0 : index
    %c0_127 = arith.constant 0 : index
    %501 = vector.load %arg4[%c0_126, %c0_127] : memref<128x256xbf16, #tpu.memory_space<vmem>>, vector<128x256xbf16>
    %cst_128 = arith.constant dense<0.000000e+00> : vector<8x256xf32>
    %502 = tpu.matmul %500, %501, %cst_128 {dimension_numbers = #tpu.dot_dimension_numbers<[1], [0], [0], [1], [0, 0, 1, 1], [], []>} : vector<8x128xbf16>, vector<128x256xbf16>, vector<8x256xf32> -> vector<8x256xf32>
    %503 = vector.broadcast %3 : vector<1x256xf32> to vector<8x256xf32>
    %504 = arith.addf %502, %503 : vector<8x256xf32>
    %505 = vector.extract_strided_slice %504 {offsets = [0, 0], sizes = [8, 192], strides = [1, 1]} : vector<8x256xf32> to vector<8x192xf32>
    %cst_129 = arith.constant 5.000000e-01 : f32
    %506 = vector.broadcast %cst_129 : f32 to vector<8x192xf32>
    %507 = arith.mulf %506, %505 : vector<8x192xf32>
    %508 = math.tanh %507 : vector<8x192xf32>
    %cst_130 = arith.constant 5.000000e-01 : f32
    %509 = vector.broadcast %cst_130 : f32 to vector<8x192xf32>
    %510 = arith.mulf %509, %508 : vector<8x192xf32>
    %cst_131 = arith.constant 5.000000e-01 : f32
    %511 = vector.broadcast %cst_131 : f32 to vector<8x192xf32>
    %512 = arith.addf %510, %511 : vector<8x192xf32>
    %513 = vector.extract_strided_slice %512 {offsets = [0, 0], sizes = [8, 64], strides = [1, 1]} : vector<8x192xf32> to vector<8x64xf32>
    %514 = vector.extract_strided_slice %512 {offsets = [0, 64], sizes = [8, 64], strides = [1, 1]} : vector<8x192xf32> to vector<8x64xf32>
    %515 = vector.extract_strided_slice %512 {offsets = [0, 128], sizes = [8, 64], strides = [1, 1]} : vector<8x192xf32> to vector<8x64xf32>
    %516 = vector.extract_strided_slice %504 {offsets = [0, 192], sizes = [8, 64], strides = [1, 1]} : vector<8x256xf32> to vector<8x64xf32>
    %517 = math.tanh %516 : vector<8x64xf32>
    %518 = arith.mulf %514, %466 : vector<8x64xf32>
    %519 = arith.mulf %513, %517 : vector<8x64xf32>
    %520 = arith.addf %518, %519 : vector<8x64xf32>
    %521 = math.tanh %520 : vector<8x64xf32>
    %522 = arith.mulf %515, %521 : vector<8x64xf32>
    %523 = vector.broadcast %5 : vector<1x64xf32> to vector<8x64xf32>
    %524 = arith.mulf %522, %523 : vector<8x64xf32>
    %cst_132 = arith.constant dense<0.000000e+00> : vector<8xf32>
    %525 = vector.multi_reduction <add>, %524, %cst_132 [1] : vector<8x64xf32> to vector<8xf32>
    %526 = vector.shape_cast %525 : vector<8xf32> to vector<8x1xf32>
    %527 = vector.broadcast %6 : vector<1x1xf32> to vector<8x1xf32>
    %528 = arith.addf %526, %527 : vector<8x1xf32>
    %529 = tpu.concatenate %498, %522 in 1 : vector<8x64xf32>, vector<8x64xf32> -> vector<8x128xf32>
    %530 = arith.truncf %529 : vector<8x128xf32> to vector<8x128xbf16>
    %c0_133 = arith.constant 0 : index
    %c0_134 = arith.constant 0 : index
    %531 = vector.load %arg6[%c0_133, %c0_134] : memref<128x256xbf16, #tpu.memory_space<vmem>>, vector<128x256xbf16>
    %cst_135 = arith.constant dense<0.000000e+00> : vector<8x256xf32>
    %532 = tpu.matmul %530, %531, %cst_135 {dimension_numbers = #tpu.dot_dimension_numbers<[1], [0], [0], [1], [0, 0, 1, 1], [], []>} : vector<8x128xbf16>, vector<128x256xbf16>, vector<8x256xf32> -> vector<8x256xf32>
    %533 = vector.broadcast %4 : vector<1x256xf32> to vector<8x256xf32>
    %534 = arith.addf %532, %533 : vector<8x256xf32>
    %535 = vector.extract_strided_slice %534 {offsets = [0, 0], sizes = [8, 192], strides = [1, 1]} : vector<8x256xf32> to vector<8x192xf32>
    %cst_136 = arith.constant 5.000000e-01 : f32
    %536 = vector.broadcast %cst_136 : f32 to vector<8x192xf32>
    %537 = arith.mulf %536, %535 : vector<8x192xf32>
    %538 = math.tanh %537 : vector<8x192xf32>
    %cst_137 = arith.constant 5.000000e-01 : f32
    %539 = vector.broadcast %cst_137 : f32 to vector<8x192xf32>
    %540 = arith.mulf %539, %538 : vector<8x192xf32>
    %cst_138 = arith.constant 5.000000e-01 : f32
    %541 = vector.broadcast %cst_138 : f32 to vector<8x192xf32>
    %542 = arith.addf %540, %541 : vector<8x192xf32>
    %543 = vector.extract_strided_slice %542 {offsets = [0, 0], sizes = [8, 64], strides = [1, 1]} : vector<8x192xf32> to vector<8x64xf32>
    %544 = vector.extract_strided_slice %542 {offsets = [0, 64], sizes = [8, 64], strides = [1, 1]} : vector<8x192xf32> to vector<8x64xf32>
    %545 = vector.extract_strided_slice %542 {offsets = [0, 128], sizes = [8, 64], strides = [1, 1]} : vector<8x192xf32> to vector<8x64xf32>
    %546 = vector.extract_strided_slice %534 {offsets = [0, 192], sizes = [8, 64], strides = [1, 1]} : vector<8x256xf32> to vector<8x64xf32>
    %547 = math.tanh %546 : vector<8x64xf32>
    %548 = arith.mulf %544, %496 : vector<8x64xf32>
    %549 = arith.mulf %543, %547 : vector<8x64xf32>
    %550 = arith.addf %548, %549 : vector<8x64xf32>
    %551 = math.tanh %550 : vector<8x64xf32>
    %552 = arith.mulf %545, %551 : vector<8x64xf32>
    %553 = tpu.concatenate %552, %522 in 1 : vector<8x64xf32>, vector<8x64xf32> -> vector<8x128xf32>
    %554 = arith.truncf %553 : vector<8x128xf32> to vector<8x128xbf16>
    %c0_139 = arith.constant 0 : index
    %c0_140 = arith.constant 0 : index
    %555 = vector.load %arg4[%c0_139, %c0_140] : memref<128x256xbf16, #tpu.memory_space<vmem>>, vector<128x256xbf16>
    %cst_141 = arith.constant dense<0.000000e+00> : vector<8x256xf32>
    %556 = tpu.matmul %554, %555, %cst_141 {dimension_numbers = #tpu.dot_dimension_numbers<[1], [0], [0], [1], [0, 0, 1, 1], [], []>} : vector<8x128xbf16>, vector<128x256xbf16>, vector<8x256xf32> -> vector<8x256xf32>
    %557 = vector.broadcast %3 : vector<1x256xf32> to vector<8x256xf32>
    %558 = arith.addf %556, %557 : vector<8x256xf32>
    %559 = vector.extract_strided_slice %558 {offsets = [0, 0], sizes = [8, 192], strides = [1, 1]} : vector<8x256xf32> to vector<8x192xf32>
    %cst_142 = arith.constant 5.000000e-01 : f32
    %560 = vector.broadcast %cst_142 : f32 to vector<8x192xf32>
    %561 = arith.mulf %560, %559 : vector<8x192xf32>
    %562 = math.tanh %561 : vector<8x192xf32>
    %cst_143 = arith.constant 5.000000e-01 : f32
    %563 = vector.broadcast %cst_143 : f32 to vector<8x192xf32>
    %564 = arith.mulf %563, %562 : vector<8x192xf32>
    %cst_144 = arith.constant 5.000000e-01 : f32
    %565 = vector.broadcast %cst_144 : f32 to vector<8x192xf32>
    %566 = arith.addf %564, %565 : vector<8x192xf32>
    %567 = vector.extract_strided_slice %566 {offsets = [0, 0], sizes = [8, 64], strides = [1, 1]} : vector<8x192xf32> to vector<8x64xf32>
    %568 = vector.extract_strided_slice %566 {offsets = [0, 64], sizes = [8, 64], strides = [1, 1]} : vector<8x192xf32> to vector<8x64xf32>
    %569 = vector.extract_strided_slice %566 {offsets = [0, 128], sizes = [8, 64], strides = [1, 1]} : vector<8x192xf32> to vector<8x64xf32>
    %570 = vector.extract_strided_slice %558 {offsets = [0, 192], sizes = [8, 64], strides = [1, 1]} : vector<8x256xf32> to vector<8x64xf32>
    %571 = math.tanh %570 : vector<8x64xf32>
    %572 = arith.mulf %568, %520 : vector<8x64xf32>
    %573 = arith.mulf %567, %571 : vector<8x64xf32>
    %574 = arith.addf %572, %573 : vector<8x64xf32>
    %575 = math.tanh %574 : vector<8x64xf32>
    %576 = arith.mulf %569, %575 : vector<8x64xf32>
    %577 = vector.broadcast %5 : vector<1x64xf32> to vector<8x64xf32>
    %578 = arith.mulf %576, %577 : vector<8x64xf32>
    %cst_145 = arith.constant dense<0.000000e+00> : vector<8xf32>
    %579 = vector.multi_reduction <add>, %578, %cst_145 [1] : vector<8x64xf32> to vector<8xf32>
    %580 = vector.shape_cast %579 : vector<8xf32> to vector<8x1xf32>
    %581 = vector.broadcast %6 : vector<1x1xf32> to vector<8x1xf32>
    %582 = arith.addf %580, %581 : vector<8x1xf32>
    %583 = tpu.concatenate %552, %576 in 1 : vector<8x64xf32>, vector<8x64xf32> -> vector<8x128xf32>
    %584 = arith.truncf %583 : vector<8x128xf32> to vector<8x128xbf16>
    %c0_146 = arith.constant 0 : index
    %c0_147 = arith.constant 0 : index
    %585 = vector.load %arg6[%c0_146, %c0_147] : memref<128x256xbf16, #tpu.memory_space<vmem>>, vector<128x256xbf16>
    %cst_148 = arith.constant dense<0.000000e+00> : vector<8x256xf32>
    %586 = tpu.matmul %584, %585, %cst_148 {dimension_numbers = #tpu.dot_dimension_numbers<[1], [0], [0], [1], [0, 0, 1, 1], [], []>} : vector<8x128xbf16>, vector<128x256xbf16>, vector<8x256xf32> -> vector<8x256xf32>
    %587 = vector.broadcast %4 : vector<1x256xf32> to vector<8x256xf32>
    %588 = arith.addf %586, %587 : vector<8x256xf32>
    %589 = vector.extract_strided_slice %588 {offsets = [0, 0], sizes = [8, 192], strides = [1, 1]} : vector<8x256xf32> to vector<8x192xf32>
    %cst_149 = arith.constant 5.000000e-01 : f32
    %590 = vector.broadcast %cst_149 : f32 to vector<8x192xf32>
    %591 = arith.mulf %590, %589 : vector<8x192xf32>
    %592 = math.tanh %591 : vector<8x192xf32>
    %cst_150 = arith.constant 5.000000e-01 : f32
    %593 = vector.broadcast %cst_150 : f32 to vector<8x192xf32>
    %594 = arith.mulf %593, %592 : vector<8x192xf32>
    %cst_151 = arith.constant 5.000000e-01 : f32
    %595 = vector.broadcast %cst_151 : f32 to vector<8x192xf32>
    %596 = arith.addf %594, %595 : vector<8x192xf32>
    %597 = vector.extract_strided_slice %596 {offsets = [0, 0], sizes = [8, 64], strides = [1, 1]} : vector<8x192xf32> to vector<8x64xf32>
    %598 = vector.extract_strided_slice %596 {offsets = [0, 64], sizes = [8, 64], strides = [1, 1]} : vector<8x192xf32> to vector<8x64xf32>
    %599 = vector.extract_strided_slice %596 {offsets = [0, 128], sizes = [8, 64], strides = [1, 1]} : vector<8x192xf32> to vector<8x64xf32>
    %600 = vector.extract_strided_slice %588 {offsets = [0, 192], sizes = [8, 64], strides = [1, 1]} : vector<8x256xf32> to vector<8x64xf32>
    %601 = math.tanh %600 : vector<8x64xf32>
    %602 = arith.mulf %598, %550 : vector<8x64xf32>
    %603 = arith.mulf %597, %601 : vector<8x64xf32>
    %604 = arith.addf %602, %603 : vector<8x64xf32>
    %605 = math.tanh %604 : vector<8x64xf32>
    %606 = arith.mulf %599, %605 : vector<8x64xf32>
    %607 = tpu.concatenate %606, %576 in 1 : vector<8x64xf32>, vector<8x64xf32> -> vector<8x128xf32>
    %608 = arith.truncf %607 : vector<8x128xf32> to vector<8x128xbf16>
    %c0_152 = arith.constant 0 : index
    %c0_153 = arith.constant 0 : index
    %609 = vector.load %arg4[%c0_152, %c0_153] : memref<128x256xbf16, #tpu.memory_space<vmem>>, vector<128x256xbf16>
    %cst_154 = arith.constant dense<0.000000e+00> : vector<8x256xf32>
    %610 = tpu.matmul %608, %609, %cst_154 {dimension_numbers = #tpu.dot_dimension_numbers<[1], [0], [0], [1], [0, 0, 1, 1], [], []>} : vector<8x128xbf16>, vector<128x256xbf16>, vector<8x256xf32> -> vector<8x256xf32>
    %611 = vector.broadcast %3 : vector<1x256xf32> to vector<8x256xf32>
    %612 = arith.addf %610, %611 : vector<8x256xf32>
    %613 = vector.extract_strided_slice %612 {offsets = [0, 0], sizes = [8, 192], strides = [1, 1]} : vector<8x256xf32> to vector<8x192xf32>
    %cst_155 = arith.constant 5.000000e-01 : f32
    %614 = vector.broadcast %cst_155 : f32 to vector<8x192xf32>
    %615 = arith.mulf %614, %613 : vector<8x192xf32>
    %616 = math.tanh %615 : vector<8x192xf32>
    %cst_156 = arith.constant 5.000000e-01 : f32
    %617 = vector.broadcast %cst_156 : f32 to vector<8x192xf32>
    %618 = arith.mulf %617, %616 : vector<8x192xf32>
    %cst_157 = arith.constant 5.000000e-01 : f32
    %619 = vector.broadcast %cst_157 : f32 to vector<8x192xf32>
    %620 = arith.addf %618, %619 : vector<8x192xf32>
    %621 = vector.extract_strided_slice %620 {offsets = [0, 0], sizes = [8, 64], strides = [1, 1]} : vector<8x192xf32> to vector<8x64xf32>
    %622 = vector.extract_strided_slice %620 {offsets = [0, 64], sizes = [8, 64], strides = [1, 1]} : vector<8x192xf32> to vector<8x64xf32>
    %623 = vector.extract_strided_slice %620 {offsets = [0, 128], sizes = [8, 64], strides = [1, 1]} : vector<8x192xf32> to vector<8x64xf32>
    %624 = vector.extract_strided_slice %612 {offsets = [0, 192], sizes = [8, 64], strides = [1, 1]} : vector<8x256xf32> to vector<8x64xf32>
    %625 = math.tanh %624 : vector<8x64xf32>
    %626 = arith.mulf %622, %574 : vector<8x64xf32>
    %627 = arith.mulf %621, %625 : vector<8x64xf32>
    %628 = arith.addf %626, %627 : vector<8x64xf32>
    %629 = math.tanh %628 : vector<8x64xf32>
    %630 = arith.mulf %623, %629 : vector<8x64xf32>
    %631 = vector.broadcast %5 : vector<1x64xf32> to vector<8x64xf32>
    %632 = arith.mulf %630, %631 : vector<8x64xf32>
    %cst_158 = arith.constant dense<0.000000e+00> : vector<8xf32>
    %633 = vector.multi_reduction <add>, %632, %cst_158 [1] : vector<8x64xf32> to vector<8xf32>
    %634 = vector.shape_cast %633 : vector<8xf32> to vector<8x1xf32>
    %635 = vector.broadcast %6 : vector<1x1xf32> to vector<8x1xf32>
    %636 = arith.addf %634, %635 : vector<8x1xf32>
    %637 = tpu.concatenate %606, %630 in 1 : vector<8x64xf32>, vector<8x64xf32> -> vector<8x128xf32>
    %638 = arith.truncf %637 : vector<8x128xf32> to vector<8x128xbf16>
    %c0_159 = arith.constant 0 : index
    %c0_160 = arith.constant 0 : index
    %639 = vector.load %arg6[%c0_159, %c0_160] : memref<128x256xbf16, #tpu.memory_space<vmem>>, vector<128x256xbf16>
    %cst_161 = arith.constant dense<0.000000e+00> : vector<8x256xf32>
    %640 = tpu.matmul %638, %639, %cst_161 {dimension_numbers = #tpu.dot_dimension_numbers<[1], [0], [0], [1], [0, 0, 1, 1], [], []>} : vector<8x128xbf16>, vector<128x256xbf16>, vector<8x256xf32> -> vector<8x256xf32>
    %641 = vector.broadcast %4 : vector<1x256xf32> to vector<8x256xf32>
    %642 = arith.addf %640, %641 : vector<8x256xf32>
    %643 = vector.extract_strided_slice %642 {offsets = [0, 0], sizes = [8, 192], strides = [1, 1]} : vector<8x256xf32> to vector<8x192xf32>
    %cst_162 = arith.constant 5.000000e-01 : f32
    %644 = vector.broadcast %cst_162 : f32 to vector<8x192xf32>
    %645 = arith.mulf %644, %643 : vector<8x192xf32>
    %646 = math.tanh %645 : vector<8x192xf32>
    %cst_163 = arith.constant 5.000000e-01 : f32
    %647 = vector.broadcast %cst_163 : f32 to vector<8x192xf32>
    %648 = arith.mulf %647, %646 : vector<8x192xf32>
    %cst_164 = arith.constant 5.000000e-01 : f32
    %649 = vector.broadcast %cst_164 : f32 to vector<8x192xf32>
    %650 = arith.addf %648, %649 : vector<8x192xf32>
    %651 = vector.extract_strided_slice %650 {offsets = [0, 0], sizes = [8, 64], strides = [1, 1]} : vector<8x192xf32> to vector<8x64xf32>
    %652 = vector.extract_strided_slice %650 {offsets = [0, 64], sizes = [8, 64], strides = [1, 1]} : vector<8x192xf32> to vector<8x64xf32>
    %653 = vector.extract_strided_slice %650 {offsets = [0, 128], sizes = [8, 64], strides = [1, 1]} : vector<8x192xf32> to vector<8x64xf32>
    %654 = vector.extract_strided_slice %642 {offsets = [0, 192], sizes = [8, 64], strides = [1, 1]} : vector<8x256xf32> to vector<8x64xf32>
    %655 = math.tanh %654 : vector<8x64xf32>
    %656 = arith.mulf %652, %604 : vector<8x64xf32>
    %657 = arith.mulf %651, %655 : vector<8x64xf32>
    %658 = arith.addf %656, %657 : vector<8x64xf32>
    %659 = math.tanh %658 : vector<8x64xf32>
    %660 = arith.mulf %653, %659 : vector<8x64xf32>
    %661 = tpu.concatenate %660, %630 in 1 : vector<8x64xf32>, vector<8x64xf32> -> vector<8x128xf32>
    %662 = arith.truncf %661 : vector<8x128xf32> to vector<8x128xbf16>
    %c0_165 = arith.constant 0 : index
    %c0_166 = arith.constant 0 : index
    %663 = vector.load %arg4[%c0_165, %c0_166] : memref<128x256xbf16, #tpu.memory_space<vmem>>, vector<128x256xbf16>
    %cst_167 = arith.constant dense<0.000000e+00> : vector<8x256xf32>
    %664 = tpu.matmul %662, %663, %cst_167 {dimension_numbers = #tpu.dot_dimension_numbers<[1], [0], [0], [1], [0, 0, 1, 1], [], []>} : vector<8x128xbf16>, vector<128x256xbf16>, vector<8x256xf32> -> vector<8x256xf32>
    %665 = vector.broadcast %3 : vector<1x256xf32> to vector<8x256xf32>
    %666 = arith.addf %664, %665 : vector<8x256xf32>
    %667 = vector.extract_strided_slice %666 {offsets = [0, 0], sizes = [8, 192], strides = [1, 1]} : vector<8x256xf32> to vector<8x192xf32>
    %cst_168 = arith.constant 5.000000e-01 : f32
    %668 = vector.broadcast %cst_168 : f32 to vector<8x192xf32>
    %669 = arith.mulf %668, %667 : vector<8x192xf32>
    %670 = math.tanh %669 : vector<8x192xf32>
    %cst_169 = arith.constant 5.000000e-01 : f32
    %671 = vector.broadcast %cst_169 : f32 to vector<8x192xf32>
    %672 = arith.mulf %671, %670 : vector<8x192xf32>
    %cst_170 = arith.constant 5.000000e-01 : f32
    %673 = vector.broadcast %cst_170 : f32 to vector<8x192xf32>
    %674 = arith.addf %672, %673 : vector<8x192xf32>
    %675 = vector.extract_strided_slice %674 {offsets = [0, 0], sizes = [8, 64], strides = [1, 1]} : vector<8x192xf32> to vector<8x64xf32>
    %676 = vector.extract_strided_slice %674 {offsets = [0, 64], sizes = [8, 64], strides = [1, 1]} : vector<8x192xf32> to vector<8x64xf32>
    %677 = vector.extract_strided_slice %674 {offsets = [0, 128], sizes = [8, 64], strides = [1, 1]} : vector<8x192xf32> to vector<8x64xf32>
    %678 = vector.extract_strided_slice %666 {offsets = [0, 192], sizes = [8, 64], strides = [1, 1]} : vector<8x256xf32> to vector<8x64xf32>
    %679 = math.tanh %678 : vector<8x64xf32>
    %680 = arith.mulf %676, %628 : vector<8x64xf32>
    %681 = arith.mulf %675, %679 : vector<8x64xf32>
    %682 = arith.addf %680, %681 : vector<8x64xf32>
    %683 = math.tanh %682 : vector<8x64xf32>
    %684 = arith.mulf %677, %683 : vector<8x64xf32>
    %685 = vector.broadcast %5 : vector<1x64xf32> to vector<8x64xf32>
    %686 = arith.mulf %684, %685 : vector<8x64xf32>
    %cst_171 = arith.constant dense<0.000000e+00> : vector<8xf32>
    %687 = vector.multi_reduction <add>, %686, %cst_171 [1] : vector<8x64xf32> to vector<8xf32>
    %688 = vector.shape_cast %687 : vector<8xf32> to vector<8x1xf32>
    %689 = vector.broadcast %6 : vector<1x1xf32> to vector<8x1xf32>
    %690 = arith.addf %688, %689 : vector<8x1xf32>
    %691 = tpu.concatenate %68, %126, %184, %242, %300, %358, %416, %474, %528, %582, %636, %690 in 1 : vector<8x1xf32>, vector<8x1xf32>, vector<8x1xf32>, vector<8x1xf32>, vector<8x1xf32>, vector<8x1xf32>, vector<8x1xf32>, vector<8x1xf32>, vector<8x1xf32>, vector<8x1xf32>, vector<8x1xf32>, vector<8x1xf32> -> vector<8x12xf32>
    %c0_172 = arith.constant 0 : index
    %c0_173 = arith.constant 0 : index
    %692 = vector.load %arg10[%c0_172, %c0_173] : memref<8x12xf32, #tpu.memory_space<vmem>>, vector<8x12xf32>
    tpu.vector_store %arg10[%c0_172, %c0_173], %691 {strides = array<i32>} : memref<8x12xf32, #tpu.memory_space<vmem>>, vector<8x12xf32>,
    return
  }
}

</mosaic_0001>

<llo_original>
// kernel: sequence_forward.1
$region0: #{sequence_forward.1}
  #allocation0 [shape = 'u32[]', space=smem, size = 0x4, offset = 0x4, fixed_abs, tag = 'smem constant byte address 0x4 - core index']
  #allocation1 [shape = 'u32[144,128]{1,0:T(1,128)}', space=vmem, size = 0x12000, scoped, tag = 'internal scratch']
  #allocation2 [shape = 'f32[1,1]{1,0:T(1,128)S(1)}', space=vmem, size = 0x200, scoped, tag = 'scoped memory for sequence_forward.1']
  %s0 = inlined_call_operand.vmem [shape: f32[8,8], index: 0, kind: input, shape index: {}]
  %s1 = inlined_call_operand.vmem [shape: f32[1,256], index: 1, kind: input, shape index: {}]
  %s2 = inlined_call_operand.vmem [shape: bf16[64,256], index: 2, kind: input, shape index: {}]
  %s3 = inlined_call_operand.vmem [shape: f32[1,256], index: 3, kind: input, shape index: {}]
  %s4 = inlined_call_operand.vmem [shape: bf16[128,256], index: 4, kind: input, shape index: {}]
  %s5 = inlined_call_operand.vmem [shape: f32[1,256], index: 5, kind: input, shape index: {}]
  %s6 = inlined_call_operand.vmem [shape: bf16[128,256], index: 6, kind: input, shape index: {}]
  %s7 = inlined_call_operand.vmem [shape: f32[1,256], index: 7, kind: input, shape index: {}]
  %s8 = inlined_call_operand.vmem [shape: f32[1,64], index: 8, kind: input, shape index: {}]
  %s9 = inlined_call_operand.<no memory space> [shape: f32[1,1], index: 9, kind: input, shape index: {}]
  %s10 = inlined_call_operand.vmem [shape: f32[8,12], index: 10, kind: output, shape index: {}]
  %s11 = sld [smem:[#allocation0]]
  $region50: #{sequence_forward.1} parent=0
    _
  %s13 = ssub.s32 1, %s11
  %s14 = scalar_select 0, %s13, %s11
  %v15 = vstv %s9
  %16 = vst [vmem:[#allocation2] sm:$0x1] %v15
  // Predicated region
  $region2: #{sequence_forward.1} parent=0 // pred_check
    _
  $region3: #{sequence_forward.1} parent=0 // pred_check_branch
    %18 = sbr.rel (0) target = $region5
  $region4: #{sequence_forward.1} parent=0 // pred_region
    _
  $region5: #{sequence_forward.1} parent=0 // pred_fallthru
    _
  // Predicated region
  $region6: #{sequence_forward.1} parent=0 // pred_check
    _
  $region7: #{sequence_forward.1} parent=0 // pred_check_branch
    %20 = sbr.rel (0) target = $region9
  $region8: #{sequence_forward.1} parent=0 // pred_region
    _
  $region9: #{sequence_forward.1} parent=0 // pred_fallthru
    _
  // Predicated region
  $region10: #{sequence_forward.1} parent=0 // pred_check
    _
  $region11: #{sequence_forward.1} parent=0 // pred_check_branch
    %22 = sbr.rel (0) target = $region13
  $region12: #{sequence_forward.1} parent=0 // pred_region
    _
  $region13: #{sequence_forward.1} parent=0 // pred_fallthru
    _
  // Predicated region
  $region14: #{sequence_forward.1} parent=0 // pred_check
    _
  $region15: #{sequence_forward.1} parent=0 // pred_check_branch
    %24 = sbr.rel (0) target = $region17
  $region16: #{sequence_forward.1} parent=0 // pred_region
    _
  $region17: #{sequence_forward.1} parent=0 // pred_fallthru
    _
  // Predicated region
  $region18: #{sequence_forward.1} parent=0 // pred_check
    _
  $region19: #{sequence_forward.1} parent=0 // pred_check_branch
    %26 = sbr.rel (0) target = $region21
  $region20: #{sequence_forward.1} parent=0 // pred_region
    _
  $region21: #{sequence_forward.1} parent=0 // pred_fallthru
    _
  // Predicated region
  $region22: #{sequence_forward.1} parent=0 // pred_check
    _
  $region23: #{sequence_forward.1} parent=0 // pred_check_branch
    %28 = sbr.rel (0) target = $region25
  $region24: #{sequence_forward.1} parent=0 // pred_region
    _
  $region25: #{sequence_forward.1} parent=0 // pred_fallthru
    _
  // Predicated region
  $region26: #{sequence_forward.1} parent=0 // pred_check
    _
  $region27: #{sequence_forward.1} parent=0 // pred_check_branch
    %30 = sbr.rel (0) target = $region29
  $region28: #{sequence_forward.1} parent=0 // pred_region
    _
  $region29: #{sequence_forward.1} parent=0 // pred_fallthru
    _
  // Predicated region
  $region30: #{sequence_forward.1} parent=0 // pred_check
    _
  $region31: #{sequence_forward.1} parent=0 // pred_check_branch
    %32 = sbr.rel (0) target = $region33
  $region32: #{sequence_forward.1} parent=0 // pred_region
    _
  $region33: #{sequence_forward.1} parent=0 // pred_fallthru
    _
  // Predicated region
  $region34: #{sequence_forward.1} parent=0 // pred_check
    _
  $region35: #{sequence_forward.1} parent=0 // pred_check_branch
    %34 = sbr.rel (0) target = $region37
  $region36: #{sequence_forward.1} parent=0 // pred_region
    _
  $region37: #{sequence_forward.1} parent=0 // pred_fallthru
    _
  // Predicated region
  $region38: #{sequence_forward.1} parent=0 // pred_check
    _
  $region39: #{sequence_forward.1} parent=0 // pred_check_branch
    %36 = sbr.rel (0) target = $region41
  $region40: #{sequence_forward.1} parent=0 // pred_region
    _
  $region41: #{sequence_forward.1} parent=0 // pred_fallthru
    _
  %v38 = vld [vmem:[%s0] sm:$0xff]
  %v39 = vld [vmem:[%s1] sm:$0x3]
  %v40 = vld [vmem:[%s3] sm:$0x3]
  %v41 = vld [vmem:[%s5] sm:$0x3]
  %v42 = vld [vmem:[%s7] sm:$0x3]
  %v43 = vld [vmem:[%s8] sm:$0x1]
  %v44 = vld [vmem:[#allocation2] sm:$0x1]
  %v45 = vld [vmem:[%s2] sm:$0xff]
  %v46 = vld [vmem:[%s2 + $0x8] sm:$0xff]
  %v47 = vld [vmem:[%s2 + $0x10] sm:$0xff]
  %v48 = vld [vmem:[%s2 + $0x18] sm:$0xff]
  %v49 = vld [vmem:[%s2 + $0x20] sm:$0xff]
  %v50 = vld [vmem:[%s2 + $0x28] sm:$0xff]
  %v51 = vld [vmem:[%s2 + $0x30] sm:$0xff]
  %v52 = vld [vmem:[%s2 + $0x38] sm:$0xff]
  %54 = vset.pattern.permute.xlu0 0
  %55 = vperm.xlu0 %54, %v38
  %v56 = vpop.permute.xlu0 %55
  %v59 = vlaneseq
  %v60 = vshrl.u32 %v59, 7
  %v61 = vsub.s32 0, %v60
  %v62 = vrot.slane %v39, %v61
  %v63 = vlaneseq
  %v64 = vshrl.u32 %v63, 7
  %v65 = vsub.s32 1, %v64
  %v66 = vrot.slane %v39, %v65
  %v69 = vmul.f32 %v56, %v62
  %v70 = vmul.f32 %v56, %v66
  %v79 = vunpack.c.l.b16 %v45
  %v80 = vunpack.c.h.b16 %v45
  %v81 = vunpack.c.l.b16 %v46
  %v82 = vunpack.c.h.b16 %v46
  %v83 = vunpack.c.l.b16 %v47
  %v84 = vunpack.c.h.b16 %v47
  %v85 = vunpack.c.l.b16 %v48
  %v86 = vunpack.c.h.b16 %v48
  %v87 = vunpack.c.l.b16 %v49
  %v88 = vunpack.c.h.b16 %v49
  %v89 = vunpack.c.l.b16 %v50
  %v90 = vunpack.c.h.b16 %v50
  %v91 = vunpack.c.l.b16 %v51
  %v92 = vunpack.c.h.b16 %v51
  %v93 = vunpack.c.l.b16 %v52
  %v94 = vunpack.c.h.b16 %v52
  %v95 = vpack.c.b16 %v81, %v79
  %v96 = vpack.c.b16 %v82, %v80
  %v97 = vpack.c.b16 %v85, %v83
  %v98 = vpack.c.b16 %v86, %v84
  %v99 = vpack.c.b16 %v89, %v87
  %v100 = vpack.c.b16 %v90, %v88
  %v101 = vpack.c.b16 %v93, %v91
  %v102 = vpack.c.b16 %v94, %v92
  %vm111 = vcmask 523264
  %v113 = vsel %vm111, 0, 0
  %115 = vmatprep.subr.bf16.mxu0 %v96
  %116 = vmatpush1.bf16.msra.mxu0 %v95
  %117 = vmatprep.subr.bf16.mxu0 %v98
  %118 = vmatpush1.bf16.msra.mxu0 %v97
  %119 = vmatprep.subr.bf16.mxu0 %v100
  %120 = vmatpush1.bf16.msra.mxu0 %v99
  %121 = vmatprep.subr.bf16.mxu0 %v102
  %122 = vmatpush1.bf16.msra.mxu0 %v101
  %123 = vmatprep.subr.bf16.mxu0 0
  %124 = vmatpush1.bf16.msra.mxu0 0
  %125 = vmatprep.subr.bf16.mxu0 0
  %126 = vmatpush1.bf16.msra.mxu0 0
  %127 = vmatprep.subr.bf16.mxu0 0
  %128 = vmatpush1.bf16.msra.mxu0 0
  %129 = vmatprep.subr.bf16.mxu0 0
  %130 = vmatpush1.bf16.msra.mxu0 0
  %131 = vmatprep.subr.bf16.mxu0 0
  %132 = vmatpush1.bf16.msra.mxu0 0
  %133 = vmatprep.subr.bf16.mxu0 0
  %134 = vmatpush1.bf16.msra.mxu0 0
  %135 = vmatprep.subr.bf16.mxu0 0
  %136 = vmatpush1.bf16.msra.mxu0 0
  %137 = vmatprep.subr.bf16.mxu0 0
  %138 = vmatpush1.bf16.msra.mxu0 0
  %139 = vmatprep.subr.bf16.mxu0 0
  %140 = vmatpush1.bf16.msra.mxu0 0
  %141 = vmatprep.subr.bf16.mxu0 0
  %142 = vmatpush1.bf16.msra.mxu0 0
  %143 = vmatprep.subr.bf16.mxu0 0
  %144 = vmatpush1.bf16.msra.mxu0 0
  %145 = vmatprep.subr.bf16.mxu0 0
  %146 = vmatpush1.bf16.msra.mxu0 0
  %147 = vmatprep.mubr.bf16.mxu0 0
  %148 = vmatmul.mubr.bf16.gmra.mrb[0].mxu0 %v113
  %v149 = vpop.f32.mrb[0].mxu0
  %v150 = vadd.f32 %v69, %v149
  %v151 = vpop.f32.mrb[0].mxu0
  %v152 = vadd.f32 %v70, %v151
  %v153 = vpop.f32.mrb[0].mxu0
  %v154 = vpop.f32.mrb[0].mxu0
  %155 = vdwg.mxu0
  %v157 = vlaneseq
  %v158 = vshrl.u32 %v157, 7
  %v159 = vsub.s32 0, %v158
  %v160 = vrot.slane %v40, %v159
  %v161 = vlaneseq
  %v162 = vshrl.u32 %v161, 7
  %v163 = vsub.s32 1, %v162
  %v164 = vrot.slane %v40, %v163
  %v167 = vadd.f32 %v150, %v160
  %v168 = vadd.f32 %v152, %v164
  %v169 = vmul.f32 %v167, 0.5
  %v170 = vmul.f32 %v168, 0.5
  %v171 = vtanh.pop %v169
  %v172 = vtanh.pop %v170
  %v173 = vmul.f32 %v171, 0.5
  %v174 = vmul.f32 %v172, 0.5
  %v175 = vadd.f32 %v173, 0.5
  %v176 = vadd.f32 %v174, 0.5
  %v177 = vtanh.pop %v168
  %v178 = vmul.f32 %v175, 0.0
  %180 = vrot.lane.b32.xlu0 %v177, 64
  %v181 = vpop.permute.xlu0 %180
  %v183 = vmul.f32 %v175, %v181
  %185 = vrot.lane.b32.xlu0 %v183, 64
  %v186 = vpop.permute.xlu0 %185
  %v188 = vadd.f32 %v178, %v186
  %v189 = vtanh.pop %v188
  %191 = vrot.lane.b32.xlu0 %v189, 64
  %v192 = vpop.permute.xlu0 %191
  %v194 = vmul.f32 %v176, %v192
  %v195 = vsel %vm111, %v194, 0.0
  %v196 = vpack.c.bf16 %v195, %v195
  %v197 = vld [vmem:[%s4] sm:$0xff]
  %v198 = vld [vmem:[%s4 + $0x8] sm:$0xff]
  %v199 = vld [vmem:[%s4 + $0x10] sm:$0xff]
  %v200 = vld [vmem:[%s4 + $0x18] sm:$0xff]
  %v201 = vld [vmem:[%s4 + $0x20] sm:$0xff]
  %v202 = vld [vmem:[%s4 + $0x28] sm:$0xff]
  %v203 = vld [vmem:[%s4 + $0x30] sm:$0xff]
  %v204 = vld [vmem:[%s4 + $0x38] sm:$0xff]
  %v205 = vld [vmem:[%s4 + $0x40] sm:$0xff]
  %v206 = vld [vmem:[%s4 + $0x48] sm:$0xff]
  %v207 = vld [vmem:[%s4 + $0x50] sm:$0xff]
  %v208 = vld [vmem:[%s4 + $0x58] sm:$0xff]
  %v209 = vld [vmem:[%s4 + $0x60] sm:$0xff]
  %v210 = vld [vmem:[%s4 + $0x68] sm:$0xff]
  %v211 = vld [vmem:[%s4 + $0x70] sm:$0xff]
  %v212 = vld [vmem:[%s4 + $0x78] sm:$0xff]
  %v214 = vlaneseq
  %v215 = vshrl.u32 %v214, 7
  %v216 = vsub.s32 0, %v215
  %v217 = vrot.slane %v41, %v216
  %v218 = vlaneseq
  %v219 = vshrl.u32 %v218, 7
  %v220 = vsub.s32 1, %v219
  %v221 = vrot.slane %v41, %v220
  %v240 = vunpack.c.l.b16 %v197
  %v241 = vunpack.c.h.b16 %v197
  %v242 = vunpack.c.l.b16 %v198
  %v243 = vunpack.c.h.b16 %v198
  %v244 = vunpack.c.l.b16 %v199
  %v245 = vunpack.c.h.b16 %v199
  %v246 = vunpack.c.l.b16 %v200
  %v247 = vunpack.c.h.b16 %v200
  %v248 = vunpack.c.l.b16 %v201
  %v249 = vunpack.c.h.b16 %v201
  %v250 = vunpack.c.l.b16 %v202
  %v251 = vunpack.c.h.b16 %v202
  %v252 = vunpack.c.l.b16 %v203
  %v253 = vunpack.c.h.b16 %v203
  %v254 = vunpack.c.l.b16 %v204
  %v255 = vunpack.c.h.b16 %v204
  %v256 = vunpack.c.l.b16 %v205
  %v257 = vunpack.c.h.b16 %v205
  %v258 = vunpack.c.l.b16 %v206
  %v259 = vunpack.c.h.b16 %v206
  %v260 = vunpack.c.l.b16 %v207
  %v261 = vunpack.c.h.b16 %v207
  %v262 = vunpack.c.l.b16 %v208
  %v263 = vunpack.c.h.b16 %v208
  %v264 = vunpack.c.l.b16 %v209
  %v265 = vunpack.c.h.b16 %v209
  %v266 = vunpack.c.l.b16 %v210
  %v267 = vunpack.c.h.b16 %v210
  %v268 = vunpack.c.l.b16 %v211
  %v269 = vunpack.c.h.b16 %v211
  %v270 = vunpack.c.l.b16 %v212
  %v271 = vunpack.c.h.b16 %v212
  %v272 = vpack.c.b16 %v242, %v240
  %v273 = vpack.c.b16 %v243, %v241
  %v274 = vpack.c.b16 %v246, %v244
  %v275 = vpack.c.b16 %v247, %v245
  %v276 = vpack.c.b16 %v250, %v248
  %v277 = vpack.c.b16 %v251, %v249
  %v278 = vpack.c.b16 %v254, %v252
  %v279 = vpack.c.b16 %v255, %v253
  %v280 = vpack.c.b16 %v258, %v256
  %v281 = vpack.c.b16 %v259, %v257
  %v282 = vpack.c.b16 %v262, %v260
  %v283 = vpack.c.b16 %v263, %v261
  %v284 = vpack.c.b16 %v266, %v264
  %v285 = vpack.c.b16 %v267, %v265
  %v286 = vpack.c.b16 %v270, %v268
  %v287 = vpack.c.b16 %v271, %v269
  %304 = vmatprep.subr.bf16.mxu0 %v273
  %305 = vmatpush1.bf16.msra.mxu0 %v272
  %306 = vmatprep.subr.bf16.mxu0 %v275
  %307 = vmatpush1.bf16.msra.mxu0 %v274
  %308 = vmatprep.subr.bf16.mxu0 %v277
  %309 = vmatpush1.bf16.msra.mxu0 %v276
  %310 = vmatprep.subr.bf16.mxu0 %v279
  %311 = vmatpush1.bf16.msra.mxu0 %v278
  %312 = vmatprep.subr.bf16.mxu0 %v281
  %313 = vmatpush1.bf16.msra.mxu0 %v280
  %314 = vmatprep.subr.bf16.mxu0 %v283
  %315 = vmatpush1.bf16.msra.mxu0 %v282
  %316 = vmatprep.subr.bf16.mxu0 %v285
  %317 = vmatpush1.bf16.msra.mxu0 %v284
  %318 = vmatprep.subr.bf16.mxu0 %v287
  %319 = vmatpush1.bf16.msra.mxu0 %v286
  %320 = vmatprep.subr.bf16.mxu0 0
  %321 = vmatpush1.bf16.msra.mxu0 0
  %322 = vmatprep.subr.bf16.mxu0 0
  %323 = vmatpush1.bf16.msra.mxu0 0
  %324 = vmatprep.subr.bf16.mxu0 0
  %325 = vmatpush1.bf16.msra.mxu0 0
  %326 = vmatprep.subr.bf16.mxu0 0
  %327 = vmatpush1.bf16.msra.mxu0 0
  %328 = vmatprep.subr.bf16.mxu0 0
  %329 = vmatpush1.bf16.msra.mxu0 0
  %330 = vmatprep.subr.bf16.mxu0 0
  %331 = vmatpush1.bf16.msra.mxu0 0
  %332 = vmatprep.subr.bf16.mxu0 0
  %333 = vmatpush1.bf16.msra.mxu0 0
  %334 = vmatprep.subr.bf16.mxu0 0
  %335 = vmatpush1.bf16.msra.mxu0 0
  %336 = vmatprep.mubr.bf16.mxu0 0
  %337 = vmatmul.mubr.bf16.gmra.mrb[0].mxu0 %v196
  %v338 = vpop.f32.mrb[0].mxu0
  %v339 = vadd.f32 %v217, %v338
  %v340 = vpop.f32.mrb[0].mxu0
  %v341 = vadd.f32 %v221, %v340
  %v342 = vpop.f32.mrb[0].mxu0
  %v343 = vpop.f32.mrb[0].mxu0
  %344 = vdwg.mxu0
  %v345 = vmul.f32 %v339, 0.5
  %v346 = vmul.f32 %v341, 0.5
  %v347 = vtanh.pop %v345
  %v348 = vtanh.pop %v346
  %v349 = vmul.f32 %v347, 0.5
  %v350 = vmul.f32 %v348, 0.5
  %v351 = vadd.f32 %v349, 0.5
  %v352 = vadd.f32 %v350, 0.5
  %v353 = vtanh.pop %v341
  %v354 = vmul.f32 %v351, 0.0
  %356 = vrot.lane.b32.xlu0 %v353, 64
  %v357 = vpop.permute.xlu0 %356
  %v359 = vmul.f32 %v351, %v357
  %361 = vrot.lane.b32.xlu0 %v359, 64
  %v362 = vpop.permute.xlu0 %361
  %v364 = vadd.f32 %v354, %v362
  %v365 = vtanh.pop %v364
  %367 = vrot.lane.b32.xlu0 %v365, 64
  %v368 = vpop.permute.xlu0 %367
  %v370 = vmul.f32 %v352, %v368
  %v372 = vlaneseq
  %v373 = vshrl.u32 %v372, 7
  %v374 = vsub.s32 0, %v373
  %v375 = vrot.slane %v43, %v374
  %v377 = vmul.f32 %v370, %v375
  %v378 = vsel %vm111, %v377, 0.0
  %379 = vadd.xlane.f32.xlu0 %v378
  %v380 = vpop.xlane.xlu0 %379
  %v382 = vlaneseq
  %v383 = vshrl.u32 %v382, 7
  %v384 = vsub.s32 0, %v383
  %v385 = vrot.slane %v44, %v384
  %v387 = vadd.f32 %v380, %v385
  %v388 = vpack.c.bf16 %v194, %v194
  %389 = vset.pattern.permute.xlu0 1
  %390 = vperm.xlu0 %389, %v38
  %v391 = vpop.permute.xlu0 %390
  %v393 = vmul.f32 %v391, %v62
  %v394 = vmul.f32 %v391, %v66
  %v396 = vsel %vm111, %v388, 0
  %398 = vmatprep.subr.bf16.mxu0 %v96
  %399 = vmatpush1.bf16.msra.mxu0 %v95
  %400 = vmatprep.subr.bf16.mxu0 %v98
  %401 = vmatpush1.bf16.msra.mxu0 %v97
  %402 = vmatprep.subr.bf16.mxu0 %v100
  %403 = vmatpush1.bf16.msra.mxu0 %v99
  %404 = vmatprep.subr.bf16.mxu0 %v102
  %405 = vmatpush1.bf16.msra.mxu0 %v101
  %406 = vmatprep.subr.bf16.mxu0 0
  %407 = vmatpush1.bf16.msra.mxu0 0
  %408 = vmatprep.subr.bf16.mxu0 0
  %409 = vmatpush1.bf16.msra.mxu0 0
  %410 = vmatprep.subr.bf16.mxu0 0
  %411 = vmatpush1.bf16.msra.mxu0 0
  %412 = vmatprep.subr.bf16.mxu0 0
  %413 = vmatpush1.bf16.msra.mxu0 0
  %414 = vmatprep.subr.bf16.mxu0 0
  %415 = vmatpush1.bf16.msra.mxu0 0
  %416 = vmatprep.subr.bf16.mxu0 0
  %417 = vmatpush1.bf16.msra.mxu0 0
  %418 = vmatprep.subr.bf16.mxu0 0
  %419 = vmatpush1.bf16.msra.mxu0 0
  %420 = vmatprep.subr.bf16.mxu0 0
  %421 = vmatpush1.bf16.msra.mxu0 0
  %422 = vmatprep.subr.bf16.mxu0 0
  %423 = vmatpush1.bf16.msra.mxu0 0
  %424 = vmatprep.subr.bf16.mxu0 0
  %425 = vmatpush1.bf16.msra.mxu0 0
  %426 = vmatprep.subr.bf16.mxu0 0
  %427 = vmatpush1.bf16.msra.mxu0 0
  %428 = vmatprep.subr.bf16.mxu0 0
  %429 = vmatpush1.bf16.msra.mxu0 0
  %430 = vmatprep.mubr.bf16.mxu0 0
  %431 = vmatmul.mubr.bf16.gmra.mrb[0].mxu0 %v396
  %v432 = vpop.f32.mrb[0].mxu0
  %v433 = vadd.f32 %v393, %v432
  %v434 = vpop.f32.mrb[0].mxu0
  %v435 = vadd.f32 %v394, %v434
  %v436 = vpop.f32.mrb[0].mxu0
  %v437 = vpop.f32.mrb[0].mxu0
  %438 = vdwg.mxu0
  %v439 = vadd.f32 %v433, %v160
  %v440 = vadd.f32 %v435, %v164
  %v441 = vmul.f32 %v439, 0.5
  %v442 = vmul.f32 %v440, 0.5
  %v443 = vtanh.pop %v441
  %v444 = vtanh.pop %v442
  %v445 = vmul.f32 %v443, 0.5
  %v446 = vmul.f32 %v444, 0.5
  %v447 = vadd.f32 %v445, 0.5
  %v448 = vadd.f32 %v446, 0.5
  %v449 = vtanh.pop %v440
  %v450 = vmul.f32 %v447, %v188
  %452 = vrot.lane.b32.xlu0 %v449, 64
  %v453 = vpop.permute.xlu0 %452
  %v455 = vmul.f32 %v447, %v453
  %457 = vrot.lane.b32.xlu0 %v455, 64
  %v458 = vpop.permute.xlu0 %457
  %v460 = vadd.f32 %v450, %v458
  %v461 = vtanh.pop %v460
  %463 = vrot.lane.b32.xlu0 %v461, 64
  %v464 = vpop.permute.xlu0 %463
  %v466 = vmul.f32 %v448, %v464
  %468 = vrot.lane.b32.xlu0 %v370, 64
  %v469 = vpop.permute.xlu0 %468
  %v471 = vsel %vm111, %v466, %v469
  %v472 = vpack.c.bf16 %v471, %v471
  %473 = vmatprep.subr.bf16.mxu0 %v273
  %474 = vmatpush1.bf16.msra.mxu0 %v272
  %475 = vmatprep.subr.bf16.mxu0 %v275
  %476 = vmatpush1.bf16.msra.mxu0 %v274
  %477 = vmatprep.subr.bf16.mxu0 %v277
  %478 = vmatpush1.bf16.msra.mxu0 %v276
  %479 = vmatprep.subr.bf16.mxu0 %v279
  %480 = vmatpush1.bf16.msra.mxu0 %v278
  %481 = vmatprep.subr.bf16.mxu0 %v281
  %482 = vmatpush1.bf16.msra.mxu0 %v280
  %483 = vmatprep.subr.bf16.mxu0 %v283
  %484 = vmatpush1.bf16.msra.mxu0 %v282
  %485 = vmatprep.subr.bf16.mxu0 %v285
  %486 = vmatpush1.bf16.msra.mxu0 %v284
  %487 = vmatprep.subr.bf16.mxu0 %v287
  %488 = vmatpush1.bf16.msra.mxu0 %v286
  %489 = vmatprep.subr.bf16.mxu0 0
  %490 = vmatpush1.bf16.msra.mxu0 0
  %491 = vmatprep.subr.bf16.mxu0 0
  %492 = vmatpush1.bf16.msra.mxu0 0
  %493 = vmatprep.subr.bf16.mxu0 0
  %494 = vmatpush1.bf16.msra.mxu0 0
  %495 = vmatprep.subr.bf16.mxu0 0
  %496 = vmatpush1.bf16.msra.mxu0 0
  %497 = vmatprep.subr.bf16.mxu0 0
  %498 = vmatpush1.bf16.msra.mxu0 0
  %499 = vmatprep.subr.bf16.mxu0 0
  %500 = vmatpush1.bf16.msra.mxu0 0
  %501 = vmatprep.subr.bf16.mxu0 0
  %502 = vmatpush1.bf16.msra.mxu0 0
  %503 = vmatprep.subr.bf16.mxu0 0
  %504 = vmatpush1.bf16.msra.mxu0 0
  %505 = vmatprep.mubr.bf16.mxu0 0
  %506 = vmatmul.mubr.bf16.gmra.mrb[0].mxu0 %v472
  %v507 = vpop.f32.mrb[0].mxu0
  %v508 = vadd.f32 %v217, %v507
  %v509 = vpop.f32.mrb[0].mxu0
  %v510 = vadd.f32 %v221, %v509
  %v511 = vpop.f32.mrb[0].mxu0
  %v512 = vpop.f32.mrb[0].mxu0
  %513 = vdwg.mxu0
  %v514 = vmul.f32 %v508, 0.5
  %v515 = vmul.f32 %v510, 0.5
  %v516 = vtanh.pop %v514
  %v517 = vtanh.pop %v515
  %v518 = vmul.f32 %v516, 0.5
  %v519 = vmul.f32 %v517, 0.5
  %v520 = vadd.f32 %v518, 0.5
  %v521 = vadd.f32 %v519, 0.5
  %v522 = vtanh.pop %v510
  %v523 = vmul.f32 %v520, %v364
  %525 = vrot.lane.b32.xlu0 %v522, 64
  %v526 = vpop.permute.xlu0 %525
  %v528 = vmul.f32 %v520, %v526
  %530 = vrot.lane.b32.xlu0 %v528, 64
  %v531 = vpop.permute.xlu0 %530
  %v533 = vadd.f32 %v523, %v531
  %v534 = vtanh.pop %v533
  %536 = vrot.lane.b32.xlu0 %v534, 64
  %v537 = vpop.permute.xlu0 %536
  %v539 = vmul.f32 %v521, %v537
  %v540 = vmul.f32 %v539, %v375
  %v541 = vsel %vm111, %v540, 0.0
  %542 = vadd.xlane.f32.xlu0 %v541
  %v543 = vpop.xlane.xlu0 %542
  %v544 = vadd.f32 %v543, %v385
  %v545 = vpack.c.bf16 %v466, %v466
  %546 = vset.pattern.permute.xlu0 2
  %547 = vperm.xlu0 %546, %v38
  %v548 = vpop.permute.xlu0 %547
  %v550 = vmul.f32 %v548, %v62
  %v551 = vmul.f32 %v548, %v66
  %v553 = vsel %vm111, %v545, 0
  %555 = vmatprep.subr.bf16.mxu0 %v96
  %556 = vmatpush1.bf16.msra.mxu0 %v95
  %557 = vmatprep.subr.bf16.mxu0 %v98
  %558 = vmatpush1.bf16.msra.mxu0 %v97
  %559 = vmatprep.subr.bf16.mxu0 %v100
  %560 = vmatpush1.bf16.msra.mxu0 %v99
  %561 = vmatprep.subr.bf16.mxu0 %v102
  %562 = vmatpush1.bf16.msra.mxu0 %v101
  %563 = vmatprep.subr.bf16.mxu0 0
  %564 = vmatpush1.bf16.msra.mxu0 0
  %565 = vmatprep.subr.bf16.mxu0 0
  %566 = vmatpush1.bf16.msra.mxu0 0
  %567 = vmatprep.subr.bf16.mxu0 0
  %568 = vmatpush1.bf16.msra.mxu0 0
  %569 = vmatprep.subr.bf16.mxu0 0
  %570 = vmatpush1.bf16.msra.mxu0 0
  %571 = vmatprep.subr.bf16.mxu0 0
  %572 = vmatpush1.bf16.msra.mxu0 0
  %573 = vmatprep.subr.bf16.mxu0 0
  %574 = vmatpush1.bf16.msra.mxu0 0
  %575 = vmatprep.subr.bf16.mxu0 0
  %576 = vmatpush1.bf16.msra.mxu0 0
  %577 = vmatprep.subr.bf16.mxu0 0
  %578 = vmatpush1.bf16.msra.mxu0 0
  %579 = vmatprep.subr.bf16.mxu0 0
  %580 = vmatpush1.bf16.msra.mxu0 0
  %581 = vmatprep.subr.bf16.mxu0 0
  %582 = vmatpush1.bf16.msra.mxu0 0
  %583 = vmatprep.subr.bf16.mxu0 0
  %584 = vmatpush1.bf16.msra.mxu0 0
  %585 = vmatprep.subr.bf16.mxu0 0
  %586 = vmatpush1.bf16.msra.mxu0 0
  %587 = vmatprep.mubr.bf16.mxu0 0
  %588 = vmatmul.mubr.bf16.gmra.mrb[0].mxu0 %v553
  %v589 = vpop.f32.mrb[0].mxu0
  %v590 = vadd.f32 %v550, %v589
  %v591 = vpop.f32.mrb[0].mxu0
  %v592 = vadd.f32 %v551, %v591
  %v593 = vpop.f32.mrb[0].mxu0
  %v594 = vpop.f32.mrb[0].mxu0
  %595 = vdwg.mxu0
  %v596 = vadd.f32 %v590, %v160
  %v597 = vadd.f32 %v592, %v164
  %v598 = vmul.f32 %v596, 0.5
  %v599 = vmul.f32 %v597, 0.5
  %v600 = vtanh.pop %v598
  %v601 = vtanh.pop %v599
  %v602 = vmul.f32 %v600, 0.5
  %v603 = vmul.f32 %v601, 0.5
  %v604 = vadd.f32 %v602, 0.5
  %v605 = vadd.f32 %v603, 0.5
  %v606 = vtanh.pop %v597
  %v607 = vmul.f32 %v604, %v460
  %609 = vrot.lane.b32.xlu0 %v606, 64
  %v610 = vpop.permute.xlu0 %609
  %v612 = vmul.f32 %v604, %v610
  %614 = vrot.lane.b32.xlu0 %v612, 64
  %v615 = vpop.permute.xlu0 %614
  %v617 = vadd.f32 %v607, %v615
  %v618 = vtanh.pop %v617
  %620 = vrot.lane.b32.xlu0 %v618, 64
  %v621 = vpop.permute.xlu0 %620
  %v623 = vmul.f32 %v605, %v621
  %625 = vrot.lane.b32.xlu0 %v539, 64
  %v626 = vpop.permute.xlu0 %625
  %v628 = vsel %vm111, %v623, %v626
  %v629 = vpack.c.bf16 %v628, %v628
  %630 = vmatprep.subr.bf16.mxu0 %v273
  %631 = vmatpush1.bf16.msra.mxu0 %v272
  %632 = vmatprep.subr.bf16.mxu0 %v275
  %633 = vmatpush1.bf16.msra.mxu0 %v274
  %634 = vmatprep.subr.bf16.mxu0 %v277
  %635 = vmatpush1.bf16.msra.mxu0 %v276
  %636 = vmatprep.subr.bf16.mxu0 %v279
  %637 = vmatpush1.bf16.msra.mxu0 %v278
  %638 = vmatprep.subr.bf16.mxu0 %v281
  %639 = vmatpush1.bf16.msra.mxu0 %v280
  %640 = vmatprep.subr.bf16.mxu0 %v283
  %641 = vmatpush1.bf16.msra.mxu0 %v282
  %642 = vmatprep.subr.bf16.mxu0 %v285
  %643 = vmatpush1.bf16.msra.mxu0 %v284
  %644 = vmatprep.subr.bf16.mxu0 %v287
  %645 = vmatpush1.bf16.msra.mxu0 %v286
  %646 = vmatprep.subr.bf16.mxu0 0
  %647 = vmatpush1.bf16.msra.mxu0 0
  %648 = vmatprep.subr.bf16.mxu0 0
  %649 = vmatpush1.bf16.msra.mxu0 0
  %650 = vmatprep.subr.bf16.mxu0 0
  %651 = vmatpush1.bf16.msra.mxu0 0
  %652 = vmatprep.subr.bf16.mxu0 0
  %653 = vmatpush1.bf16.msra.mxu0 0
  %654 = vmatprep.subr.bf16.mxu0 0
  %655 = vmatpush1.bf16.msra.mxu0 0
  %656 = vmatprep.subr.bf16.mxu0 0
  %657 = vmatpush1.bf16.msra.mxu0 0
  %658 = vmatprep.subr.bf16.mxu0 0
  %659 = vmatpush1.bf16.msra.mxu0 0
  %660 = vmatprep.subr.bf16.mxu0 0
  %661 = vmatpush1.bf16.msra.mxu0 0
  %662 = vmatprep.mubr.bf16.mxu0 0
  %663 = vmatmul.mubr.bf16.gmra.mrb[0].mxu0 %v629
  %v664 = vpop.f32.mrb[0].mxu0
  %v665 = vadd.f32 %v217, %v664
  %v666 = vpop.f32.mrb[0].mxu0
  %v667 = vadd.f32 %v221, %v666
  %v668 = vpop.f32.mrb[0].mxu0
  %v669 = vpop.f32.mrb[0].mxu0
  %670 = vdwg.mxu0
  %v671 = vmul.f32 %v665, 0.5
  %v672 = vmul.f32 %v667, 0.5
  %v673 = vtanh.pop %v671
  %v674 = vtanh.pop %v672
  %v675 = vmul.f32 %v673, 0.5
  %v676 = vmul.f32 %v674, 0.5
  %v677 = vadd.f32 %v675, 0.5
  %v678 = vadd.f32 %v676, 0.5
  %v679 = vtanh.pop %v667
  %v680 = vmul.f32 %v677, %v533
  %682 = vrot.lane.b32.xlu0 %v679, 64
  %v683 = vpop.permute.xlu0 %682
  %v685 = vmul.f32 %v677, %v683
  %687 = vrot.lane.b32.xlu0 %v685, 64
  %v688 = vpop.permute.xlu0 %687
  %v690 = vadd.f32 %v680, %v688
  %v691 = vtanh.pop %v690
  %693 = vrot.lane.b32.xlu0 %v691, 64
  %v694 = vpop.permute.xlu0 %693
  %v696 = vmul.f32 %v678, %v694
  %v697 = vmul.f32 %v696, %v375
  %v698 = vsel %vm111, %v697, 0.0
  %699 = vadd.xlane.f32.xlu0 %v698
  %v700 = vpop.xlane.xlu0 %699
  %v701 = vadd.f32 %v700, %v385
  %v702 = vpack.c.bf16 %v623, %v623
  %703 = vset.pattern.permute.xlu0 3
  %704 = vperm.xlu0 %703, %v38
  %v705 = vpop.permute.xlu0 %704
  %v707 = vmul.f32 %v705, %v62
  %v708 = vmul.f32 %v705, %v66
  %v710 = vsel %vm111, %v702, 0
  %712 = vmatprep.subr.bf16.mxu0 %v96
  %713 = vmatpush1.bf16.msra.mxu0 %v95
  %714 = vmatprep.subr.bf16.mxu0 %v98
  %715 = vmatpush1.bf16.msra.mxu0 %v97
  %716 = vmatprep.subr.bf16.mxu0 %v100
  %717 = vmatpush1.bf16.msra.mxu0 %v99
  %718 = vmatprep.subr.bf16.mxu0 %v102
  %719 = vmatpush1.bf16.msra.mxu0 %v101
  %720 = vmatprep.subr.bf16.mxu0 0
  %721 = vmatpush1.bf16.msra.mxu0 0
  %722 = vmatprep.subr.bf16.mxu0 0
  %723 = vmatpush1.bf16.msra.mxu0 0
  %724 = vmatprep.subr.bf16.mxu0 0
  %725 = vmatpush1.bf16.msra.mxu0 0
  %726 = vmatprep.subr.bf16.mxu0 0
  %727 = vmatpush1.bf16.msra.mxu0 0
  %728 = vmatprep.subr.bf16.mxu0 0
  %729 = vmatpush1.bf16.msra.mxu0 0
  %730 = vmatprep.subr.bf16.mxu0 0
  %731 = vmatpush1.bf16.msra.mxu0 0
  %732 = vmatprep.subr.bf16.mxu0 0
  %733 = vmatpush1.bf16.msra.mxu0 0
  %734 = vmatprep.subr.bf16.mxu0 0
  %735 = vmatpush1.bf16.msra.mxu0 0
  %736 = vmatprep.subr.bf16.mxu0 0
  %737 = vmatpush1.bf16.msra.mxu0 0
  %738 = vmatprep.subr.bf16.mxu0 0
  %739 = vmatpush1.bf16.msra.mxu0 0
  %740 = vmatprep.subr.bf16.mxu0 0
  %741 = vmatpush1.bf16.msra.mxu0 0
  %742 = vmatprep.subr.bf16.mxu0 0
  %743 = vmatpush1.bf16.msra.mxu0 0
  %744 = vmatprep.mubr.bf16.mxu0 0
  %745 = vmatmul.mubr.bf16.gmra.mrb[0].mxu0 %v710
  %v746 = vpop.f32.mrb[0].mxu0
  %v747 = vadd.f32 %v707, %v746
  %v748 = vpop.f32.mrb[0].mxu0
  %v749 = vadd.f32 %v708, %v748
  %v750 = vpop.f32.mrb[0].mxu0
  %v751 = vpop.f32.mrb[0].mxu0
  %752 = vdwg.mxu0
  %v753 = vadd.f32 %v747, %v160
  %v754 = vadd.f32 %v749, %v164
  %v755 = vmul.f32 %v753, 0.5
  %v756 = vmul.f32 %v754, 0.5
  %v757 = vtanh.pop %v755
  %v758 = vtanh.pop %v756
  %v759 = vmul.f32 %v757, 0.5
  %v760 = vmul.f32 %v758, 0.5
  %v761 = vadd.f32 %v759, 0.5
  %v762 = vadd.f32 %v760, 0.5
  %v763 = vtanh.pop %v754
  %v764 = vmul.f32 %v761, %v617
  %766 = vrot.lane.b32.xlu0 %v763, 64
  %v767 = vpop.permute.xlu0 %766
  %v769 = vmul.f32 %v761, %v767
  %771 = vrot.lane.b32.xlu0 %v769, 64
  %v772 = vpop.permute.xlu0 %771
  %v774 = vadd.f32 %v764, %v772
  %v775 = vtanh.pop %v774
  %777 = vrot.lane.b32.xlu0 %v775, 64
  %v778 = vpop.permute.xlu0 %777
  %v780 = vmul.f32 %v762, %v778
  %782 = vrot.lane.b32.xlu0 %v696, 64
  %v783 = vpop.permute.xlu0 %782
  %v785 = vsel %vm111, %v780, %v783
  %v786 = vpack.c.bf16 %v785, %v785
  %787 = vmatprep.subr.bf16.mxu0 %v273
  %788 = vmatpush1.bf16.msra.mxu0 %v272
  %789 = vmatprep.subr.bf16.mxu0 %v275
  %790 = vmatpush1.bf16.msra.mxu0 %v274
  %791 = vmatprep.subr.bf16.mxu0 %v277
  %792 = vmatpush1.bf16.msra.mxu0 %v276
  %793 = vmatprep.subr.bf16.mxu0 %v279
  %794 = vmatpush1.bf16.msra.mxu0 %v278
  %795 = vmatprep.subr.bf16.mxu0 %v281
  %796 = vmatpush1.bf16.msra.mxu0 %v280
  %797 = vmatprep.subr.bf16.mxu0 %v283
  %798 = vmatpush1.bf16.msra.mxu0 %v282
  %799 = vmatprep.subr.bf16.mxu0 %v285
  %800 = vmatpush1.bf16.msra.mxu0 %v284
  %801 = vmatprep.subr.bf16.mxu0 %v287
  %802 = vmatpush1.bf16.msra.mxu0 %v286
  %803 = vmatprep.subr.bf16.mxu0 0
  %804 = vmatpush1.bf16.msra.mxu0 0
  %805 = vmatprep.subr.bf16.mxu0 0
  %806 = vmatpush1.bf16.msra.mxu0 0
  %807 = vmatprep.subr.bf16.mxu0 0
  %808 = vmatpush1.bf16.msra.mxu0 0
  %809 = vmatprep.subr.bf16.mxu0 0
  %810 = vmatpush1.bf16.msra.mxu0 0
  %811 = vmatprep.subr.bf16.mxu0 0
  %812 = vmatpush1.bf16.msra.mxu0 0
  %813 = vmatprep.subr.bf16.mxu0 0
  %814 = vmatpush1.bf16.msra.mxu0 0
  %815 = vmatprep.subr.bf16.mxu0 0
  %816 = vmatpush1.bf16.msra.mxu0 0
  %817 = vmatprep.subr.bf16.mxu0 0
  %818 = vmatpush1.bf16.msra.mxu0 0
  %819 = vmatprep.mubr.bf16.mxu0 0
  %820 = vmatmul.mubr.bf16.gmra.mrb[0].mxu0 %v786
  %v821 = vpop.f32.mrb[0].mxu0
  %v822 = vadd.f32 %v217, %v821
  %v823 = vpop.f32.mrb[0].mxu0
  %v824 = vadd.f32 %v221, %v823
  %v825 = vpop.f32.mrb[0].mxu0
  %v826 = vpop.f32.mrb[0].mxu0
  %827 = vdwg.mxu0
  %v828 = vmul.f32 %v822, 0.5
  %v829 = vmul.f32 %v824, 0.5
  %v830 = vtanh.pop %v828
  %v831 = vtanh.pop %v829
  %v832 = vmul.f32 %v830, 0.5
  %v833 = vmul.f32 %v831, 0.5
  %v834 = vadd.f32 %v832, 0.5
  %v835 = vadd.f32 %v833, 0.5
  %v836 = vtanh.pop %v824
  %v837 = vmul.f32 %v834, %v690
  %839 = vrot.lane.b32.xlu0 %v836, 64
  %v840 = vpop.permute.xlu0 %839
  %v842 = vmul.f32 %v834, %v840
  %844 = vrot.lane.b32.xlu0 %v842, 64
  %v845 = vpop.permute.xlu0 %844
  %v847 = vadd.f32 %v837, %v845
  %v848 = vtanh.pop %v847
  %850 = vrot.lane.b32.xlu0 %v848, 64
  %v851 = vpop.permute.xlu0 %850
  %v853 = vmul.f32 %v835, %v851
  %v854 = vmul.f32 %v853, %v375
  %v855 = vsel %vm111, %v854, 0.0
  %856 = vadd.xlane.f32.xlu0 %v855
  %v857 = vpop.xlane.xlu0 %856
  %v858 = vadd.f32 %v857, %v385
  %v859 = vpack.c.bf16 %v780, %v780
  %860 = vset.pattern.permute.xlu0 4
  %861 = vperm.xlu0 %860, %v38
  %v862 = vpop.permute.xlu0 %861
  %v864 = vmul.f32 %v862, %v62
  %v865 = vmul.f32 %v862, %v66
  %v867 = vsel %vm111, %v859, 0
  %869 = vmatprep.subr.bf16.mxu0 %v96
  %870 = vmatpush1.bf16.msra.mxu0 %v95
  %871 = vmatprep.subr.bf16.mxu0 %v98
  %872 = vmatpush1.bf16.msra.mxu0 %v97
  %873 = vmatprep.subr.bf16.mxu0 %v100
  %874 = vmatpush1.bf16.msra.mxu0 %v99
  %875 = vmatprep.subr.bf16.mxu0 %v102
  %876 = vmatpush1.bf16.msra.mxu0 %v101
  %877 = vmatprep.subr.bf16.mxu0 0
  %878 = vmatpush1.bf16.msra.mxu0 0
  %879 = vmatprep.subr.bf16.mxu0 0
  %880 = vmatpush1.bf16.msra.mxu0 0
  %881 = vmatprep.subr.bf16.mxu0 0
  %882 = vmatpush1.bf16.msra.mxu0 0
  %883 = vmatprep.subr.bf16.mxu0 0
  %884 = vmatpush1.bf16.msra.mxu0 0
  %885 = vmatprep.subr.bf16.mxu0 0
  %886 = vmatpush1.bf16.msra.mxu0 0
  %887 = vmatprep.subr.bf16.mxu0 0
  %888 = vmatpush1.bf16.msra.mxu0 0
  %889 = vmatprep.subr.bf16.mxu0 0
  %890 = vmatpush1.bf16.msra.mxu0 0
  %891 = vmatprep.subr.bf16.mxu0 0
  %892 = vmatpush1.bf16.msra.mxu0 0
  %893 = vmatprep.subr.bf16.mxu0 0
  %894 = vmatpush1.bf16.msra.mxu0 0
  %895 = vmatprep.subr.bf16.mxu0 0
  %896 = vmatpush1.bf16.msra.mxu0 0
  %897 = vmatprep.subr.bf16.mxu0 0
  %898 = vmatpush1.bf16.msra.mxu0 0
  %899 = vmatprep.subr.bf16.mxu0 0
  %900 = vmatpush1.bf16.msra.mxu0 0
  %901 = vmatprep.mubr.bf16.mxu0 0
  %902 = vmatmul.mubr.bf16.gmra.mrb[0].mxu0 %v867
  %v903 = vpop.f32.mrb[0].mxu0
  %v904 = vadd.f32 %v864, %v903
  %v905 = vpop.f32.mrb[0].mxu0
  %v906 = vadd.f32 %v865, %v905
  %v907 = vpop.f32.mrb[0].mxu0
  %v908 = vpop.f32.mrb[0].mxu0
  %909 = vdwg.mxu0
  %v910 = vadd.f32 %v904, %v160
  %v911 = vadd.f32 %v906, %v164
  %v912 = vmul.f32 %v910, 0.5
  %v913 = vmul.f32 %v911, 0.5
  %v914 = vtanh.pop %v912
  %v915 = vtanh.pop %v913
  %v916 = vmul.f32 %v914, 0.5
  %v917 = vmul.f32 %v915, 0.5
  %v918 = vadd.f32 %v916, 0.5
  %v919 = vadd.f32 %v917, 0.5
  %v920 = vtanh.pop %v911
  %v921 = vmul.f32 %v918, %v774
  %923 = vrot.lane.b32.xlu0 %v920, 64
  %v924 = vpop.permute.xlu0 %923
  %v926 = vmul.f32 %v918, %v924
  %928 = vrot.lane.b32.xlu0 %v926, 64
  %v929 = vpop.permute.xlu0 %928
  %v931 = vadd.f32 %v921, %v929
  %v932 = vtanh.pop %v931
  %934 = vrot.lane.b32.xlu0 %v932, 64
  %v935 = vpop.permute.xlu0 %934
  %v937 = vmul.f32 %v919, %v935
  %939 = vrot.lane.b32.xlu0 %v853, 64
  %v940 = vpop.permute.xlu0 %939
  %v942 = vsel %vm111, %v937, %v940
  %v943 = vpack.c.bf16 %v942, %v942
  %944 = vmatprep.subr.bf16.mxu0 %v273
  %945 = vmatpush1.bf16.msra.mxu0 %v272
  %946 = vmatprep.subr.bf16.mxu0 %v275
  %947 = vmatpush1.bf16.msra.mxu0 %v274
  %948 = vmatprep.subr.bf16.mxu0 %v277
  %949 = vmatpush1.bf16.msra.mxu0 %v276
  %950 = vmatprep.subr.bf16.mxu0 %v279
  %951 = vmatpush1.bf16.msra.mxu0 %v278
  %952 = vmatprep.subr.bf16.mxu0 %v281
  %953 = vmatpush1.bf16.msra.mxu0 %v280
  %954 = vmatprep.subr.bf16.mxu0 %v283
  %955 = vmatpush1.bf16.msra.mxu0 %v282
  %956 = vmatprep.subr.bf16.mxu0 %v285
  %957 = vmatpush1.bf16.msra.mxu0 %v284
  %958 = vmatprep.subr.bf16.mxu0 %v287
  %959 = vmatpush1.bf16.msra.mxu0 %v286
  %960 = vmatprep.subr.bf16.mxu0 0
  %961 = vmatpush1.bf16.msra.mxu0 0
  %962 = vmatprep.subr.bf16.mxu0 0
  %963 = vmatpush1.bf16.msra.mxu0 0
  %964 = vmatprep.subr.bf16.mxu0 0
  %965 = vmatpush1.bf16.msra.mxu0 0
  %966 = vmatprep.subr.bf16.mxu0 0
  %967 = vmatpush1.bf16.msra.mxu0 0
  %968 = vmatprep.subr.bf16.mxu0 0
  %969 = vmatpush1.bf16.msra.mxu0 0
  %970 = vmatprep.subr.bf16.mxu0 0
  %971 = vmatpush1.bf16.msra.mxu0 0
  %972 = vmatprep.subr.bf16.mxu0 0
  %973 = vmatpush1.bf16.msra.mxu0 0
  %974 = vmatprep.subr.bf16.mxu0 0
  %975 = vmatpush1.bf16.msra.mxu0 0
  %976 = vmatprep.mubr.bf16.mxu0 0
  %977 = vmatmul.mubr.bf16.gmra.mrb[0].mxu0 %v943
  %v978 = vpop.f32.mrb[0].mxu0
  %v979 = vadd.f32 %v217, %v978
  %v980 = vpop.f32.mrb[0].mxu0
  %v981 = vadd.f32 %v221, %v980
  %v982 = vpop.f32.mrb[0].mxu0
  %v983 = vpop.f32.mrb[0].mxu0
  %984 = vdwg.mxu0
  %v985 = vmul.f32 %v979, 0.5
  %v986 = vmul.f32 %v981, 0.5
  %v987 = vtanh.pop %v985
  %v988 = vtanh.pop %v986
  %v989 = vmul.f32 %v987, 0.5
  %v990 = vmul.f32 %v988, 0.5
  %v991 = vadd.f32 %v989, 0.5
  %v992 = vadd.f32 %v990, 0.5
  %v993 = vtanh.pop %v981
  %v994 = vmul.f32 %v991, %v847
  %996 = vrot.lane.b32.xlu0 %v993, 64
  %v997 = vpop.permute.xlu0 %996
  %v999 = vmul.f32 %v991, %v997
  %1001 = vrot.lane.b32.xlu0 %v999, 64
  %v1002 = vpop.permute.xlu0 %1001
  %v1004 = vadd.f32 %v994, %v1002
  %v1005 = vtanh.pop %v1004
  %1007 = vrot.lane.b32.xlu0 %v1005, 64
  %v1008 = vpop.permute.xlu0 %1007
  %v1010 = vmul.f32 %v992, %v1008
  %v1011 = vmul.f32 %v1010, %v375
  %v1012 = vsel %vm111, %v1011, 0.0
  %1013 = vadd.xlane.f32.xlu0 %v1012
  %v1014 = vpop.xlane.xlu0 %1013
  %v1015 = vadd.f32 %v1014, %v385
  %v1016 = vpack.c.bf16 %v937, %v937
  %1017 = vset.pattern.permute.xlu0 5
  %1018 = vperm.xlu0 %1017, %v38
  %v1019 = vpop.permute.xlu0 %1018
  %v1021 = vmul.f32 %v1019, %v62
  %v1022 = vmul.f32 %v1019, %v66
  %v1024 = vsel %vm111, %v1016, 0
  %1026 = vmatprep.subr.bf16.mxu0 %v96
  %1027 = vmatpush1.bf16.msra.mxu0 %v95
  %1028 = vmatprep.subr.bf16.mxu0 %v98
  %1029 = vmatpush1.bf16.msra.mxu0 %v97
  %1030 = vmatprep.subr.bf16.mxu0 %v100
  %1031 = vmatpush1.bf16.msra.mxu0 %v99
  %1032 = vmatprep.subr.bf16.mxu0 %v102
  %1033 = vmatpush1.bf16.msra.mxu0 %v101
  %1034 = vmatprep.subr.bf16.mxu0 0
  %1035 = vmatpush1.bf16.msra.mxu0 0
  %1036 = vmatprep.subr.bf16.mxu0 0
  %1037 = vmatpush1.bf16.msra.mxu0 0
  %1038 = vmatprep.subr.bf16.mxu0 0
  %1039 = vmatpush1.bf16.msra.mxu0 0
  %1040 = vmatprep.subr.bf16.mxu0 0
  %1041 = vmatpush1.bf16.msra.mxu0 0
  %1042 = vmatprep.subr.bf16.mxu0 0
  %1043 = vmatpush1.bf16.msra.mxu0 0
  %1044 = vmatprep.subr.bf16.mxu0 0
  %1045 = vmatpush1.bf16.msra.mxu0 0
  %1046 = vmatprep.subr.bf16.mxu0 0
  %1047 = vmatpush1.bf16.msra.mxu0 0
  %1048 = vmatprep.subr.bf16.mxu0 0
  %1049 = vmatpush1.bf16.msra.mxu0 0
  %1050 = vmatprep.subr.bf16.mxu0 0
  %1051 = vmatpush1.bf16.msra.mxu0 0
  %1052 = vmatprep.subr.bf16.mxu0 0
  %1053 = vmatpush1.bf16.msra.mxu0 0
  %1054 = vmatprep.subr.bf16.mxu0 0
  %1055 = vmatpush1.bf16.msra.mxu0 0
  %1056 = vmatprep.subr.bf16.mxu0 0
  %1057 = vmatpush1.bf16.msra.mxu0 0
  %1058 = vmatprep.mubr.bf16.mxu0 0
  %1059 = vmatmul.mubr.bf16.gmra.mrb[0].mxu0 %v1024
  %v1060 = vpop.f32.mrb[0].mxu0
  %v1061 = vadd.f32 %v1021, %v1060
  %v1062 = vpop.f32.mrb[0].mxu0
  %v1063 = vadd.f32 %v1022, %v1062
  %v1064 = vpop.f32.mrb[0].mxu0
  %v1065 = vpop.f32.mrb[0].mxu0
  %1066 = vdwg.mxu0
  %v1067 = vadd.f32 %v1061, %v160
  %v1068 = vadd.f32 %v1063, %v164
  %v1069 = vmul.f32 %v1067, 0.5
  %v1070 = vmul.f32 %v1068, 0.5
  %v1071 = vtanh.pop %v1069
  %v1072 = vtanh.pop %v1070
  %v1073 = vmul.f32 %v1071, 0.5
  %v1074 = vmul.f32 %v1072, 0.5
  %v1075 = vadd.f32 %v1073, 0.5
  %v1076 = vadd.f32 %v1074, 0.5
  %v1077 = vtanh.pop %v1068
  %v1078 = vmul.f32 %v1075, %v931
  %1080 = vrot.lane.b32.xlu0 %v1077, 64
  %v1081 = vpop.permute.xlu0 %1080
  %v1083 = vmul.f32 %v1075, %v1081
  %1085 = vrot.lane.b32.xlu0 %v1083, 64
  %v1086 = vpop.permute.xlu0 %1085
  %v1088 = vadd.f32 %v1078, %v1086
  %v1089 = vtanh.pop %v1088
  %1091 = vrot.lane.b32.xlu0 %v1089, 64
  %v1092 = vpop.permute.xlu0 %1091
  %v1094 = vmul.f32 %v1076, %v1092
  %1096 = vrot.lane.b32.xlu0 %v1010, 64
  %v1097 = vpop.permute.xlu0 %1096
  %v1099 = vsel %vm111, %v1094, %v1097
  %v1100 = vpack.c.bf16 %v1099, %v1099
  %1101 = vmatprep.subr.bf16.mxu0 %v273
  %1102 = vmatpush1.bf16.msra.mxu0 %v272
  %1103 = vmatprep.subr.bf16.mxu0 %v275
  %1104 = vmatpush1.bf16.msra.mxu0 %v274
  %1105 = vmatprep.subr.bf16.mxu0 %v277
  %1106 = vmatpush1.bf16.msra.mxu0 %v276
  %1107 = vmatprep.subr.bf16.mxu0 %v279
  %1108 = vmatpush1.bf16.msra.mxu0 %v278
  %1109 = vmatprep.subr.bf16.mxu0 %v281
  %1110 = vmatpush1.bf16.msra.mxu0 %v280
  %1111 = vmatprep.subr.bf16.mxu0 %v283
  %1112 = vmatpush1.bf16.msra.mxu0 %v282
  %1113 = vmatprep.subr.bf16.mxu0 %v285
  %1114 = vmatpush1.bf16.msra.mxu0 %v284
  %1115 = vmatprep.subr.bf16.mxu0 %v287
  %1116 = vmatpush1.bf16.msra.mxu0 %v286
  %1117 = vmatprep.subr.bf16.mxu0 0
  %1118 = vmatpush1.bf16.msra.mxu0 0
  %1119 = vmatprep.subr.bf16.mxu0 0
  %1120 = vmatpush1.bf16.msra.mxu0 0
  %1121 = vmatprep.subr.bf16.mxu0 0
  %1122 = vmatpush1.bf16.msra.mxu0 0
  %1123 = vmatprep.subr.bf16.mxu0 0
  %1124 = vmatpush1.bf16.msra.mxu0 0
  %1125 = vmatprep.subr.bf16.mxu0 0
  %1126 = vmatpush1.bf16.msra.mxu0 0
  %1127 = vmatprep.subr.bf16.mxu0 0
  %1128 = vmatpush1.bf16.msra.mxu0 0
  %1129 = vmatprep.subr.bf16.mxu0 0
  %1130 = vmatpush1.bf16.msra.mxu0 0
  %1131 = vmatprep.subr.bf16.mxu0 0
  %1132 = vmatpush1.bf16.msra.mxu0 0
  %1133 = vmatprep.mubr.bf16.mxu0 0
  %1134 = vmatmul.mubr.bf16.gmra.mrb[0].mxu0 %v1100
  %v1135 = vpop.f32.mrb[0].mxu0
  %v1136 = vadd.f32 %v217, %v1135
  %v1137 = vpop.f32.mrb[0].mxu0
  %v1138 = vadd.f32 %v221, %v1137
  %v1139 = vpop.f32.mrb[0].mxu0
  %v1140 = vpop.f32.mrb[0].mxu0
  %1141 = vdwg.mxu0
  %v1142 = vmul.f32 %v1136, 0.5
  %v1143 = vmul.f32 %v1138, 0.5
  %v1144 = vtanh.pop %v1142
  %v1145 = vtanh.pop %v1143
  %v1146 = vmul.f32 %v1144, 0.5
  %v1147 = vmul.f32 %v1145, 0.5
  %v1148 = vadd.f32 %v1146, 0.5
  %v1149 = vadd.f32 %v1147, 0.5
  %v1150 = vtanh.pop %v1138
  %v1151 = vmul.f32 %v1148, %v1004
  %1153 = vrot.lane.b32.xlu0 %v1150, 64
  %v1154 = vpop.permute.xlu0 %1153
  %v1156 = vmul.f32 %v1148, %v1154
  %1158 = vrot.lane.b32.xlu0 %v1156, 64
  %v1159 = vpop.permute.xlu0 %1158
  %v1161 = vadd.f32 %v1151, %v1159
  %v1162 = vtanh.pop %v1161
  %1164 = vrot.lane.b32.xlu0 %v1162, 64
  %v1165 = vpop.permute.xlu0 %1164
  %v1167 = vmul.f32 %v1149, %v1165
  %v1168 = vmul.f32 %v1167, %v375
  %v1169 = vsel %vm111, %v1168, 0.0
  %1170 = vadd.xlane.f32.xlu0 %v1169
  %v1171 = vpop.xlane.xlu0 %1170
  %v1172 = vadd.f32 %v1171, %v385
  %v1173 = vpack.c.bf16 %v1094, %v1094
  %1174 = vset.pattern.permute.xlu0 6
  %1175 = vperm.xlu0 %1174, %v38
  %v1176 = vpop.permute.xlu0 %1175
  %v1178 = vmul.f32 %v1176, %v62
  %v1179 = vmul.f32 %v1176, %v66
  %v1181 = vsel %vm111, %v1173, 0
  %1183 = vmatprep.subr.bf16.mxu0 %v96
  %1184 = vmatpush1.bf16.msra.mxu0 %v95
  %1185 = vmatprep.subr.bf16.mxu0 %v98
  %1186 = vmatpush1.bf16.msra.mxu0 %v97
  %1187 = vmatprep.subr.bf16.mxu0 %v100
  %1188 = vmatpush1.bf16.msra.mxu0 %v99
  %1189 = vmatprep.subr.bf16.mxu0 %v102
  %1190 = vmatpush1.bf16.msra.mxu0 %v101
  %1191 = vmatprep.subr.bf16.mxu0 0
  %1192 = vmatpush1.bf16.msra.mxu0 0
  %1193 = vmatprep.subr.bf16.mxu0 0
  %1194 = vmatpush1.bf16.msra.mxu0 0
  %1195 = vmatprep.subr.bf16.mxu0 0
  %1196 = vmatpush1.bf16.msra.mxu0 0
  %1197 = vmatprep.subr.bf16.mxu0 0
  %1198 = vmatpush1.bf16.msra.mxu0 0
  %1199 = vmatprep.subr.bf16.mxu0 0
  %1200 = vmatpush1.bf16.msra.mxu0 0
  %1201 = vmatprep.subr.bf16.mxu0 0
  %1202 = vmatpush1.bf16.msra.mxu0 0
  %1203 = vmatprep.subr.bf16.mxu0 0
  %1204 = vmatpush1.bf16.msra.mxu0 0
  %1205 = vmatprep.subr.bf16.mxu0 0
  %1206 = vmatpush1.bf16.msra.mxu0 0
  %1207 = vmatprep.subr.bf16.mxu0 0
  %1208 = vmatpush1.bf16.msra.mxu0 0
  %1209 = vmatprep.subr.bf16.mxu0 0
  %1210 = vmatpush1.bf16.msra.mxu0 0
  %1211 = vmatprep.subr.bf16.mxu0 0
  %1212 = vmatpush1.bf16.msra.mxu0 0
  %1213 = vmatprep.subr.bf16.mxu0 0
  %1214 = vmatpush1.bf16.msra.mxu0 0
  %1215 = vmatprep.mubr.bf16.mxu0 0
  %1216 = vmatmul.mubr.bf16.gmra.mrb[0].mxu0 %v1181
  %v1217 = vpop.f32.mrb[0].mxu0
  %v1218 = vadd.f32 %v1178, %v1217
  %v1219 = vpop.f32.mrb[0].mxu0
  %v1220 = vadd.f32 %v1179, %v1219
  %v1221 = vpop.f32.mrb[0].mxu0
  %v1222 = vpop.f32.mrb[0].mxu0
  %1223 = vdwg.mxu0
  %v1224 = vadd.f32 %v1218, %v160
  %v1225 = vadd.f32 %v1220, %v164
  %v1226 = vmul.f32 %v1224, 0.5
  %v1227 = vmul.f32 %v1225, 0.5
  %v1228 = vtanh.pop %v1226
  %v1229 = vtanh.pop %v1227
  %v1230 = vmul.f32 %v1228, 0.5
  %v1231 = vmul.f32 %v1229, 0.5
  %v1232 = vadd.f32 %v1230, 0.5
  %v1233 = vadd.f32 %v1231, 0.5
  %v1234 = vtanh.pop %v1225
  %v1235 = vmul.f32 %v1232, %v1088
  %1237 = vrot.lane.b32.xlu0 %v1234, 64
  %v1238 = vpop.permute.xlu0 %1237
  %v1240 = vmul.f32 %v1232, %v1238
  %1242 = vrot.lane.b32.xlu0 %v1240, 64
  %v1243 = vpop.permute.xlu0 %1242
  %v1245 = vadd.f32 %v1235, %v1243
  %v1246 = vtanh.pop %v1245
  %1248 = vrot.lane.b32.xlu0 %v1246, 64
  %v1249 = vpop.permute.xlu0 %1248
  %v1251 = vmul.f32 %v1233, %v1249
  %1253 = vrot.lane.b32.xlu0 %v1167, 64
  %v1254 = vpop.permute.xlu0 %1253
  %v1256 = vsel %vm111, %v1251, %v1254
  %v1257 = vpack.c.bf16 %v1256, %v1256
  %1258 = vmatprep.subr.bf16.mxu0 %v273
  %1259 = vmatpush1.bf16.msra.mxu0 %v272
  %1260 = vmatprep.subr.bf16.mxu0 %v275
  %1261 = vmatpush1.bf16.msra.mxu0 %v274
  %1262 = vmatprep.subr.bf16.mxu0 %v277
  %1263 = vmatpush1.bf16.msra.mxu0 %v276
  %1264 = vmatprep.subr.bf16.mxu0 %v279
  %1265 = vmatpush1.bf16.msra.mxu0 %v278
  %1266 = vmatprep.subr.bf16.mxu0 %v281
  %1267 = vmatpush1.bf16.msra.mxu0 %v280
  %1268 = vmatprep.subr.bf16.mxu0 %v283
  %1269 = vmatpush1.bf16.msra.mxu0 %v282
  %1270 = vmatprep.subr.bf16.mxu0 %v285
  %1271 = vmatpush1.bf16.msra.mxu0 %v284
  %1272 = vmatprep.subr.bf16.mxu0 %v287
  %1273 = vmatpush1.bf16.msra.mxu0 %v286
  %1274 = vmatprep.subr.bf16.mxu0 0
  %1275 = vmatpush1.bf16.msra.mxu0 0
  %1276 = vmatprep.subr.bf16.mxu0 0
  %1277 = vmatpush1.bf16.msra.mxu0 0
  %1278 = vmatprep.subr.bf16.mxu0 0
  %1279 = vmatpush1.bf16.msra.mxu0 0
  %1280 = vmatprep.subr.bf16.mxu0 0
  %1281 = vmatpush1.bf16.msra.mxu0 0
  %1282 = vmatprep.subr.bf16.mxu0 0
  %1283 = vmatpush1.bf16.msra.mxu0 0
  %1284 = vmatprep.subr.bf16.mxu0 0
  %1285 = vmatpush1.bf16.msra.mxu0 0
  %1286 = vmatprep.subr.bf16.mxu0 0
  %1287 = vmatpush1.bf16.msra.mxu0 0
  %1288 = vmatprep.subr.bf16.mxu0 0
  %1289 = vmatpush1.bf16.msra.mxu0 0
  %1290 = vmatprep.mubr.bf16.mxu0 0
  %1291 = vmatmul.mubr.bf16.gmra.mrb[0].mxu0 %v1257
  %v1292 = vpop.f32.mrb[0].mxu0
  %v1293 = vadd.f32 %v217, %v1292
  %v1294 = vpop.f32.mrb[0].mxu0
  %v1295 = vadd.f32 %v221, %v1294
  %v1296 = vpop.f32.mrb[0].mxu0
  %v1297 = vpop.f32.mrb[0].mxu0
  %1298 = vdwg.mxu0
  %v1299 = vmul.f32 %v1293, 0.5
  %v1300 = vmul.f32 %v1295, 0.5
  %v1301 = vtanh.pop %v1299
  %v1302 = vtanh.pop %v1300
  %v1303 = vmul.f32 %v1301, 0.5
  %v1304 = vmul.f32 %v1302, 0.5
  %v1305 = vadd.f32 %v1303, 0.5
  %v1306 = vadd.f32 %v1304, 0.5
  %v1307 = vtanh.pop %v1295
  %v1308 = vmul.f32 %v1305, %v1161
  %1310 = vrot.lane.b32.xlu0 %v1307, 64
  %v1311 = vpop.permute.xlu0 %1310
  %v1313 = vmul.f32 %v1305, %v1311
  %1315 = vrot.lane.b32.xlu0 %v1313, 64
  %v1316 = vpop.permute.xlu0 %1315
  %v1318 = vadd.f32 %v1308, %v1316
  %v1319 = vtanh.pop %v1318
  %1321 = vrot.lane.b32.xlu0 %v1319, 64
  %v1322 = vpop.permute.xlu0 %1321
  %v1324 = vmul.f32 %v1306, %v1322
  %v1325 = vmul.f32 %v1324, %v375
  %v1326 = vsel %vm111, %v1325, 0.0
  %1327 = vadd.xlane.f32.xlu0 %v1326
  %v1328 = vpop.xlane.xlu0 %1327
  %v1329 = vadd.f32 %v1328, %v385
  %v1330 = vpack.c.bf16 %v1251, %v1251
  %1331 = vset.pattern.permute.xlu0 7
  %1332 = vperm.xlu0 %1331, %v38
  %v1333 = vpop.permute.xlu0 %1332
  %v1335 = vmul.f32 %v1333, %v62
  %v1336 = vmul.f32 %v1333, %v66
  %v1338 = vsel %vm111, %v1330, 0
  %1340 = vmatprep.subr.bf16.mxu0 %v96
  %1341 = vmatpush1.bf16.msra.mxu0 %v95
  %1342 = vmatprep.subr.bf16.mxu0 %v98
  %1343 = vmatpush1.bf16.msra.mxu0 %v97
  %1344 = vmatprep.subr.bf16.mxu0 %v100
  %1345 = vmatpush1.bf16.msra.mxu0 %v99
  %1346 = vmatprep.subr.bf16.mxu0 %v102
  %1347 = vmatpush1.bf16.msra.mxu0 %v101
  %1348 = vmatprep.subr.bf16.mxu0 0
  %1349 = vmatpush1.bf16.msra.mxu0 0
  %1350 = vmatprep.subr.bf16.mxu0 0
  %1351 = vmatpush1.bf16.msra.mxu0 0
  %1352 = vmatprep.subr.bf16.mxu0 0
  %1353 = vmatpush1.bf16.msra.mxu0 0
  %1354 = vmatprep.subr.bf16.mxu0 0
  %1355 = vmatpush1.bf16.msra.mxu0 0
  %1356 = vmatprep.subr.bf16.mxu0 0
  %1357 = vmatpush1.bf16.msra.mxu0 0
  %1358 = vmatprep.subr.bf16.mxu0 0
  %1359 = vmatpush1.bf16.msra.mxu0 0
  %1360 = vmatprep.subr.bf16.mxu0 0
  %1361 = vmatpush1.bf16.msra.mxu0 0
  %1362 = vmatprep.subr.bf16.mxu0 0
  %1363 = vmatpush1.bf16.msra.mxu0 0
  %1364 = vmatprep.subr.bf16.mxu0 0
  %1365 = vmatpush1.bf16.msra.mxu0 0
  %1366 = vmatprep.subr.bf16.mxu0 0
  %1367 = vmatpush1.bf16.msra.mxu0 0
  %1368 = vmatprep.subr.bf16.mxu0 0
  %1369 = vmatpush1.bf16.msra.mxu0 0
  %1370 = vmatprep.subr.bf16.mxu0 0
  %1371 = vmatpush1.bf16.msra.mxu0 0
  %1372 = vmatprep.mubr.bf16.mxu0 0
  %1373 = vmatmul.mubr.bf16.gmra.mrb[0].mxu0 %v1338
  %v1374 = vpop.f32.mrb[0].mxu0
  %v1375 = vadd.f32 %v1335, %v1374
  %v1376 = vpop.f32.mrb[0].mxu0
  %v1377 = vadd.f32 %v1336, %v1376
  %v1378 = vpop.f32.mrb[0].mxu0
  %v1379 = vpop.f32.mrb[0].mxu0
  %1380 = vdwg.mxu0
  %v1381 = vadd.f32 %v1375, %v160
  %v1382 = vadd.f32 %v1377, %v164
  %v1383 = vmul.f32 %v1381, 0.5
  %v1384 = vmul.f32 %v1382, 0.5
  %v1385 = vtanh.pop %v1383
  %v1386 = vtanh.pop %v1384
  %v1387 = vmul.f32 %v1385, 0.5
  %v1388 = vmul.f32 %v1386, 0.5
  %v1389 = vadd.f32 %v1387, 0.5
  %v1390 = vadd.f32 %v1388, 0.5
  %v1391 = vtanh.pop %v1382
  %v1392 = vmul.f32 %v1389, %v1245
  %1394 = vrot.lane.b32.xlu0 %v1391, 64
  %v1395 = vpop.permute.xlu0 %1394
  %v1397 = vmul.f32 %v1389, %v1395
  %1399 = vrot.lane.b32.xlu0 %v1397, 64
  %v1400 = vpop.permute.xlu0 %1399
  %v1402 = vadd.f32 %v1392, %v1400
  %v1403 = vtanh.pop %v1402
  %1405 = vrot.lane.b32.xlu0 %v1403, 64
  %v1406 = vpop.permute.xlu0 %1405
  %v1408 = vmul.f32 %v1390, %v1406
  %1410 = vrot.lane.b32.xlu0 %v1324, 64
  %v1411 = vpop.permute.xlu0 %1410
  %v1413 = vsel %vm111, %v1408, %v1411
  %v1414 = vpack.c.bf16 %v1413, %v1413
  %1415 = vmatprep.subr.bf16.mxu0 %v273
  %1416 = vmatpush1.bf16.msra.mxu0 %v272
  %1417 = vmatprep.subr.bf16.mxu0 %v275
  %1418 = vmatpush1.bf16.msra.mxu0 %v274
  %1419 = vmatprep.subr.bf16.mxu0 %v277
  %1420 = vmatpush1.bf16.msra.mxu0 %v276
  %1421 = vmatprep.subr.bf16.mxu0 %v279
  %1422 = vmatpush1.bf16.msra.mxu0 %v278
  %1423 = vmatprep.subr.bf16.mxu0 %v281
  %1424 = vmatpush1.bf16.msra.mxu0 %v280
  %1425 = vmatprep.subr.bf16.mxu0 %v283
  %1426 = vmatpush1.bf16.msra.mxu0 %v282
  %1427 = vmatprep.subr.bf16.mxu0 %v285
  %1428 = vmatpush1.bf16.msra.mxu0 %v284
  %1429 = vmatprep.subr.bf16.mxu0 %v287
  %1430 = vmatpush1.bf16.msra.mxu0 %v286
  %1431 = vmatprep.subr.bf16.mxu0 0
  %1432 = vmatpush1.bf16.msra.mxu0 0
  %1433 = vmatprep.subr.bf16.mxu0 0
  %1434 = vmatpush1.bf16.msra.mxu0 0
  %1435 = vmatprep.subr.bf16.mxu0 0
  %1436 = vmatpush1.bf16.msra.mxu0 0
  %1437 = vmatprep.subr.bf16.mxu0 0
  %1438 = vmatpush1.bf16.msra.mxu0 0
  %1439 = vmatprep.subr.bf16.mxu0 0
  %1440 = vmatpush1.bf16.msra.mxu0 0
  %1441 = vmatprep.subr.bf16.mxu0 0
  %1442 = vmatpush1.bf16.msra.mxu0 0
  %1443 = vmatprep.subr.bf16.mxu0 0
  %1444 = vmatpush1.bf16.msra.mxu0 0
  %1445 = vmatprep.subr.bf16.mxu0 0
  %1446 = vmatpush1.bf16.msra.mxu0 0
  %1447 = vmatprep.mubr.bf16.mxu0 0
  %1448 = vmatmul.mubr.bf16.gmra.mrb[0].mxu0 %v1414
  %v1449 = vpop.f32.mrb[0].mxu0
  %v1450 = vadd.f32 %v217, %v1449
  %v1451 = vpop.f32.mrb[0].mxu0
  %v1452 = vadd.f32 %v221, %v1451
  %v1453 = vpop.f32.mrb[0].mxu0
  %v1454 = vpop.f32.mrb[0].mxu0
  %1455 = vdwg.mxu0
  %v1456 = vmul.f32 %v1450, 0.5
  %v1457 = vmul.f32 %v1452, 0.5
  %v1458 = vtanh.pop %v1456
  %v1459 = vtanh.pop %v1457
  %v1460 = vmul.f32 %v1458, 0.5
  %v1461 = vmul.f32 %v1459, 0.5
  %v1462 = vadd.f32 %v1460, 0.5
  %v1463 = vadd.f32 %v1461, 0.5
  %v1464 = vtanh.pop %v1452
  %v1465 = vmul.f32 %v1462, %v1318
  %1467 = vrot.lane.b32.xlu0 %v1464, 64
  %v1468 = vpop.permute.xlu0 %1467
  %v1470 = vmul.f32 %v1462, %v1468
  %1472 = vrot.lane.b32.xlu0 %v1470, 64
  %v1473 = vpop.permute.xlu0 %1472
  %v1475 = vadd.f32 %v1465, %v1473
  %v1476 = vtanh.pop %v1475
  %1478 = vrot.lane.b32.xlu0 %v1476, 64
  %v1479 = vpop.permute.xlu0 %1478
  %v1481 = vmul.f32 %v1463, %v1479
  %v1482 = vmul.f32 %v1481, %v375
  %v1483 = vsel %vm111, %v1482, 0.0
  %1484 = vadd.xlane.f32.xlu0 %v1483
  %v1485 = vpop.xlane.xlu0 %1484
  %v1486 = vadd.f32 %v1485, %v385
  %1488 = vrot.lane.b32.xlu0 %v1481, 64
  %v1489 = vpop.permute.xlu0 %1488
  %v1491 = vsel %vm111, %v1408, %v1489
  %v1492 = vpack.c.bf16 %v1491, %v1491
  %v1493 = vld [vmem:[%s6] sm:$0xff]
  %v1494 = vld [vmem:[%s6 + $0x8] sm:$0xff]
  %v1495 = vld [vmem:[%s6 + $0x10] sm:$0xff]
  %v1496 = vld [vmem:[%s6 + $0x18] sm:$0xff]
  %v1497 = vld [vmem:[%s6 + $0x20] sm:$0xff]
  %v1498 = vld [vmem:[%s6 + $0x28] sm:$0xff]
  %v1499 = vld [vmem:[%s6 + $0x30] sm:$0xff]
  %v1500 = vld [vmem:[%s6 + $0x38] sm:$0xff]
  %v1501 = vld [vmem:[%s6 + $0x40] sm:$0xff]
  %v1502 = vld [vmem:[%s6 + $0x48] sm:$0xff]
  %v1503 = vld [vmem:[%s6 + $0x50] sm:$0xff]
  %v1504 = vld [vmem:[%s6 + $0x58] sm:$0xff]
  %v1505 = vld [vmem:[%s6 + $0x60] sm:$0xff]
  %v1506 = vld [vmem:[%s6 + $0x68] sm:$0xff]
  %v1507 = vld [vmem:[%s6 + $0x70] sm:$0xff]
  %v1508 = vld [vmem:[%s6 + $0x78] sm:$0xff]
  %v1510 = vlaneseq
  %v1511 = vshrl.u32 %v1510, 7
  %v1512 = vsub.s32 0, %v1511
  %v1513 = vrot.slane %v42, %v1512
  %v1514 = vlaneseq
  %v1515 = vshrl.u32 %v1514, 7
  %v1516 = vsub.s32 1, %v1515
  %v1517 = vrot.slane %v42, %v1516
  %v1536 = vunpack.c.l.b16 %v1493
  %v1537 = vunpack.c.h.b16 %v1493
  %v1538 = vunpack.c.l.b16 %v1494
  %v1539 = vunpack.c.h.b16 %v1494
  %v1540 = vunpack.c.l.b16 %v1495
  %v1541 = vunpack.c.h.b16 %v1495
  %v1542 = vunpack.c.l.b16 %v1496
  %v1543 = vunpack.c.h.b16 %v1496
  %v1544 = vunpack.c.l.b16 %v1497
  %v1545 = vunpack.c.h.b16 %v1497
  %v1546 = vunpack.c.l.b16 %v1498
  %v1547 = vunpack.c.h.b16 %v1498
  %v1548 = vunpack.c.l.b16 %v1499
  %v1549 = vunpack.c.h.b16 %v1499
  %v1550 = vunpack.c.l.b16 %v1500
  %v1551 = vunpack.c.h.b16 %v1500
  %v1552 = vunpack.c.l.b16 %v1501
  %v1553 = vunpack.c.h.b16 %v1501
  %v1554 = vunpack.c.l.b16 %v1502
  %v1555 = vunpack.c.h.b16 %v1502
  %v1556 = vunpack.c.l.b16 %v1503
  %v1557 = vunpack.c.h.b16 %v1503
  %v1558 = vunpack.c.l.b16 %v1504
  %v1559 = vunpack.c.h.b16 %v1504
  %v1560 = vunpack.c.l.b16 %v1505
  %v1561 = vunpack.c.h.b16 %v1505
  %v1562 = vunpack.c.l.b16 %v1506
  %v1563 = vunpack.c.h.b16 %v1506
  %v1564 = vunpack.c.l.b16 %v1507
  %v1565 = vunpack.c.h.b16 %v1507
  %v1566 = vunpack.c.l.b16 %v1508
  %v1567 = vunpack.c.h.b16 %v1508
  %v1568 = vpack.c.b16 %v1538, %v1536
  %v1569 = vpack.c.b16 %v1539, %v1537
  %v1570 = vpack.c.b16 %v1542, %v1540
  %v1571 = vpack.c.b16 %v1543, %v1541
  %v1572 = vpack.c.b16 %v1546, %v1544
  %v1573 = vpack.c.b16 %v1547, %v1545
  %v1574 = vpack.c.b16 %v1550, %v1548
  %v1575 = vpack.c.b16 %v1551, %v1549
  %v1576 = vpack.c.b16 %v1554, %v1552
  %v1577 = vpack.c.b16 %v1555, %v1553
  %v1578 = vpack.c.b16 %v1558, %v1556
  %v1579 = vpack.c.b16 %v1559, %v1557
  %v1580 = vpack.c.b16 %v1562, %v1560
  %v1581 = vpack.c.b16 %v1563, %v1561
  %v1582 = vpack.c.b16 %v1566, %v1564
  %v1583 = vpack.c.b16 %v1567, %v1565
  %1600 = vmatprep.subr.bf16.mxu0 %v1569
  %1601 = vmatpush1.bf16.msra.mxu0 %v1568
  %1602 = vmatprep.subr.bf16.mxu0 %v1571
  %1603 = vmatpush1.bf16.msra.mxu0 %v1570
  %1604 = vmatprep.subr.bf16.mxu0 %v1573
  %1605 = vmatpush1.bf16.msra.mxu0 %v1572
  %1606 = vmatprep.subr.bf16.mxu0 %v1575
  %1607 = vmatpush1.bf16.msra.mxu0 %v1574
  %1608 = vmatprep.subr.bf16.mxu0 %v1577
  %1609 = vmatpush1.bf16.msra.mxu0 %v1576
  %1610 = vmatprep.subr.bf16.mxu0 %v1579
  %1611 = vmatpush1.bf16.msra.mxu0 %v1578
  %1612 = vmatprep.subr.bf16.mxu0 %v1581
  %1613 = vmatpush1.bf16.msra.mxu0 %v1580
  %1614 = vmatprep.subr.bf16.mxu0 %v1583
  %1615 = vmatpush1.bf16.msra.mxu0 %v1582
  %1616 = vmatprep.subr.bf16.mxu0 0
  %1617 = vmatpush1.bf16.msra.mxu0 0
  %1618 = vmatprep.subr.bf16.mxu0 0
  %1619 = vmatpush1.bf16.msra.mxu0 0
  %1620 = vmatprep.subr.bf16.mxu0 0
  %1621 = vmatpush1.bf16.msra.mxu0 0
  %1622 = vmatprep.subr.bf16.mxu0 0
  %1623 = vmatpush1.bf16.msra.mxu0 0
  %1624 = vmatprep.subr.bf16.mxu0 0
  %1625 = vmatpush1.bf16.msra.mxu0 0
  %1626 = vmatprep.subr.bf16.mxu0 0
  %1627 = vmatpush1.bf16.msra.mxu0 0
  %1628 = vmatprep.subr.bf16.mxu0 0
  %1629 = vmatpush1.bf16.msra.mxu0 0
  %1630 = vmatprep.subr.bf16.mxu0 0
  %1631 = vmatpush1.bf16.msra.mxu0 0
  %1632 = vmatprep.mubr.bf16.mxu0 0
  %1633 = vmatmul.mubr.bf16.gmra.mrb[0].mxu0 %v1492
  %v1634 = vpop.f32.mrb[0].mxu0
  %v1635 = vadd.f32 %v1513, %v1634
  %v1636 = vpop.f32.mrb[0].mxu0
  %v1637 = vadd.f32 %v1517, %v1636
  %v1638 = vpop.f32.mrb[0].mxu0
  %v1639 = vpop.f32.mrb[0].mxu0
  %1640 = vdwg.mxu0
  %v1641 = vmul.f32 %v1635, 0.5
  %v1642 = vmul.f32 %v1637, 0.5
  %v1643 = vtanh.pop %v1641
  %v1644 = vtanh.pop %v1642
  %v1645 = vmul.f32 %v1643, 0.5
  %v1646 = vmul.f32 %v1644, 0.5
  %v1647 = vadd.f32 %v1645, 0.5
  %v1648 = vadd.f32 %v1646, 0.5
  %v1649 = vtanh.pop %v1637
  %v1650 = vmul.f32 %v1647, %v1402
  %1652 = vrot.lane.b32.xlu0 %v1649, 64
  %v1653 = vpop.permute.xlu0 %1652
  %v1655 = vmul.f32 %v1647, %v1653
  %1657 = vrot.lane.b32.xlu0 %v1655, 64
  %v1658 = vpop.permute.xlu0 %1657
  %v1660 = vadd.f32 %v1650, %v1658
  %v1661 = vtanh.pop %v1660
  %1663 = vrot.lane.b32.xlu0 %v1661, 64
  %v1664 = vpop.permute.xlu0 %1663
  %v1666 = vmul.f32 %v1648, %v1664
  %v1667 = vsel %vm111, %v1666, %v1489
  %v1668 = vpack.c.bf16 %v1667, %v1667
  %1669 = vmatprep.subr.bf16.mxu0 %v273
  %1670 = vmatpush1.bf16.msra.mxu0 %v272
  %1671 = vmatprep.subr.bf16.mxu0 %v275
  %1672 = vmatpush1.bf16.msra.mxu0 %v274
  %1673 = vmatprep.subr.bf16.mxu0 %v277
  %1674 = vmatpush1.bf16.msra.mxu0 %v276
  %1675 = vmatprep.subr.bf16.mxu0 %v279
  %1676 = vmatpush1.bf16.msra.mxu0 %v278
  %1677 = vmatprep.subr.bf16.mxu0 %v281
  %1678 = vmatpush1.bf16.msra.mxu0 %v280
  %1679 = vmatprep.subr.bf16.mxu0 %v283
  %1680 = vmatpush1.bf16.msra.mxu0 %v282
  %1681 = vmatprep.subr.bf16.mxu0 %v285
  %1682 = vmatpush1.bf16.msra.mxu0 %v284
  %1683 = vmatprep.subr.bf16.mxu0 %v287
  %1684 = vmatpush1.bf16.msra.mxu0 %v286
  %1685 = vmatprep.subr.bf16.mxu0 0
  %1686 = vmatpush1.bf16.msra.mxu0 0
  %1687 = vmatprep.subr.bf16.mxu0 0
  %1688 = vmatpush1.bf16.msra.mxu0 0
  %1689 = vmatprep.subr.bf16.mxu0 0
  %1690 = vmatpush1.bf16.msra.mxu0 0
  %1691 = vmatprep.subr.bf16.mxu0 0
  %1692 = vmatpush1.bf16.msra.mxu0 0
  %1693 = vmatprep.subr.bf16.mxu0 0
  %1694 = vmatpush1.bf16.msra.mxu0 0
  %1695 = vmatprep.subr.bf16.mxu0 0
  %1696 = vmatpush1.bf16.msra.mxu0 0
  %1697 = vmatprep.subr.bf16.mxu0 0
  %1698 = vmatpush1.bf16.msra.mxu0 0
  %1699 = vmatprep.subr.bf16.mxu0 0
  %1700 = vmatpush1.bf16.msra.mxu0 0
  %1701 = vmatprep.mubr.bf16.mxu0 0
  %1702 = vmatmul.mubr.bf16.gmra.mrb[0].mxu0 %v1668
  %v1703 = vpop.f32.mrb[0].mxu0
  %v1704 = vadd.f32 %v217, %v1703
  %v1705 = vpop.f32.mrb[0].mxu0
  %v1706 = vadd.f32 %v221, %v1705
  %v1707 = vpop.f32.mrb[0].mxu0
  %v1708 = vpop.f32.mrb[0].mxu0
  %1709 = vdwg.mxu0
  %v1710 = vmul.f32 %v1704, 0.5
  %v1711 = vmul.f32 %v1706, 0.5
  %v1712 = vtanh.pop %v1710
  %v1713 = vtanh.pop %v1711
  %v1714 = vmul.f32 %v1712, 0.5
  %v1715 = vmul.f32 %v1713, 0.5
  %v1716 = vadd.f32 %v1714, 0.5
  %v1717 = vadd.f32 %v1715, 0.5
  %v1718 = vtanh.pop %v1706
  %v1719 = vmul.f32 %v1716, %v1475
  %1721 = vrot.lane.b32.xlu0 %v1718, 64
  %v1722 = vpop.permute.xlu0 %1721
  %v1724 = vmul.f32 %v1716, %v1722
  %1726 = vrot.lane.b32.xlu0 %v1724, 64
  %v1727 = vpop.permute.xlu0 %1726
  %v1729 = vadd.f32 %v1719, %v1727
  %v1730 = vtanh.pop %v1729
  %1732 = vrot.lane.b32.xlu0 %v1730, 64
  %v1733 = vpop.permute.xlu0 %1732
  %v1735 = vmul.f32 %v1717, %v1733
  %v1736 = vmul.f32 %v1735, %v375
  %v1737 = vsel %vm111, %v1736, 0.0
  %1738 = vadd.xlane.f32.xlu0 %v1737
  %v1739 = vpop.xlane.xlu0 %1738
  %v1740 = vadd.f32 %v1739, %v385
  %1742 = vrot.lane.b32.xlu0 %v1735, 64
  %v1743 = vpop.permute.xlu0 %1742
  %v1745 = vsel %vm111, %v1666, %v1743
  %v1746 = vpack.c.bf16 %v1745, %v1745
  %1747 = vmatprep.subr.bf16.mxu0 %v1569
  %1748 = vmatpush1.bf16.msra.mxu0 %v1568
  %1749 = vmatprep.subr.bf16.mxu0 %v1571
  %1750 = vmatpush1.bf16.msra.mxu0 %v1570
  %1751 = vmatprep.subr.bf16.mxu0 %v1573
  %1752 = vmatpush1.bf16.msra.mxu0 %v1572
  %1753 = vmatprep.subr.bf16.mxu0 %v1575
  %1754 = vmatpush1.bf16.msra.mxu0 %v1574
  %1755 = vmatprep.subr.bf16.mxu0 %v1577
  %1756 = vmatpush1.bf16.msra.mxu0 %v1576
  %1757 = vmatprep.subr.bf16.mxu0 %v1579
  %1758 = vmatpush1.bf16.msra.mxu0 %v1578
  %1759 = vmatprep.subr.bf16.mxu0 %v1581
  %1760 = vmatpush1.bf16.msra.mxu0 %v1580
  %1761 = vmatprep.subr.bf16.mxu0 %v1583
  %1762 = vmatpush1.bf16.msra.mxu0 %v1582
  %1763 = vmatprep.subr.bf16.mxu0 0
  %1764 = vmatpush1.bf16.msra.mxu0 0
  %1765 = vmatprep.subr.bf16.mxu0 0
  %1766 = vmatpush1.bf16.msra.mxu0 0
  %1767 = vmatprep.subr.bf16.mxu0 0
  %1768 = vmatpush1.bf16.msra.mxu0 0
  %1769 = vmatprep.subr.bf16.mxu0 0
  %1770 = vmatpush1.bf16.msra.mxu0 0
  %1771 = vmatprep.subr.bf16.mxu0 0
  %1772 = vmatpush1.bf16.msra.mxu0 0
  %1773 = vmatprep.subr.bf16.mxu0 0
  %1774 = vmatpush1.bf16.msra.mxu0 0
  %1775 = vmatprep.subr.bf16.mxu0 0
  %1776 = vmatpush1.bf16.msra.mxu0 0
  %1777 = vmatprep.subr.bf16.mxu0 0
  %1778 = vmatpush1.bf16.msra.mxu0 0
  %1779 = vmatprep.mubr.bf16.mxu0 0
  %1780 = vmatmul.mubr.bf16.gmra.mrb[0].mxu0 %v1746
  %v1781 = vpop.f32.mrb[0].mxu0
  %v1782 = vadd.f32 %v1513, %v1781
  %v1783 = vpop.f32.mrb[0].mxu0
  %v1784 = vadd.f32 %v1517, %v1783
  %v1785 = vpop.f32.mrb[0].mxu0
  %v1786 = vpop.f32.mrb[0].mxu0
  %1787 = vdwg.mxu0
  %v1788 = vmul.f32 %v1782, 0.5
  %v1789 = vmul.f32 %v1784, 0.5
  %v1790 = vtanh.pop %v1788
  %v1791 = vtanh.pop %v1789
  %v1792 = vmul.f32 %v1790, 0.5
  %v1793 = vmul.f32 %v1791, 0.5
  %v1794 = vadd.f32 %v1792, 0.5
  %v1795 = vadd.f32 %v1793, 0.5
  %v1796 = vtanh.pop %v1784
  %v1797 = vmul.f32 %v1794, %v1660
  %1799 = vrot.lane.b32.xlu0 %v1796, 64
  %v1800 = vpop.permute.xlu0 %1799
  %v1802 = vmul.f32 %v1794, %v1800
  %1804 = vrot.lane.b32.xlu0 %v1802, 64
  %v1805 = vpop.permute.xlu0 %1804
  %v1807 = vadd.f32 %v1797, %v1805
  %v1808 = vtanh.pop %v1807
  %1810 = vrot.lane.b32.xlu0 %v1808, 64
  %v1811 = vpop.permute.xlu0 %1810
  %v1813 = vmul.f32 %v1795, %v1811
  %v1814 = vsel %vm111, %v1813, %v1743
  %v1815 = vpack.c.bf16 %v1814, %v1814
  %1816 = vmatprep.subr.bf16.mxu0 %v273
  %1817 = vmatpush1.bf16.msra.mxu0 %v272
  %1818 = vmatprep.subr.bf16.mxu0 %v275
  %1819 = vmatpush1.bf16.msra.mxu0 %v274
  %1820 = vmatprep.subr.bf16.mxu0 %v277
  %1821 = vmatpush1.bf16.msra.mxu0 %v276
  %1822 = vmatprep.subr.bf16.mxu0 %v279
  %1823 = vmatpush1.bf16.msra.mxu0 %v278
  %1824 = vmatprep.subr.bf16.mxu0 %v281
  %1825 = vmatpush1.bf16.msra.mxu0 %v280
  %1826 = vmatprep.subr.bf16.mxu0 %v283
  %1827 = vmatpush1.bf16.msra.mxu0 %v282
  %1828 = vmatprep.subr.bf16.mxu0 %v285
  %1829 = vmatpush1.bf16.msra.mxu0 %v284
  %1830 = vmatprep.subr.bf16.mxu0 %v287
  %1831 = vmatpush1.bf16.msra.mxu0 %v286
  %1832 = vmatprep.subr.bf16.mxu0 0
  %1833 = vmatpush1.bf16.msra.mxu0 0
  %1834 = vmatprep.subr.bf16.mxu0 0
  %1835 = vmatpush1.bf16.msra.mxu0 0
  %1836 = vmatprep.subr.bf16.mxu0 0
  %1837 = vmatpush1.bf16.msra.mxu0 0
  %1838 = vmatprep.subr.bf16.mxu0 0
  %1839 = vmatpush1.bf16.msra.mxu0 0
  %1840 = vmatprep.subr.bf16.mxu0 0
  %1841 = vmatpush1.bf16.msra.mxu0 0
  %1842 = vmatprep.subr.bf16.mxu0 0
  %1843 = vmatpush1.bf16.msra.mxu0 0
  %1844 = vmatprep.subr.bf16.mxu0 0
  %1845 = vmatpush1.bf16.msra.mxu0 0
  %1846 = vmatprep.subr.bf16.mxu0 0
  %1847 = vmatpush1.bf16.msra.mxu0 0
  %1848 = vmatprep.mubr.bf16.mxu0 0
  %1849 = vmatmul.mubr.bf16.gmra.mrb[0].mxu0 %v1815
  %v1850 = vpop.f32.mrb[0].mxu0
  %v1851 = vadd.f32 %v217, %v1850
  %v1852 = vpop.f32.mrb[0].mxu0
  %v1853 = vadd.f32 %v221, %v1852
  %v1854 = vpop.f32.mrb[0].mxu0
  %v1855 = vpop.f32.mrb[0].mxu0
  %1856 = vdwg.mxu0
  %v1857 = vmul.f32 %v1851, 0.5
  %v1858 = vmul.f32 %v1853, 0.5
  %v1859 = vtanh.pop %v1857
  %v1860 = vtanh.pop %v1858
  %v1861 = vmul.f32 %v1859, 0.5
  %v1862 = vmul.f32 %v1860, 0.5
  %v1863 = vadd.f32 %v1861, 0.5
  %v1864 = vadd.f32 %v1862, 0.5
  %v1865 = vtanh.pop %v1853
  %v1866 = vmul.f32 %v1863, %v1729
  %1868 = vrot.lane.b32.xlu0 %v1865, 64
  %v1869 = vpop.permute.xlu0 %1868
  %v1871 = vmul.f32 %v1863, %v1869
  %1873 = vrot.lane.b32.xlu0 %v1871, 64
  %v1874 = vpop.permute.xlu0 %1873
  %v1876 = vadd.f32 %v1866, %v1874
  %v1877 = vtanh.pop %v1876
  %1879 = vrot.lane.b32.xlu0 %v1877, 64
  %v1880 = vpop.permute.xlu0 %1879
  %v1882 = vmul.f32 %v1864, %v1880
  %v1883 = vmul.f32 %v1882, %v375
  %v1884 = vsel %vm111, %v1883, 0.0
  %1885 = vadd.xlane.f32.xlu0 %v1884
  %v1886 = vpop.xlane.xlu0 %1885
  %v1887 = vadd.f32 %v1886, %v385
  %1889 = vrot.lane.b32.xlu0 %v1882, 64
  %v1890 = vpop.permute.xlu0 %1889
  %v1892 = vsel %vm111, %v1813, %v1890
  %v1893 = vpack.c.bf16 %v1892, %v1892
  %1894 = vmatprep.subr.bf16.mxu0 %v1569
  %1895 = vmatpush1.bf16.msra.mxu0 %v1568
  %1896 = vmatprep.subr.bf16.mxu0 %v1571
  %1897 = vmatpush1.bf16.msra.mxu0 %v1570
  %1898 = vmatprep.subr.bf16.mxu0 %v1573
  %1899 = vmatpush1.bf16.msra.mxu0 %v1572
  %1900 = vmatprep.subr.bf16.mxu0 %v1575
  %1901 = vmatpush1.bf16.msra.mxu0 %v1574
  %1902 = vmatprep.subr.bf16.mxu0 %v1577
  %1903 = vmatpush1.bf16.msra.mxu0 %v1576
  %1904 = vmatprep.subr.bf16.mxu0 %v1579
  %1905 = vmatpush1.bf16.msra.mxu0 %v1578
  %1906 = vmatprep.subr.bf16.mxu0 %v1581
  %1907 = vmatpush1.bf16.msra.mxu0 %v1580
  %1908 = vmatprep.subr.bf16.mxu0 %v1583
  %1909 = vmatpush1.bf16.msra.mxu0 %v1582
  %1910 = vmatprep.subr.bf16.mxu0 0
  %1911 = vmatpush1.bf16.msra.mxu0 0
  %1912 = vmatprep.subr.bf16.mxu0 0
  %1913 = vmatpush1.bf16.msra.mxu0 0
  %1914 = vmatprep.subr.bf16.mxu0 0
  %1915 = vmatpush1.bf16.msra.mxu0 0
  %1916 = vmatprep.subr.bf16.mxu0 0
  %1917 = vmatpush1.bf16.msra.mxu0 0
  %1918 = vmatprep.subr.bf16.mxu0 0
  %1919 = vmatpush1.bf16.msra.mxu0 0
  %1920 = vmatprep.subr.bf16.mxu0 0
  %1921 = vmatpush1.bf16.msra.mxu0 0
  %1922 = vmatprep.subr.bf16.mxu0 0
  %1923 = vmatpush1.bf16.msra.mxu0 0
  %1924 = vmatprep.subr.bf16.mxu0 0
  %1925 = vmatpush1.bf16.msra.mxu0 0
  %1926 = vmatprep.mubr.bf16.mxu0 0
  %1927 = vmatmul.mubr.bf16.gmra.mrb[0].mxu0 %v1893
  %v1928 = vpop.f32.mrb[0].mxu0
  %v1929 = vadd.f32 %v1513, %v1928
  %v1930 = vpop.f32.mrb[0].mxu0
  %v1931 = vadd.f32 %v1517, %v1930
  %v1932 = vpop.f32.mrb[0].mxu0
  %v1933 = vpop.f32.mrb[0].mxu0
  %1934 = vdwg.mxu0
  %v1935 = vmul.f32 %v1929, 0.5
  %v1936 = vmul.f32 %v1931, 0.5
  %v1937 = vtanh.pop %v1935
  %v1938 = vtanh.pop %v1936
  %v1939 = vmul.f32 %v1937, 0.5
  %v1940 = vmul.f32 %v1938, 0.5
  %v1941 = vadd.f32 %v1939, 0.5
  %v1942 = vadd.f32 %v1940, 0.5
  %v1943 = vtanh.pop %v1931
  %v1944 = vmul.f32 %v1941, %v1807
  %1946 = vrot.lane.b32.xlu0 %v1943, 64
  %v1947 = vpop.permute.xlu0 %1946
  %v1949 = vmul.f32 %v1941, %v1947
  %1951 = vrot.lane.b32.xlu0 %v1949, 64
  %v1952 = vpop.permute.xlu0 %1951
  %v1954 = vadd.f32 %v1944, %v1952
  %v1955 = vtanh.pop %v1954
  %1957 = vrot.lane.b32.xlu0 %v1955, 64
  %v1958 = vpop.permute.xlu0 %1957
  %v1960 = vmul.f32 %v1942, %v1958
  %v1961 = vsel %vm111, %v1960, %v1890
  %v1962 = vpack.c.bf16 %v1961, %v1961
  %1963 = vmatprep.subr.bf16.mxu0 %v273
  %1964 = vmatpush1.bf16.msra.mxu0 %v272
  %1965 = vmatprep.subr.bf16.mxu0 %v275
  %1966 = vmatpush1.bf16.msra.mxu0 %v274
  %1967 = vmatprep.subr.bf16.mxu0 %v277
  %1968 = vmatpush1.bf16.msra.mxu0 %v276
  %1969 = vmatprep.subr.bf16.mxu0 %v279
  %1970 = vmatpush1.bf16.msra.mxu0 %v278
  %1971 = vmatprep.subr.bf16.mxu0 %v281
  %1972 = vmatpush1.bf16.msra.mxu0 %v280
  %1973 = vmatprep.subr.bf16.mxu0 %v283
  %1974 = vmatpush1.bf16.msra.mxu0 %v282
  %1975 = vmatprep.subr.bf16.mxu0 %v285
  %1976 = vmatpush1.bf16.msra.mxu0 %v284
  %1977 = vmatprep.subr.bf16.mxu0 %v287
  %1978 = vmatpush1.bf16.msra.mxu0 %v286
  %1979 = vmatprep.subr.bf16.mxu0 0
  %1980 = vmatpush1.bf16.msra.mxu0 0
  %1981 = vmatprep.subr.bf16.mxu0 0
  %1982 = vmatpush1.bf16.msra.mxu0 0
  %1983 = vmatprep.subr.bf16.mxu0 0
  %1984 = vmatpush1.bf16.msra.mxu0 0
  %1985 = vmatprep.subr.bf16.mxu0 0
  %1986 = vmatpush1.bf16.msra.mxu0 0
  %1987 = vmatprep.subr.bf16.mxu0 0
  %1988 = vmatpush1.bf16.msra.mxu0 0
  %1989 = vmatprep.subr.bf16.mxu0 0
  %1990 = vmatpush1.bf16.msra.mxu0 0
  %1991 = vmatprep.subr.bf16.mxu0 0
  %1992 = vmatpush1.bf16.msra.mxu0 0
  %1993 = vmatprep.subr.bf16.mxu0 0
  %1994 = vmatpush1.bf16.msra.mxu0 0
  %1995 = vmatprep.mubr.bf16.mxu0 0
  %1996 = vmatmul.mubr.bf16.gmra.mrb[0].mxu0 %v1962
  %v1997 = vpop.f32.mrb[0].mxu0
  %v1998 = vadd.f32 %v217, %v1997
  %v1999 = vpop.f32.mrb[0].mxu0
  %v2000 = vadd.f32 %v221, %v1999
  %v2001 = vpop.f32.mrb[0].mxu0
  %v2002 = vpop.f32.mrb[0].mxu0
  %2003 = vdwg.mxu0
  %v2004 = vmul.f32 %v1998, 0.5
  %v2005 = vmul.f32 %v2000, 0.5
  %v2006 = vtanh.pop %v2004
  %v2007 = vtanh.pop %v2005
  %v2008 = vmul.f32 %v2006, 0.5
  %v2009 = vmul.f32 %v2007, 0.5
  %v2010 = vadd.f32 %v2008, 0.5
  %v2011 = vadd.f32 %v2009, 0.5
  %v2012 = vtanh.pop %v2000
  %v2013 = vmul.f32 %v2010, %v1876
  %2015 = vrot.lane.b32.xlu0 %v2012, 64
  %v2016 = vpop.permute.xlu0 %2015
  %v2018 = vmul.f32 %v2010, %v2016
  %2020 = vrot.lane.b32.xlu0 %v2018, 64
  %v2021 = vpop.permute.xlu0 %2020
  %v2023 = vadd.f32 %v2013, %v2021
  %v2024 = vtanh.pop %v2023
  %2026 = vrot.lane.b32.xlu0 %v2024, 64
  %v2027 = vpop.permute.xlu0 %2026
  %v2029 = vmul.f32 %v2011, %v2027
  %v2030 = vmul.f32 %v2029, %v375
  %v2031 = vsel %vm111, %v2030, 0.0
  %2032 = vadd.xlane.f32.xlu0 %v2031
  %v2033 = vpop.xlane.xlu0 %2032
  %v2034 = vadd.f32 %v2033, %v385
  %2036 = vrot.lane.b32.xlu0 %v2029, 64
  %v2037 = vpop.permute.xlu0 %2036
  %v2039 = vsel %vm111, %v1960, %v2037
  %v2040 = vpack.c.bf16 %v2039, %v2039
  %2041 = vmatprep.subr.bf16.mxu0 %v1569
  %2042 = vmatpush1.bf16.msra.mxu0 %v1568
  %2043 = vmatprep.subr.bf16.mxu0 %v1571
  %2044 = vmatpush1.bf16.msra.mxu0 %v1570
  %2045 = vmatprep.subr.bf16.mxu0 %v1573
  %2046 = vmatpush1.bf16.msra.mxu0 %v1572
  %2047 = vmatprep.subr.bf16.mxu0 %v1575
  %2048 = vmatpush1.bf16.msra.mxu0 %v1574
  %2049 = vmatprep.subr.bf16.mxu0 %v1577
  %2050 = vmatpush1.bf16.msra.mxu0 %v1576
  %2051 = vmatprep.subr.bf16.mxu0 %v1579
  %2052 = vmatpush1.bf16.msra.mxu0 %v1578
  %2053 = vmatprep.subr.bf16.mxu0 %v1581
  %2054 = vmatpush1.bf16.msra.mxu0 %v1580
  %2055 = vmatprep.subr.bf16.mxu0 %v1583
  %2056 = vmatpush1.bf16.msra.mxu0 %v1582
  %2057 = vmatprep.subr.bf16.mxu0 0
  %2058 = vmatpush1.bf16.msra.mxu0 0
  %2059 = vmatprep.subr.bf16.mxu0 0
  %2060 = vmatpush1.bf16.msra.mxu0 0
  %2061 = vmatprep.subr.bf16.mxu0 0
  %2062 = vmatpush1.bf16.msra.mxu0 0
  %2063 = vmatprep.subr.bf16.mxu0 0
  %2064 = vmatpush1.bf16.msra.mxu0 0
  %2065 = vmatprep.subr.bf16.mxu0 0
  %2066 = vmatpush1.bf16.msra.mxu0 0
  %2067 = vmatprep.subr.bf16.mxu0 0
  %2068 = vmatpush1.bf16.msra.mxu0 0
  %2069 = vmatprep.subr.bf16.mxu0 0
  %2070 = vmatpush1.bf16.msra.mxu0 0
  %2071 = vmatprep.subr.bf16.mxu0 0
  %2072 = vmatpush1.bf16.msra.mxu0 0
  %2073 = vmatprep.mubr.bf16.mxu0 0
  %2074 = vmatmul.mubr.bf16.gmra.mrb[0].mxu0 %v2040
  %v2075 = vpop.f32.mrb[0].mxu0
  %v2076 = vadd.f32 %v1513, %v2075
  %v2077 = vpop.f32.mrb[0].mxu0
  %v2078 = vadd.f32 %v1517, %v2077
  %v2079 = vpop.f32.mrb[0].mxu0
  %v2080 = vpop.f32.mrb[0].mxu0
  %2081 = vdwg.mxu0
  %v2082 = vmul.f32 %v2076, 0.5
  %v2083 = vmul.f32 %v2078, 0.5
  %v2084 = vtanh.pop %v2082
  %v2085 = vtanh.pop %v2083
  %v2086 = vmul.f32 %v2084, 0.5
  %v2087 = vmul.f32 %v2085, 0.5
  %v2088 = vadd.f32 %v2086, 0.5
  %v2089 = vadd.f32 %v2087, 0.5
  %v2090 = vtanh.pop %v2078
  %v2091 = vmul.f32 %v2088, %v1954
  %2093 = vrot.lane.b32.xlu0 %v2090, 64
  %v2094 = vpop.permute.xlu0 %2093
  %v2096 = vmul.f32 %v2088, %v2094
  %2098 = vrot.lane.b32.xlu0 %v2096, 64
  %v2099 = vpop.permute.xlu0 %2098
  %v2101 = vadd.f32 %v2091, %v2099
  %v2102 = vtanh.pop %v2101
  %2104 = vrot.lane.b32.xlu0 %v2102, 64
  %v2105 = vpop.permute.xlu0 %2104
  %v2107 = vmul.f32 %v2089, %v2105
  %v2108 = vsel %vm111, %v2107, %v2037
  %v2109 = vpack.c.bf16 %v2108, %v2108
  %2110 = vmatprep.subr.bf16.mxu0 %v273
  %2111 = vmatpush1.bf16.msra.mxu0 %v272
  %2112 = vmatprep.subr.bf16.mxu0 %v275
  %2113 = vmatpush1.bf16.msra.mxu0 %v274
  %2114 = vmatprep.subr.bf16.mxu0 %v277
  %2115 = vmatpush1.bf16.msra.mxu0 %v276
  %2116 = vmatprep.subr.bf16.mxu0 %v279
  %2117 = vmatpush1.bf16.msra.mxu0 %v278
  %2118 = vmatprep.subr.bf16.mxu0 %v281
  %2119 = vmatpush1.bf16.msra.mxu0 %v280
  %2120 = vmatprep.subr.bf16.mxu0 %v283
  %2121 = vmatpush1.bf16.msra.mxu0 %v282
  %2122 = vmatprep.subr.bf16.mxu0 %v285
  %2123 = vmatpush1.bf16.msra.mxu0 %v284
  %2124 = vmatprep.subr.bf16.mxu0 %v287
  %2125 = vmatpush1.bf16.msra.mxu0 %v286
  %2126 = vmatprep.subr.bf16.mxu0 0
  %2127 = vmatpush1.bf16.msra.mxu0 0
  %2128 = vmatprep.subr.bf16.mxu0 0
  %2129 = vmatpush1.bf16.msra.mxu0 0
  %2130 = vmatprep.subr.bf16.mxu0 0
  %2131 = vmatpush1.bf16.msra.mxu0 0
  %2132 = vmatprep.subr.bf16.mxu0 0
  %2133 = vmatpush1.bf16.msra.mxu0 0
  %2134 = vmatprep.subr.bf16.mxu0 0
  %2135 = vmatpush1.bf16.msra.mxu0 0
  %2136 = vmatprep.subr.bf16.mxu0 0
  %2137 = vmatpush1.bf16.msra.mxu0 0
  %2138 = vmatprep.subr.bf16.mxu0 0
  %2139 = vmatpush1.bf16.msra.mxu0 0
  %2140 = vmatprep.subr.bf16.mxu0 0
  %2141 = vmatpush1.bf16.msra.mxu0 0
  %2142 = vmatprep.mubr.bf16.mxu0 0
  %2143 = vmatmul.mubr.bf16.gmra.mrb[0].mxu0 %v2109
  %v2144 = vpop.f32.mrb[0].mxu0
  %v2145 = vadd.f32 %v217, %v2144
  %v2146 = vpop.f32.mrb[0].mxu0
  %v2147 = vadd.f32 %v221, %v2146
  %v2148 = vpop.f32.mrb[0].mxu0
  %v2149 = vpop.f32.mrb[0].mxu0
  %2150 = vdwg.mxu0
  %v2151 = vmul.f32 %v2145, 0.5
  %v2152 = vmul.f32 %v2147, 0.5
  %v2153 = vtanh.pop %v2151
  %v2154 = vtanh.pop %v2152
  %v2155 = vmul.f32 %v2153, 0.5
  %v2156 = vmul.f32 %v2154, 0.5
  %v2157 = vadd.f32 %v2155, 0.5
  %v2158 = vadd.f32 %v2156, 0.5
  %v2159 = vtanh.pop %v2147
  %v2160 = vmul.f32 %v2157, %v2023
  %2162 = vrot.lane.b32.xlu0 %v2159, 64
  %v2163 = vpop.permute.xlu0 %2162
  %v2165 = vmul.f32 %v2157, %v2163
  %2167 = vrot.lane.b32.xlu0 %v2165, 64
  %v2168 = vpop.permute.xlu0 %2167
  %v2170 = vadd.f32 %v2160, %v2168
  %v2171 = vtanh.pop %v2170
  %2173 = vrot.lane.b32.xlu0 %v2171, 64
  %v2174 = vpop.permute.xlu0 %2173
  %v2176 = vmul.f32 %v2158, %v2174
  %v2177 = vmul.f32 %v2176, %v375
  %v2178 = vsel %vm111, %v2177, 0.0
  %2179 = vadd.xlane.f32.xlu0 %v2178
  %v2180 = vpop.xlane.xlu0 %2179
  %v2181 = vadd.f32 %v2180, %v385
  %2183 = vrot.lane.b32.xlu0 %v544, 1
  %v2184 = vpop.permute.xlu0 %2183
  %2187 = vrot.lane.b32.xlu0 %v701, 2
  %v2188 = vpop.permute.xlu0 %2187
  %2191 = vrot.lane.b32.xlu0 %v858, 3
  %v2192 = vpop.permute.xlu0 %2191
  %2195 = vrot.lane.b32.xlu0 %v1015, 4
  %v2196 = vpop.permute.xlu0 %2195
  %2199 = vrot.lane.b32.xlu0 %v1172, 5
  %v2200 = vpop.permute.xlu0 %2199
  %2203 = vrot.lane.b32.xlu0 %v1329, 6
  %v2204 = vpop.permute.xlu0 %2203
  %2207 = vrot.lane.b32.xlu0 %v1486, 7
  %v2208 = vpop.permute.xlu0 %2207
  %2211 = vrot.lane.b32.xlu0 %v1740, 8
  %v2212 = vpop.permute.xlu0 %2211
  %2215 = vrot.lane.b32.xlu0 %v1887, 9
  %v2216 = vpop.permute.xlu0 %2215
  %2219 = vrot.lane.b32.xlu0 %v2034, 10
  %v2220 = vpop.permute.xlu0 %2219
  %2223 = vrot.lane.b32.xlu0 %v2181, 11
  %v2224 = vpop.permute.xlu0 %2223
  %vm2226 = vcmask 7168
  %v2227 = vsel %vm2226, %v387, %v2184
  %vm2228 = vcmask 15360
  %v2229 = vsel %vm2228, %v2227, %v2188
  %vm2230 = vcmask 23552
  %v2231 = vsel %vm2230, %v2229, %v2192
  %vm2232 = vcmask 31744
  %v2233 = vsel %vm2232, %v2231, %v2196
  %vm2234 = vcmask 39936
  %v2235 = vsel %vm2234, %v2233, %v2200
  %vm2236 = vcmask 48128
  %v2237 = vsel %vm2236, %v2235, %v2204
  %vm2238 = vcmask 56320
  %v2239 = vsel %vm2238, %v2237, %v2208
  %vm2240 = vcmask 64512
  %v2241 = vsel %vm2240, %v2239, %v2212
  %vm2242 = vcmask 72704
  %v2243 = vsel %vm2242, %v2241, %v2216
  %vm2244 = vcmask 80896
  %v2245 = vsel %vm2244, %v2243, %v2220
  %vm2246 = vcmask 89088
  %v2247 = vsel %vm2246, %v2245, %v2224
  %vm2248 = vcmask 97280
  %2249 = vst.msk [vmem:[%s10] sm:$0xff] %vm2248, %v2247
  // Predicated region
  $region42: #{sequence_forward.1} parent=0 // pred_check
    _
  $region43: #{sequence_forward.1} parent=0 // pred_check_branch
    %2251 = sbr.rel (0) target = $region45
  $region44: #{sequence_forward.1} parent=0 // pred_region
    _
  $region45: #{sequence_forward.1} parent=0 // pred_fallthru
    _
  // Predicated region
  $region46: #{sequence_forward.1} parent=0 // pred_check
    _
  $region47: #{sequence_forward.1} parent=0 // pred_check_branch
    %2253 = sbr.rel (0) target = $region49
  $region48: #{sequence_forward.1} parent=0 // pred_region
    _
  $region49: #{sequence_forward.1} parent=0 // pred_fallthru
    _

</llo_original>
